<compile_context>
chip_gen: v7x
topology: tpu7x:2x2x1
jax: 0.10.0
libtpu: 0.0.40
codegen_flags: <defaults>
</compile_context>

<pallas_src>
import math

import jax
import jax.numpy as jnp
from jax.experimental import pallas as pl
from jax.experimental.pallas import tpu as pltpu

C_IN = 131
C_MAIN = 128                 # lane-exact main channel group
C_RES = C_IN - C_MAIN        # 3 leftover channels
C_MID = 64
C_OUT = 64
K_RES = 9 * C_RES            # 27 residual im2col taps per output pixel
K_RES_PAD = 32               # padded to a clean lane count
LEAK = 0.2


def _gate_kernel(xk_ref, rp_ref, wa0_ref, wa1_ref, wr_ref, b1_ref, w2_ref, b2_ref,
                 out_ref):
    """One (batch, row-tile) step of conv3x3 -> LeakyReLU(0.2) -> conv1x1.

    xk_ref : (1, TH+2, WP+1, 256) bf16  pair-packed padded main channels
                                        lanes [0:128]=pad col 2j, [128:256]=col 2j+1
    rp_ref : (1, TH, WP, 64)      bf16  pair-packed residual (3-ch) im2col taps
    wa0_ref: (3, 256, 128)        bf16  conv1 weights hitting pair j   (per ky)
    wa1_ref: (3, 256, 128)        bf16  conv1 weights hitting pair j+1 (per ky)
    wr_ref : (64, 128)            bf16  residual conv1 weights
    b1_ref : (1, 128)             f32   [b1 | b1]
    w2_ref : (128, 128)           bf16  blockdiag(w2, w2)
    b2_ref : (1, 128)             f32   [b2 | b2]
    out_ref: (1, TH, WP, 128)     f32   lane-dense packed output
                                        lanes [0:64]=out col 2j, [64:128]=col 2j+1
    """
    _, th, wp, _ = out_ref.shape
    m = th * wp

    # conv1, main 128 channels: 6 accumulating K=256 dots sliced straight from the
    # ref (no materialised im2col buffer).
    acc = jnp.zeros((m, 2 * C_MID), jnp.float32)
    for ky in range(3):
        a0 = xk_ref[:, ky:ky + th, 0:wp, :].reshape(m, 2 * C_MAIN)
        a1 = xk_ref[:, ky:ky + th, 1:wp + 1, :].reshape(m, 2 * C_MAIN)
        acc = acc + jnp.dot(a0, wa0_ref[ky], preferred_element_type=jnp.float32)
        acc = acc + jnp.dot(a1, wa1_ref[ky], preferred_element_type=jnp.float32)

    # conv1, residual 3 channels: single K=64 dot on the pre-packed taps.
    r = rp_ref[...].reshape(m, 2 * K_RES_PAD)
    acc = acc + jnp.dot(r, wr_ref[...], preferred_element_type=jnp.float32)

    # bias + LeakyReLU(0.2) in f32, then bf16 for the 1x1 MXU matmul.
    acc = acc + b1_ref[...]
    act = jnp.where(acc > 0, acc, LEAK * acc).astype(jnp.bfloat16)

    # conv2 (1x1): one (M,128)@(128,128) blockdiag dot, emitted lane-dense.
    out = jnp.dot(act, w2_ref[...], preferred_element_type=jnp.float32) + b2_ref[...]
    out_ref[...] = out.reshape(1, th, wp, 2 * C_OUT).astype(out_ref.dtype)


def _round_up(x, mult):
    return ((x + mult - 1) // mult) * mult


def _cdiv(a, b):
    return -(-a // b)


def _vmem_capacity_bytes():
    try:
        info = pltpu.get_tpu_info()
        cap = getattr(info, "vmem_capacity_bytes", None)
        if cap:
            return int(cap)
    except Exception:
        pass
    return 64 * 1024 * 1024          # conservative fallback (v7x per-TensorCore VMEM)


def _pick_row_tiles(n, h, wp):
    """Row tiles per image + vmem_limit_bytes, sized per TPU generation.

    Footprint counts double-buffered input/output blocks, resident weights and the
    matmul intermediates, bounded by ~45% of the scoped VMEM limit."""
    vmem_limit = min(_vmem_capacity_bytes() // 2, 96 * 1024 * 1024)
    budget = int(vmem_limit * 0.45)

    wts = 2 * ((6 * 256 * 128 + 64 * 128 + 128 * 128) * 2 + 2 * 128 * 4)

    def step_bytes(th):
        m = th * wp
        xk = 2 * (th + 2) * (wp + 1) * 256 * 2      # main input block (double-buffered)
        rp = 2 * th * wp * 64 * 2                   # residual block
        ob = 2 * th * wp * 128 * 4                  # f32 packed output block
        inter = m * (2 * 256 * 2 + 128 * 4 + 128 * 2 + 128 * 4)  # lhs copies/acc/act/out
        return xk + rp + ob + inter + wts

    num_t = 1
    while num_t < h and step_bytes(_cdiv(h, num_t)) > budget:
        num_t += 1
    # Deepen the grid for megacore / pipelining when halo duplication stays small.
    while n * num_t < 4 and _cdiv(h, 2 * num_t) >= 32:
        num_t *= 2
    return num_t, vmem_limit


def gate_module_forward(x_nchw, w1_oihw, b1, w2_oihw, b2):
    """x: (N, 131, H, W) f32 -> (N, 64, H, W) f32, matching _GateMoudle.forward."""
    N, Cin, H, W = x_nchw.shape
    assert Cin == C_IN

    WPK = _round_up(max(1, _cdiv(W, 2)), 8)     # computed output column pairs (8-aligned)
    WEP = WPK + 1                               # padded-input column pairs
    w_pad_r = 2 * WPK + 1 - W                   # right zero pad (left pad is 1)

    num_t, vmem_limit = _pick_row_tiles(N, H, WPK)
    TH = _cdiv(H, num_t)
    Hp = num_t * TH
    h_pad_b = Hp - H                            # extra bottom rows (cropped later)

    # ---- input prep: NCHW -> NHWC + bf16 cast + zero pad (fuses in XLA), then a
    # free reshape pair-packs adjacent padded columns into 256 lanes. -------------
    x_nhwc = jnp.transpose(x_nchw, (0, 2, 3, 1)).astype(jnp.bfloat16)

    xm = jnp.pad(x_nhwc[..., :C_MAIN],
                 ((0, 0), (1, 1 + h_pad_b), (1, w_pad_r), (0, 0)))
    xk = xm.reshape(N, Hp + 2, WEP, 2 * C_MAIN)

    # Residual 3 channels: per-output-pixel 27-tap im2col (tiny), padded to 32 lanes,
    # pair-packed to 64 lanes.  Keeps the main path lane-exact for ~64 B/px extra HBM.
    xr = jnp.pad(x_nhwc[..., C_MAIN:],
                 ((0, 0), (1, 1 + h_pad_b), (1, w_pad_r), (0, 0)))
    taps = [xr[:, ky:ky + Hp, kx:kx + 2 * WPK, :]
            for ky in range(3) for kx in range(3)]
    rp = jnp.concatenate(taps, axis=-1)                               # (N, Hp, 2*WPK, 27)
    rp = jnp.pad(rp, ((0, 0), (0, 0), (0, 0), (0, K_RES_PAD - K_RES)))
    rp = rp.reshape(N, Hp, WPK, 2 * K_RES_PAD)

    # ---- row tiling: halo duplication only when a full-height block won't fit ---
    if num_t > 1:
        xk = jnp.stack([xk[:, t * TH:t * TH + TH + 2] for t in range(num_t)],
                       axis=1).reshape(N * num_t, TH + 2, WEP, 2 * C_MAIN)
        rp = jnp.stack([rp[:, t * TH:t * TH + TH] for t in range(num_t)],
                       axis=1).reshape(N * num_t, TH, WPK, 2 * K_RES_PAD)
    G = N * num_t

    # ---- weight prep -------------------------------------------------------------
    w1_hwio = jnp.transpose(w1_oihw, (2, 3, 1, 0)).astype(jnp.bfloat16)  # (3,3,131,64)
    w1m = w1_hwio[:, :, :C_MAIN, :]                                      # (3,3,128,64)
    w1r = w1_hwio[:, :, C_MAIN:, :]                                      # (3,3,3,64)
    z = jnp.zeros((C_MAIN, C_MID), jnp.bfloat16)

    # pair j   -> even: kx=0 (col 2j), kx=1 (col 2j+1);  odd: kx=0 (col 2j+1)
    wa0 = jnp.stack([
        jnp.concatenate([jnp.concatenate([w1m[ky, 0], z], axis=1),
                         jnp.concatenate([w1m[ky, 1], w1m[ky, 0]], axis=1)], axis=0)
        for ky in range(3)])                                             # (3,256,128)
    # pair j+1 -> even: kx=2 (col 2j+2);  odd: kx=1 (col 2j+2), kx=2 (col 2j+3)
    wa1 = jnp.stack([
        jnp.concatenate([jnp.concatenate([w1m[ky, 2], w1m[ky, 1]], axis=1),
                         jnp.concatenate([z, w1m[ky, 2]], axis=1)], axis=0)
        for ky in range(3)])                                             # (3,256,128)

    wr_flat = w1r.reshape(K_RES, C_MID)                                  # (27,64)
    wr = jnp.concatenate(
        [jnp.pad(wr_flat, ((0, 2 * K_RES_PAD - K_RES), (0, 0))),
         jnp.pad(wr_flat, ((K_RES_PAD, K_RES_PAD - K_RES), (0, 0)))], axis=1)  # (64,128)

    w2m = jnp.transpose(w2_oihw[:, :, 0, 0], (1, 0)).astype(jnp.bfloat16)  # (in,out)
    z2 = jnp.zeros((C_MID, C_OUT), jnp.bfloat16)
    w2p = jnp.concatenate([jnp.concatenate([w2m, z2], axis=1),
                           jnp.concatenate([z2, w2m], axis=1)], axis=0)    # (128,128)

    b1p = jnp.concatenate([b1, b1]).reshape(1, 2 * C_MID).astype(jnp.float32)
    b2p = jnp.concatenate([b2, b2]).reshape(1, 2 * C_OUT).astype(jnp.float32)

    flops = 2 * G * TH * (2 * WPK) * (9 * C_IN * C_MID + C_MID * C_OUT)
    bytes_accessed = ((xk.size + rp.size + wa0.size + wa1.size + wr.size + w2p.size) * 2
                      + (b1p.size + b2p.size) * 4
                      + G * TH * WPK * 2 * C_OUT * 4)

    out_packed = pl.pallas_call(
        _gate_kernel,
        out_shape=jax.ShapeDtypeStruct((G, TH, WPK, 2 * C_OUT), jnp.float32),
        grid_spec=pltpu.PrefetchScalarGridSpec(
            num_scalar_prefetch=0,
            grid=(G,),
            in_specs=[
                pl.BlockSpec((1, TH + 2, WEP, 2 * C_MAIN), lambda g: (g, 0, 0, 0)),
                pl.BlockSpec((1, TH, WPK, 2 * K_RES_PAD), lambda g: (g, 0, 0, 0)),
                pl.BlockSpec((3, 2 * C_MAIN, 2 * C_MID), lambda g: (0, 0, 0)),
                pl.BlockSpec((3, 2 * C_MAIN, 2 * C_MID), lambda g: (0, 0, 0)),
                pl.BlockSpec((2 * K_RES_PAD, 2 * C_MID), lambda g: (0, 0)),
                pl.BlockSpec((1, 2 * C_MID), lambda g: (0, 0)),
                pl.BlockSpec((2 * C_MID, 2 * C_OUT), lambda g: (0, 0)),
                pl.BlockSpec((1, 2 * C_OUT), lambda g: (0, 0)),
            ],
            out_specs=pl.BlockSpec((1, TH, WPK, 2 * C_OUT), lambda g: (g, 0, 0, 0)),
        ),
        compiler_params=pltpu.CompilerParams(
            dimension_semantics=("parallel",),
            vmem_limit_bytes=int(vmem_limit)),
        cost_estimate=pl.CostEstimate(flops=int(flops), transcendentals=0,
                                      bytes_accessed=int(bytes_accessed)),
    )(xk, rp, wa0, wa1, wr, b1p, w2p, b2p)

    # Undo lane packing ((WPK,128) row-major == (2*WPK,64)), crop padding, back to NCHW.
    out_nhwc = out_packed.reshape(N, Hp, 2 * WPK, C_OUT)[:, :H, :W, :]
    return jnp.transpose(out_nhwc, (0, 3, 1, 2))


def _reference(x_nchw, w1_oihw, b1, w2_oihw, b2):
    """Pure-JAX reference mirroring the kernel's bf16 rounding of inputs/weights/acts."""
    f32 = jnp.float32
    xb = x_nchw.astype(jnp.bfloat16).astype(f32)
    w1b = w1_oihw.astype(jnp.bfloat16).astype(f32)
    w2b = w2_oihw.astype(jnp.bfloat16).astype(f32)
    dn = ("NCHW", "OIHW", "NCHW")
    y = jax.lax.conv_general_dilated(xb, w1b, (1, 1), ((1, 1), (1, 1)),
                                     dimension_numbers=dn,
                                     precision=jax.lax.Precision.HIGHEST)
    y = y + b1.reshape(1, C_MID, 1, 1)
    y = jnp.where(y > 0, y, LEAK * y)
    yb = y.astype(jnp.bfloat16).astype(f32)
    z = jax.lax.conv_general_dilated(yb, w2b, (1, 1), ((0, 0), (0, 0)),
                                     dimension_numbers=dn,
                                     precision=jax.lax.Precision.HIGHEST)
    return z + b2.reshape(1, C_OUT, 1, 1)


if __name__ == "__main__":
    key = jax.random.PRNGKey(0)
    k_x, k_w1, k_w2 = jax.random.split(key, 3)

    N, H, W = 2, 16, 16
    x = jax.random.normal(k_x, (N, C_IN, H, W), jnp.float32)

    # Deterministic init mirroring the PyTorch __init__:
    #   weight ~ Normal(0, sqrt(2 / (kh*kw*out_channels))), bias = 0
    std1 = math.sqrt(2.0 / (3 * 3 * C_MID))
    std2 = math.sqrt(2.0 / (1 * 1 * C_OUT))
    w1 = jax.random.normal(k_w1, (C_MID, C_IN, 3, 3), jnp.float32) * std1
    b1 = jnp.zeros((C_MID,), jnp.float32)
    w2 = jax.random.normal(k_w2, (C_OUT, C_MID, 1, 1), jnp.float32) * std2
    b2 = jnp.zeros((C_OUT,), jnp.float32)

    gate_fn = jax.jit(gate_module_forward)
    out = jax.block_until_ready(gate_fn(x, w1, b1, w2, b2))
    ref = jax.block_until_ready(_reference(x, w1, b1, w2, b2))

    assert out.shape == (N, C_OUT, H, W), out.shape
    err = jnp.abs(out - ref)
    max_err = float(jnp.max(err))
    mean_err = float(jnp.mean(err))
    # bf16 matmul inputs + f32 accumulation: allow small rounding/order differences.
    assert max_err < 5e-2, (max_err, mean_err)
    assert mean_err < 2e-3, (max_err, mean_err)

    print("KERNEL_OK")
</pallas_src>

<mosaic_0001>
module attributes {stable_mosaic.version = 11 : i64} {
  func.func @_gate_kernel(%arg0: i32, %arg1: memref<1x18x9x256xbf16, #tpu.memory_space<vmem>>, %arg2: memref<1x16x8x64xbf16, #tpu.memory_space<vmem>>, %arg3: memref<3x256x128xbf16, #tpu.memory_space<vmem>>, %arg4: memref<3x256x128xbf16, #tpu.memory_space<vmem>>, %arg5: memref<64x128xbf16, #tpu.memory_space<vmem>>, %arg6: memref<1x128xf32, #tpu.memory_space<vmem>>, %arg7: memref<128x128xbf16, #tpu.memory_space<vmem>>, %arg8: memref<1x128xf32, #tpu.memory_space<vmem>>, %arg9: memref<1x16x8x128xf32, #tpu.memory_space<vmem>>) attributes {dimension_semantics = [#tpu.dimension_semantics<parallel>], iteration_bounds = array<i64: 2>, scalar_prefetch = 0 : i64, scratch_operands = 0 : i64, tpu.core_type = #tpu.core_type<tc>, window_params = [{transform_indices = @transform_0, window_bounds = array<i64: 1, 18, 9, 256>}, {transform_indices = @transform_1, window_bounds = array<i64: 1, 16, 8, 64>}, {pipeline_mode = #tpu.pipeline_mode<synchronous>, transform_indices = @transform_2, window_bounds = array<i64: 3, 256, 128>}, {pipeline_mode = #tpu.pipeline_mode<synchronous>, transform_indices = @transform_3, window_bounds = array<i64: 3, 256, 128>}, {pipeline_mode = #tpu.pipeline_mode<synchronous>, transform_indices = @transform_4, window_bounds = array<i64: 64, 128>}, {pipeline_mode = #tpu.pipeline_mode<synchronous>, transform_indices = @transform_5, window_bounds = array<i64: 1, 128>}, {pipeline_mode = #tpu.pipeline_mode<synchronous>, transform_indices = @transform_6, window_bounds = array<i64: 128, 128>}, {pipeline_mode = #tpu.pipeline_mode<synchronous>, transform_indices = @transform_7, window_bounds = array<i64: 1, 128>}, {transform_indices = @transform_8, window_bounds = array<i64: 1, 16, 8, 128>}]} {
    %cst = arith.constant 0.000000e+00 : f32
    %0 = vector.broadcast %cst : f32 to vector<128x128xf32>
    %c0 = arith.constant 0 : index
    %c0_0 = arith.constant 0 : index
    %c0_1 = arith.constant 0 : index
    %c0_2 = arith.constant 0 : index
    %1 = vector.load %arg1[%c0, %c0_0, %c0_1, %c0_2] : memref<1x18x9x256xbf16, #tpu.memory_space<vmem>>, vector<1x16x8x256xbf16>
    %2 = vector.shape_cast %1 : vector<1x16x8x256xbf16> to vector<128x256xbf16>
    %c0_3 = arith.constant 0 : index
    %c0_4 = arith.constant 0 : index
    %c1 = arith.constant 1 : index
    %c0_5 = arith.constant 0 : index
    %3 = vector.load %arg1[%c0_3, %c0_4, %c1, %c0_5] : memref<1x18x9x256xbf16, #tpu.memory_space<vmem>>, vector<1x16x8x256xbf16>
    %4 = vector.shape_cast %3 : vector<1x16x8x256xbf16> to vector<128x256xbf16>
    %c0_6 = arith.constant 0 : index
    %c0_7 = arith.constant 0 : index
    %c0_8 = arith.constant 0 : index
    %5 = vector.load %arg3[%c0_6, %c0_7, %c0_8] : memref<3x256x128xbf16, #tpu.memory_space<vmem>>, vector<1x256x128xbf16>
    %6 = vector.shape_cast %5 : vector<1x256x128xbf16> to vector<256x128xbf16>
    %cst_9 = arith.constant dense<0.000000e+00> : vector<128x128xf32>
    %7 = tpu.matmul %2, %6, %cst_9 {dimension_numbers = #tpu.dot_dimension_numbers<[1], [0], [0], [1], [0, 0, 1, 1], [], []>} : vector<128x256xbf16>, vector<256x128xbf16>, vector<128x128xf32> -> vector<128x128xf32>
    %8 = arith.addf %0, %7 : vector<128x128xf32>
    %c0_10 = arith.constant 0 : index
    %c0_11 = arith.constant 0 : index
    %c0_12 = arith.constant 0 : index
    %9 = vector.load %arg4[%c0_10, %c0_11, %c0_12] : memref<3x256x128xbf16, #tpu.memory_space<vmem>>, vector<1x256x128xbf16>
    %10 = vector.shape_cast %9 : vector<1x256x128xbf16> to vector<256x128xbf16>
    %cst_13 = arith.constant dense<0.000000e+00> : vector<128x128xf32>
    %11 = tpu.matmul %4, %10, %cst_13 {dimension_numbers = #tpu.dot_dimension_numbers<[1], [0], [0], [1], [0, 0, 1, 1], [], []>} : vector<128x256xbf16>, vector<256x128xbf16>, vector<128x128xf32> -> vector<128x128xf32>
    %12 = arith.addf %8, %11 : vector<128x128xf32>
    %c0_14 = arith.constant 0 : index
    %c1_15 = arith.constant 1 : index
    %c0_16 = arith.constant 0 : index
    %c0_17 = arith.constant 0 : index
    %13 = vector.load %arg1[%c0_14, %c1_15, %c0_16, %c0_17] : memref<1x18x9x256xbf16, #tpu.memory_space<vmem>>, vector<1x16x8x256xbf16>
    %14 = vector.shape_cast %13 : vector<1x16x8x256xbf16> to vector<128x256xbf16>
    %c0_18 = arith.constant 0 : index
    %c1_19 = arith.constant 1 : index
    %c1_20 = arith.constant 1 : index
    %c0_21 = arith.constant 0 : index
    %15 = vector.load %arg1[%c0_18, %c1_19, %c1_20, %c0_21] : memref<1x18x9x256xbf16, #tpu.memory_space<vmem>>, vector<1x16x8x256xbf16>
    %16 = vector.shape_cast %15 : vector<1x16x8x256xbf16> to vector<128x256xbf16>
    %c1_22 = arith.constant 1 : index
    %c0_23 = arith.constant 0 : index
    %c0_24 = arith.constant 0 : index
    %17 = vector.load %arg3[%c1_22, %c0_23, %c0_24] : memref<3x256x128xbf16, #tpu.memory_space<vmem>>, vector<1x256x128xbf16>
    %18 = vector.shape_cast %17 : vector<1x256x128xbf16> to vector<256x128xbf16>
    %cst_25 = arith.constant dense<0.000000e+00> : vector<128x128xf32>
    %19 = tpu.matmul %14, %18, %cst_25 {dimension_numbers = #tpu.dot_dimension_numbers<[1], [0], [0], [1], [0, 0, 1, 1], [], []>} : vector<128x256xbf16>, vector<256x128xbf16>, vector<128x128xf32> -> vector<128x128xf32>
    %20 = arith.addf %12, %19 : vector<128x128xf32>
    %c1_26 = arith.constant 1 : index
    %c0_27 = arith.constant 0 : index
    %c0_28 = arith.constant 0 : index
    %21 = vector.load %arg4[%c1_26, %c0_27, %c0_28] : memref<3x256x128xbf16, #tpu.memory_space<vmem>>, vector<1x256x128xbf16>
    %22 = vector.shape_cast %21 : vector<1x256x128xbf16> to vector<256x128xbf16>
    %cst_29 = arith.constant dense<0.000000e+00> : vector<128x128xf32>
    %23 = tpu.matmul %16, %22, %cst_29 {dimension_numbers = #tpu.dot_dimension_numbers<[1], [0], [0], [1], [0, 0, 1, 1], [], []>} : vector<128x256xbf16>, vector<256x128xbf16>, vector<128x128xf32> -> vector<128x128xf32>
    %24 = arith.addf %20, %23 : vector<128x128xf32>
    %c0_30 = arith.constant 0 : index
    %c2 = arith.constant 2 : index
    %c0_31 = arith.constant 0 : index
    %c0_32 = arith.constant 0 : index
    %25 = vector.load %arg1[%c0_30, %c2, %c0_31, %c0_32] : memref<1x18x9x256xbf16, #tpu.memory_space<vmem>>, vector<1x16x8x256xbf16>
    %26 = vector.shape_cast %25 : vector<1x16x8x256xbf16> to vector<128x256xbf16>
    %c0_33 = arith.constant 0 : index
    %c2_34 = arith.constant 2 : index
    %c1_35 = arith.constant 1 : index
    %c0_36 = arith.constant 0 : index
    %27 = vector.load %arg1[%c0_33, %c2_34, %c1_35, %c0_36] : memref<1x18x9x256xbf16, #tpu.memory_space<vmem>>, vector<1x16x8x256xbf16>
    %28 = vector.shape_cast %27 : vector<1x16x8x256xbf16> to vector<128x256xbf16>
    %c2_37 = arith.constant 2 : index
    %c0_38 = arith.constant 0 : index
    %c0_39 = arith.constant 0 : index
    %29 = vector.load %arg3[%c2_37, %c0_38, %c0_39] : memref<3x256x128xbf16, #tpu.memory_space<vmem>>, vector<1x256x128xbf16>
    %30 = vector.shape_cast %29 : vector<1x256x128xbf16> to vector<256x128xbf16>
    %cst_40 = arith.constant dense<0.000000e+00> : vector<128x128xf32>
    %31 = tpu.matmul %26, %30, %cst_40 {dimension_numbers = #tpu.dot_dimension_numbers<[1], [0], [0], [1], [0, 0, 1, 1], [], []>} : vector<128x256xbf16>, vector<256x128xbf16>, vector<128x128xf32> -> vector<128x128xf32>
    %32 = arith.addf %24, %31 : vector<128x128xf32>
    %c2_41 = arith.constant 2 : index
    %c0_42 = arith.constant 0 : index
    %c0_43 = arith.constant 0 : index
    %33 = vector.load %arg4[%c2_41, %c0_42, %c0_43] : memref<3x256x128xbf16, #tpu.memory_space<vmem>>, vector<1x256x128xbf16>
    %34 = vector.shape_cast %33 : vector<1x256x128xbf16> to vector<256x128xbf16>
    %cst_44 = arith.constant dense<0.000000e+00> : vector<128x128xf32>
    %35 = tpu.matmul %28, %34, %cst_44 {dimension_numbers = #tpu.dot_dimension_numbers<[1], [0], [0], [1], [0, 0, 1, 1], [], []>} : vector<128x256xbf16>, vector<256x128xbf16>, vector<128x128xf32> -> vector<128x128xf32>
    %36 = arith.addf %32, %35 : vector<128x128xf32>
    %c0_45 = arith.constant 0 : index
    %c0_46 = arith.constant 0 : index
    %c0_47 = arith.constant 0 : index
    %c0_48 = arith.constant 0 : index
    %37 = vector.load %arg2[%c0_45, %c0_46, %c0_47, %c0_48] : memref<1x16x8x64xbf16, #tpu.memory_space<vmem>>, vector<1x16x8x64xbf16>
    %38 = vector.shape_cast %37 : vector<1x16x8x64xbf16> to vector<128x64xbf16>
    %c0_49 = arith.constant 0 : index
    %c0_50 = arith.constant 0 : index
    %39 = vector.load %arg5[%c0_49, %c0_50] : memref<64x128xbf16, #tpu.memory_space<vmem>>, vector<64x128xbf16>
    %cst_51 = arith.constant dense<0.000000e+00> : vector<128x128xf32>
    %40 = tpu.matmul %38, %39, %cst_51 {dimension_numbers = #tpu.dot_dimension_numbers<[1], [0], [0], [1], [0, 0, 1, 1], [], []>} : vector<128x64xbf16>, vector<64x128xbf16>, vector<128x128xf32> -> vector<128x128xf32>
    %41 = arith.addf %36, %40 : vector<128x128xf32>
    %c0_52 = arith.constant 0 : index
    %c0_53 = arith.constant 0 : index
    %42 = vector.load %arg6[%c0_52, %c0_53] : memref<1x128xf32, #tpu.memory_space<vmem>>, vector<1x128xf32>
    %43 = vector.broadcast %42 : vector<1x128xf32> to vector<128x128xf32>
    %44 = arith.addf %41, %43 : vector<128x128xf32>
    %cst_54 = arith.constant 0.000000e+00 : f32
    %45 = vector.broadcast %cst_54 : f32 to vector<128x128xf32>
    %46 = arith.cmpf ogt, %44, %45 : vector<128x128xf32>
    %cst_55 = arith.constant 2.000000e-01 : f32
    %47 = vector.broadcast %cst_55 : f32 to vector<128x128xf32>
    %48 = arith.mulf %47, %44 : vector<128x128xf32>
    %49 = arith.select %46, %44, %48 : vector<128x128xi1>, vector<128x128xf32>
    %50 = arith.truncf %49 : vector<128x128xf32> to vector<128x128xbf16>
    %c0_56 = arith.constant 0 : index
    %c0_57 = arith.constant 0 : index
    %51 = vector.load %arg7[%c0_56, %c0_57] : memref<128x128xbf16, #tpu.memory_space<vmem>>, vector<128x128xbf16>
    %cst_58 = arith.constant dense<0.000000e+00> : vector<128x128xf32>
    %52 = tpu.matmul %50, %51, %cst_58 {dimension_numbers = #tpu.dot_dimension_numbers<[1], [0], [0], [1], [0, 0, 1, 1], [], []>} : vector<128x128xbf16>, vector<128x128xbf16>, vector<128x128xf32> -> vector<128x128xf32>
    %c0_59 = arith.constant 0 : index
    %c0_60 = arith.constant 0 : index
    %53 = vector.load %arg8[%c0_59, %c0_60] : memref<1x128xf32, #tpu.memory_space<vmem>>, vector<1x128xf32>
    %54 = vector.broadcast %53 : vector<1x128xf32> to vector<128x128xf32>
    %55 = arith.addf %52, %54 : vector<128x128xf32>
    %56 = vector.shape_cast %55 : vector<128x128xf32> to vector<1x16x8x128xf32>
    %c0_61 = arith.constant 0 : index
    %c0_62 = arith.constant 0 : index
    %c0_63 = arith.constant 0 : index
    %c0_64 = arith.constant 0 : index
    %57 = vector.load %arg9[%c0_61, %c0_62, %c0_63, %c0_64] : memref<1x16x8x128xf32, #tpu.memory_space<vmem>>, vector<1x16x8x128xf32>
    tpu.vector_store %arg9[%c0_61, %c0_62, %c0_63, %c0_64], %56 {strides = array<i32>} : memref<1x16x8x128xf32, #tpu.memory_space<vmem>>, vector<1x16x8x128xf32>,
    return
  }
  func.func @transform_0(%arg0: i32) -> (i32, i32, i32, i32) {
    %c0_i32 = arith.constant 0 : i32
    %c0_i32_0 = arith.constant 0 : i32
    %c0_i32_1 = arith.constant 0 : i32
    %c0_i32_2 = arith.constant 0 : i32
    return %arg0, %c0_i32, %c0_i32_0, %c0_i32_1 : i32, i32, i32, i32
  }
  func.func @transform_1(%arg0: i32) -> (i32, i32, i32, i32) {
    %c0_i32 = arith.constant 0 : i32
    %c0_i32_0 = arith.constant 0 : i32
    %c0_i32_1 = arith.constant 0 : i32
    %c0_i32_2 = arith.constant 0 : i32
    return %arg0, %c0_i32, %c0_i32_0, %c0_i32_1 : i32, i32, i32, i32
  }
  func.func @transform_2(%arg0: i32) -> (i32, i32, i32) {
    %c0_i32 = arith.constant 0 : i32
    %c0_i32_0 = arith.constant 0 : i32
    %c0_i32_1 = arith.constant 0 : i32
    %c0_i32_2 = arith.constant 0 : i32
    return %c0_i32, %c0_i32_0, %c0_i32_1 : i32, i32, i32
  }
  func.func @transform_3(%arg0: i32) -> (i32, i32, i32) {
    %c0_i32 = arith.constant 0 : i32
    %c0_i32_0 = arith.constant 0 : i32
    %c0_i32_1 = arith.constant 0 : i32
    %c0_i32_2 = arith.constant 0 : i32
    return %c0_i32, %c0_i32_0, %c0_i32_1 : i32, i32, i32
  }
  func.func @transform_4(%arg0: i32) -> (i32, i32) {
    %c0_i32 = arith.constant 0 : i32
    %c0_i32_0 = arith.constant 0 : i32
    %c0_i32_1 = arith.constant 0 : i32
    return %c0_i32, %c0_i32_0 : i32, i32
  }
  func.func @transform_5(%arg0: i32) -> (i32, i32) {
    %c0_i32 = arith.constant 0 : i32
    %c0_i32_0 = arith.constant 0 : i32
    %c0_i32_1 = arith.constant 0 : i32
    return %c0_i32, %c0_i32_0 : i32, i32
  }
  func.func @transform_6(%arg0: i32) -> (i32, i32) {
    %c0_i32 = arith.constant 0 : i32
    %c0_i32_0 = arith.constant 0 : i32
    %c0_i32_1 = arith.constant 0 : i32
    return %c0_i32, %c0_i32_0 : i32, i32
  }
  func.func @transform_7(%arg0: i32) -> (i32, i32) {
    %c0_i32 = arith.constant 0 : i32
    %c0_i32_0 = arith.constant 0 : i32
    %c0_i32_1 = arith.constant 0 : i32
    return %c0_i32, %c0_i32_0 : i32, i32
  }
  func.func @transform_8(%arg0: i32) -> (i32, i32, i32, i32) {
    %c0_i32 = arith.constant 0 : i32
    %c0_i32_0 = arith.constant 0 : i32
    %c0_i32_1 = arith.constant 0 : i32
    %c0_i32_2 = arith.constant 0 : i32
    return %arg0, %c0_i32, %c0_i32_0, %c0_i32_1 : i32, i32, i32, i32
  }
}

</mosaic_0001>

<llo_original>
// kernel: gate_module_forward.1
$region0: #{gate_module_forward.1}
  #allocation0 [shape = 'u32[]', space=smem, size = 0x4, offset = 0x4, fixed_abs, tag = 'smem constant byte address 0x4 - core index']
  #allocation1 [shape = 'u32[144,128]{1,0:T(1,128)}', space=vmem, size = 0x12000, scoped, tag = 'internal scratch']
  %s0 = inlined_call_operand.vmem [shape: bf16[2,18,9,256], index: 0, kind: input, shape index: {}]
  %s1 = inlined_call_operand.vmem [shape: bf16[2,16,8,64], index: 1, kind: input, shape index: {}]
  %s2 = inlined_call_operand.vmem [shape: bf16[3,256,128], index: 2, kind: input, shape index: {}]
  %s3 = inlined_call_operand.vmem [shape: bf16[3,256,128], index: 3, kind: input, shape index: {}]
  %s4 = inlined_call_operand.vmem [shape: bf16[64,128], index: 4, kind: input, shape index: {}]
  %s5 = inlined_call_operand.vmem [shape: f32[1,128], index: 5, kind: input, shape index: {}]
  %s6 = inlined_call_operand.vmem [shape: bf16[128,128], index: 6, kind: input, shape index: {}]
  %s7 = inlined_call_operand.vmem [shape: f32[1,128], index: 7, kind: input, shape index: {}]
  %s8 = inlined_call_operand.vmem [shape: f32[2,16,8,128], index: 8, kind: output, shape index: {}]
  %s9 = sld [smem:[#allocation0]]
  $region65: #{gate_module_forward.1} parent=0
    _
  %s11 = ssub.s32 1, %s9
  %s12 = scalar_select 0, %s11, %s9
  loop: start=0, step=1, limit=4
  $region2: #{gate_module_forward.1} parent=0 // loop_pre_header
    _
  $region3: #{gate_module_forward.1} parent=0 // loop_header
    %s14 = sphi 0, %s18
    %p15 = scmp.ge.s32.totalorder %s14, 4
    %s24 = sphi 0, %s26
    %s27 = sphi 0, %s24
    %s28 = sphi 0, %s27
    %s44 = sphi 0, %s28
    %s50 = sphi 0, %s52
    %s53 = sphi 0, %s50
    %s54 = sphi 0, %s53
    %s70 = sphi 0, %s54
    %s74 = sphi 0, %s74
    %s76 = sphi 0, %s74
    %s77 = sphi 0, %s76
    %s91 = sphi 0, %s77
    %s95 = sphi 0, %s95
    %s97 = sphi 0, %s95
    %s98 = sphi 0, %s97
    %s112 = sphi 0, %s98
    %s116 = sphi 0, %s116
    %s118 = sphi 0, %s116
    %s119 = sphi 0, %s118
    %s133 = sphi 0, %s119
    %s137 = sphi 0, %s137
    %s139 = sphi 0, %s137
    %s140 = sphi 0, %s139
    %s154 = sphi 0, %s140
    %s158 = sphi 0, %s158
    %s160 = sphi 0, %s158
    %s161 = sphi 0, %s160
    %s175 = sphi 0, %s161
    %s179 = sphi 0, %s179
    %s181 = sphi 0, %s179
    %s182 = sphi 0, %s181
    %s196 = sphi 0, %s182
    %s202 = sphi 0, %s204
    %s205 = sphi 0, %s202
    %s206 = sphi 0, %s205
    %s222 = sphi 0, %s206
  $region4: #{gate_module_forward.1} parent=0 // loop_header_branch
    %17 = sbr.rel (%p15) target = $region8
  $region5: #{gate_module_forward.1} parent=0 // loop_body
    %s19 = ssub.s32 %s14, 1
    %s20 = ssub.s32 %s14, 2
    %s21 = sadd.s32 %s14, 1
    %s22 = ssub.s32 %s14, %s21
    %p23 = scmp.eq.s32.totalorder %s22, 0
    %s25 = sadd.s32 %s24, 1
    %s26 = scalar_select %p23, %s24, %s25
    %p29 = pneg %p23
    %p30 = scmp.eq.s32.totalorder %s14, 1
    %p31 = por %p29, %p30
    %p32 = scmp.ne.s32.totalorder %s24, %s27
    %p33 = scmp.eq.s32.totalorder %s14, 0
    %p34 = por %p32, %p33
    %p35 = scmp.ne.s32.totalorder %s24, %s27
    %p36 = scmp.eq.s32.totalorder %s19, 1
    %p37 = por %p35, %p36
    %p38 = scmp.ne.s32.totalorder %s27, %s28
    %p39 = scmp.eq.s32.totalorder %s19, 0
    %p40 = por %p38, %p39
    %p41 = scmp.ne.s32.totalorder %s27, %s28
    %p42 = scmp.eq.s32.totalorder %s20, 1
    %p43 = por %p41, %p42
    %p45 = scmp.ne.s32.totalorder %s28, %s44
    %p46 = scmp.eq.s32.totalorder %s20, 0
    %p47 = por %p45, %p46
    %s48 = ssub.s32 %s14, %s21
    %p49 = scmp.eq.s32.totalorder %s48, 0
    %s51 = sadd.s32 %s50, 1
    %s52 = scalar_select %p49, %s50, %s51
    %p55 = pneg %p49
    %p56 = scmp.eq.s32.totalorder %s14, 1
    %p57 = por %p55, %p56
    %p58 = scmp.ne.s32.totalorder %s50, %s53
    %p59 = scmp.eq.s32.totalorder %s14, 0
    %p60 = por %p58, %p59
    %p61 = scmp.ne.s32.totalorder %s50, %s53
    %p62 = scmp.eq.s32.totalorder %s19, 1
    %p63 = por %p61, %p62
    %p64 = scmp.ne.s32.totalorder %s53, %s54
    %p65 = scmp.eq.s32.totalorder %s19, 0
    %p66 = por %p64, %p65
    %p67 = scmp.ne.s32.totalorder %s53, %s54
    %p68 = scmp.eq.s32.totalorder %s20, 1
    %p69 = por %p67, %p68
    %p71 = scmp.ne.s32.totalorder %s54, %s70
    %p72 = scmp.eq.s32.totalorder %s20, 0
    %p73 = por %p71, %p72
    %s75 = sadd.s32 %s74, 1
    %p78 = scmp.eq.s32.totalorder %s14, 1
    %p79 = scmp.ne.s32.totalorder %s74, %s76
    %p80 = scmp.eq.s32.totalorder %s14, 0
    %p81 = por %p79, %p80
    %p82 = scmp.ne.s32.totalorder %s74, %s76
    %p83 = scmp.eq.s32.totalorder %s19, 1
    %p84 = por %p82, %p83
    %p85 = scmp.ne.s32.totalorder %s76, %s77
    %p86 = scmp.eq.s32.totalorder %s19, 0
    %p87 = por %p85, %p86
    %p88 = scmp.ne.s32.totalorder %s76, %s77
    %p89 = scmp.eq.s32.totalorder %s20, 1
    %p90 = por %p88, %p89
    %p92 = scmp.ne.s32.totalorder %s77, %s91
    %p93 = scmp.eq.s32.totalorder %s20, 0
    %p94 = por %p92, %p93
    %s96 = sadd.s32 %s95, 1
    %p99 = scmp.eq.s32.totalorder %s14, 1
    %p100 = scmp.ne.s32.totalorder %s95, %s97
    %p101 = scmp.eq.s32.totalorder %s14, 0
    %p102 = por %p100, %p101
    %p103 = scmp.ne.s32.totalorder %s95, %s97
    %p104 = scmp.eq.s32.totalorder %s19, 1
    %p105 = por %p103, %p104
    %p106 = scmp.ne.s32.totalorder %s97, %s98
    %p107 = scmp.eq.s32.totalorder %s19, 0
    %p108 = por %p106, %p107
    %p109 = scmp.ne.s32.totalorder %s97, %s98
    %p110 = scmp.eq.s32.totalorder %s20, 1
    %p111 = por %p109, %p110
    %p113 = scmp.ne.s32.totalorder %s98, %s112
    %p114 = scmp.eq.s32.totalorder %s20, 0
    %p115 = por %p113, %p114
    %s117 = sadd.s32 %s116, 1
    %p120 = scmp.eq.s32.totalorder %s14, 1
    %p121 = scmp.ne.s32.totalorder %s116, %s118
    %p122 = scmp.eq.s32.totalorder %s14, 0
    %p123 = por %p121, %p122
    %p124 = scmp.ne.s32.totalorder %s116, %s118
    %p125 = scmp.eq.s32.totalorder %s19, 1
    %p126 = por %p124, %p125
    %p127 = scmp.ne.s32.totalorder %s118, %s119
    %p128 = scmp.eq.s32.totalorder %s19, 0
    %p129 = por %p127, %p128
    %p130 = scmp.ne.s32.totalorder %s118, %s119
    %p131 = scmp.eq.s32.totalorder %s20, 1
    %p132 = por %p130, %p131
    %p134 = scmp.ne.s32.totalorder %s119, %s133
    %p135 = scmp.eq.s32.totalorder %s20, 0
    %p136 = por %p134, %p135
    %s138 = sadd.s32 %s137, 1
    %p141 = scmp.eq.s32.totalorder %s14, 1
    %p142 = scmp.ne.s32.totalorder %s137, %s139
    %p143 = scmp.eq.s32.totalorder %s14, 0
    %p144 = por %p142, %p143
    %p145 = scmp.ne.s32.totalorder %s137, %s139
    %p146 = scmp.eq.s32.totalorder %s19, 1
    %p147 = por %p145, %p146
    %p148 = scmp.ne.s32.totalorder %s139, %s140
    %p149 = scmp.eq.s32.totalorder %s19, 0
    %p150 = por %p148, %p149
    %p151 = scmp.ne.s32.totalorder %s139, %s140
    %p152 = scmp.eq.s32.totalorder %s20, 1
    %p153 = por %p151, %p152
    %p155 = scmp.ne.s32.totalorder %s140, %s154
    %p156 = scmp.eq.s32.totalorder %s20, 0
    %p157 = por %p155, %p156
    %s159 = sadd.s32 %s158, 1
    %p162 = scmp.eq.s32.totalorder %s14, 1
    %p163 = scmp.ne.s32.totalorder %s158, %s160
    %p164 = scmp.eq.s32.totalorder %s14, 0
    %p165 = por %p163, %p164
    %p166 = scmp.ne.s32.totalorder %s158, %s160
    %p167 = scmp.eq.s32.totalorder %s19, 1
    %p168 = por %p166, %p167
    %p169 = scmp.ne.s32.totalorder %s160, %s161
    %p170 = scmp.eq.s32.totalorder %s19, 0
    %p171 = por %p169, %p170
    %p172 = scmp.ne.s32.totalorder %s160, %s161
    %p173 = scmp.eq.s32.totalorder %s20, 1
    %p174 = por %p172, %p173
    %p176 = scmp.ne.s32.totalorder %s161, %s175
    %p177 = scmp.eq.s32.totalorder %s20, 0
    %p178 = por %p176, %p177
    %s180 = sadd.s32 %s179, 1
    %p183 = scmp.eq.s32.totalorder %s14, 1
    %p184 = scmp.ne.s32.totalorder %s179, %s181
    %p185 = scmp.eq.s32.totalorder %s14, 0
    %p186 = por %p184, %p185
    %p187 = scmp.ne.s32.totalorder %s179, %s181
    %p188 = scmp.eq.s32.totalorder %s19, 1
    %p189 = por %p187, %p188
    %p190 = scmp.ne.s32.totalorder %s181, %s182
    %p191 = scmp.eq.s32.totalorder %s19, 0
    %p192 = por %p190, %p191
    %p193 = scmp.ne.s32.totalorder %s181, %s182
    %p194 = scmp.eq.s32.totalorder %s20, 1
    %p195 = por %p193, %p194
    %p197 = scmp.ne.s32.totalorder %s182, %s196
    %p198 = scmp.eq.s32.totalorder %s20, 0
    %p199 = por %p197, %p198
    %s200 = ssub.s32 %s14, %s21
    %p201 = scmp.eq.s32.totalorder %s200, 0
    %s203 = sadd.s32 %s202, 1
    %s204 = scalar_select %p201, %s202, %s203
    %p207 = pneg %p201
    %p208 = scmp.eq.s32.totalorder %s14, 1
    %p209 = por %p207, %p208
    %p210 = scmp.ne.s32.totalorder %s202, %s205
    %p211 = scmp.eq.s32.totalorder %s14, 0
    %p212 = por %p210, %p211
    %p213 = scmp.ne.s32.totalorder %s202, %s205
    %p214 = scmp.eq.s32.totalorder %s19, 1
    %p215 = por %p213, %p214
    %p216 = scmp.ne.s32.totalorder %s205, %s206
    %p217 = scmp.eq.s32.totalorder %s19, 0
    %p218 = por %p216, %p217
    %p219 = scmp.ne.s32.totalorder %s205, %s206
    %p220 = scmp.eq.s32.totalorder %s20, 1
    %p221 = por %p219, %p220
    %p223 = scmp.ne.s32.totalorder %s206, %s222
    %p224 = scmp.eq.s32.totalorder %s20, 0
    %p225 = por %p223, %p224
    %p226 = scmp.le.s32.totalorder 1, %s14
    %p227 = scmp.lt.s32.totalorder %s14, 3
    %p228 = pnand %p226, %p227
    %p229 = pneg %p228
    // Predicated region
    $region9: #{gate_module_forward.1} parent=5 // pred_check
      _
    $region10: #{gate_module_forward.1} parent=5 // pred_check_branch
      %231 = sbr.rel (%p228) target = $region12
    $region11: #{gate_module_forward.1} parent=5 // pred_region
      %s232 = ssub.s32 %s14, 1
      // Predicated region
      $region13: #{gate_module_forward.1} parent=11 // pred_check
        %p233 = pneg %p87
      $region14: #{gate_module_forward.1} parent=11 // pred_check_branch
        %235 = sbr.rel (%p233) target = $region16
      $region15: #{gate_module_forward.1} parent=11 // pred_region
        _
      $region16: #{gate_module_forward.1} parent=11 // pred_fallthru
        _
      // Predicated region
      $region17: #{gate_module_forward.1} parent=11 // pred_check
        %p236 = pneg %p108
      $region18: #{gate_module_forward.1} parent=11 // pred_check_branch
        %238 = sbr.rel (%p236) target = $region20
      $region19: #{gate_module_forward.1} parent=11 // pred_region
        _
      $region20: #{gate_module_forward.1} parent=11 // pred_fallthru
        _
      // Predicated region
      $region21: #{gate_module_forward.1} parent=11 // pred_check
        %p239 = pneg %p129
      $region22: #{gate_module_forward.1} parent=11 // pred_check_branch
        %241 = sbr.rel (%p239) target = $region24
      $region23: #{gate_module_forward.1} parent=11 // pred_region
        _
      $region24: #{gate_module_forward.1} parent=11 // pred_fallthru
        _
      // Predicated region
      $region25: #{gate_module_forward.1} parent=11 // pred_check
        %p242 = pneg %p150
      $region26: #{gate_module_forward.1} parent=11 // pred_check_branch
        %244 = sbr.rel (%p242) target = $region28
      $region27: #{gate_module_forward.1} parent=11 // pred_region
        _
      $region28: #{gate_module_forward.1} parent=11 // pred_fallthru
        _
      // Predicated region
      $region29: #{gate_module_forward.1} parent=11 // pred_check
        %p245 = pneg %p171
      $region30: #{gate_module_forward.1} parent=11 // pred_check_branch
        %247 = sbr.rel (%p245) target = $region32
      $region31: #{gate_module_forward.1} parent=11 // pred_region
        _
      $region32: #{gate_module_forward.1} parent=11 // pred_fallthru
        _
      // Predicated region
      $region33: #{gate_module_forward.1} parent=11 // pred_check
        %p248 = pneg %p192
      $region34: #{gate_module_forward.1} parent=11 // pred_check_branch
        %250 = sbr.rel (%p248) target = $region36
      $region35: #{gate_module_forward.1} parent=11 // pred_region
        _
      $region36: #{gate_module_forward.1} parent=11 // pred_fallthru
        _
    $region12: #{gate_module_forward.1} parent=5 // pred_fallthru
      _
    %p251 = scmp.lt.s32.totalorder %s14, 2
    // Predicated region
    $region37: #{gate_module_forward.1} parent=5 // pred_check
      %p252 = pneg %p251
    $region38: #{gate_module_forward.1} parent=5 // pred_check_branch
      %254 = sbr.rel (%p252) target = $region40
    $region39: #{gate_module_forward.1} parent=5 // pred_region
      // Predicated region
      $region41: #{gate_module_forward.1} parent=39 // pred_check
        %p255 = pneg %p34
      $region42: #{gate_module_forward.1} parent=39 // pred_check_branch
        %257 = sbr.rel (%p255) target = $region44
      $region43: #{gate_module_forward.1} parent=39 // pred_region
        %p258 = scmp.lt.s32.totalorder %s14, 1
        %s259 = scalar_select %p258, %s14, 1
        %s260 = smul.addr %s259, 72
        %s261 = smul.addr %s260, 4
        %s262 = scalar_lea.vmem %s0, %s261
      $region44: #{gate_module_forward.1} parent=39 // pred_fallthru
        _
      // Predicated region
      $region45: #{gate_module_forward.1} parent=39 // pred_check
        %p263 = pneg %p60
      $region46: #{gate_module_forward.1} parent=39 // pred_check_branch
        %265 = sbr.rel (%p263) target = $region48
      $region47: #{gate_module_forward.1} parent=39 // pred_region
        %p266 = scmp.lt.s32.totalorder %s14, 1
        %s267 = scalar_select %p266, %s14, 1
        %s268 = smul.addr %s267, 16
        %s269 = smul.addr %s268, 4
        %s270 = scalar_lea.vmem %s1, %s269
      $region48: #{gate_module_forward.1} parent=39 // pred_fallthru
        _
    $region40: #{gate_module_forward.1} parent=5 // pred_fallthru
      _
    %p271 = scmp.le.s32.totalorder 1, %s14
    %p272 = scmp.lt.s32.totalorder %s14, 3
    %p273 = pnand %p271, %p272
    %p274 = pneg %p273
    // Predicated region
    $region49: #{gate_module_forward.1} parent=5 // pred_check
      _
    $region50: #{gate_module_forward.1} parent=5 // pred_check_branch
      %276 = sbr.rel (%p273) target = $region52
    $region51: #{gate_module_forward.1} parent=5 // pred_region
      %s277 = ssub.s32 %s14, 1
      %p278 = scmp.lt.s32.totalorder %s19, 1
      %s279 = scalar_select %p278, %s19, 1
      %s280 = smul.addr %s279, 72
      %s281 = smul.addr %s280, 4
      %s282 = scalar_lea.vmem %s0, %s281
      %p283 = pneg %p40
      %p284 = pneg %p37
      %p285 = scmp.lt.s32.totalorder %s19, 1
      %s286 = scalar_select %p285, %s19, 1
      %s287 = smul.addr %s286, 16
      %s288 = smul.addr %s287, 4
      %s289 = scalar_lea.vmem %s1, %s288
      %p290 = pneg %p66
      %p291 = pneg %p63
      %p292 = pneg %p87
      %p293 = pneg %p84
      %p294 = pneg %p108
      %p295 = pneg %p105
      %p296 = pneg %p129
      %p297 = pneg %p126
      %p298 = pneg %p150
      %p299 = pneg %p147
      %p300 = pneg %p171
      %p301 = pneg %p168
      %p302 = pneg %p192
      %p303 = pneg %p189
      %p304 = pneg %p218
      %p305 = pneg %p215
      %p306 = scmp.lt.s32.totalorder %s19, 1
      %s307 = scalar_select %p306, %s19, 1
      %s308 = smul.addr %s307, 16
      %s309 = smul.addr %s308, 8
      %s310 = scalar_lea.vmem %s8, %s309
      %p311 = scmp.lt.s32.totalorder %s19, 1
      %s312 = scalar_select %p311, %s19, 1
      %s313 = smul.addr %s312, 72
      %s314 = smul.addr %s313, 4
      %s315 = scalar_lea.vmem %s0, %s314
      %p316 = scmp.lt.s32.totalorder %s19, 1
      %s317 = scalar_select %p316, %s19, 1
      %s318 = smul.addr %s317, 16
      %s319 = smul.addr %s318, 4
      %s320 = scalar_lea.vmem %s1, %s319
      %p321 = scmp.lt.s32.totalorder %s19, 1
      %s322 = scalar_select %p321, %s19, 1
      %s323 = smul.addr %s322, 16
      %s324 = smul.addr %s323, 8
      %s325 = scalar_lea.vmem %s8, %s324
      %v327 = vld [vmem:[%s315] sm:$0xff]
      %v328 = vld [vmem:[%s315 + $0x10] sm:$0xff]
      %v329 = vld [vmem:[%s315 + $0x20] sm:$0xff]
      %v330 = vld [vmem:[%s315 + $0x30] sm:$0xff]
      %v331 = vld [vmem:[%s315 + $0x40] sm:$0xff]
      %v332 = vld [vmem:[%s315 + $0x50] sm:$0xff]
      %v333 = vld [vmem:[%s315 + $0x60] sm:$0xff]
      %v334 = vld [vmem:[%s315 + $0x70] sm:$0xff]
      %v335 = vld [vmem:[%s315 + $0x80] sm:$0xff]
      %v336 = vld [vmem:[%s315 + $0x90] sm:$0xff]
      %v337 = vld [vmem:[%s315 + $0xa0] sm:$0xff]
      %v338 = vld [vmem:[%s315 + $0xb0] sm:$0xff]
      %v339 = vld [vmem:[%s315 + $0xc0] sm:$0xff]
      %v340 = vld [vmem:[%s315 + $0xd0] sm:$0xff]
      %v341 = vld [vmem:[%s315 + $0xe0] sm:$0xff]
      %v342 = vld [vmem:[%s315 + $0xf0] sm:$0xff]
      %v343 = vld [vmem:[%s315 + $0x8] sm:$0x11]
      %v344 = vld [vmem:[%s315 + $0x18] sm:$0x11]
      %v345 = vld [vmem:[%s315 + $0x28] sm:$0x11]
      %v346 = vld [vmem:[%s315 + $0x38] sm:$0x11]
      %v347 = vld [vmem:[%s315 + $0x48] sm:$0x11]
      %v348 = vld [vmem:[%s315 + $0x58] sm:$0x11]
      %v349 = vld [vmem:[%s315 + $0x68] sm:$0x11]
      %v350 = vld [vmem:[%s315 + $0x78] sm:$0x11]
      %v351 = vld [vmem:[%s315 + $0x88] sm:$0x11]
      %v352 = vld [vmem:[%s315 + $0x98] sm:$0x11]
      %v353 = vld [vmem:[%s315 + $0xa8] sm:$0x11]
      %v354 = vld [vmem:[%s315 + $0xb8] sm:$0x11]
      %v355 = vld [vmem:[%s315 + $0xc8] sm:$0x11]
      %v356 = vld [vmem:[%s315 + $0xd8] sm:$0x11]
      %v357 = vld [vmem:[%s315 + $0xe8] sm:$0x11]
      %v358 = vld [vmem:[%s315 + $0xf8] sm:$0x11]
      %vm359 = vsmask.f32 3328
      %vm360 = vsmask.f32 7440
      %vm361 = vmor %vm359, %vm360
      %v363 = vshrl.u32 %v327, 16
      %v365 = vrot.slane %v363, 4
      %v366 = vshll.u32 %v327, 16
      %v368 = vrot.slane %v366, 5
      %v369 = vor.u32 %v365, %v368
      %v370 = vrot.slane %v369, 4
      %v372 = vshll.u32 %v343, 16
      %v374 = vrot.slane %v372, 5
      %v375 = vsel %vm361, %v370, %v374
      %v377 = vshrl.u32 %v328, 16
      %v379 = vrot.slane %v377, 4
      %v380 = vshll.u32 %v328, 16
      %v382 = vrot.slane %v380, 5
      %v383 = vor.u32 %v379, %v382
      %v384 = vrot.slane %v383, 4
      %v386 = vshll.u32 %v344, 16
      %v388 = vrot.slane %v386, 5
      %v389 = vsel %vm361, %v384, %v388
      %v391 = vshrl.u32 %v329, 16
      %v393 = vrot.slane %v391, 4
      %v394 = vshll.u32 %v329, 16
      %v396 = vrot.slane %v394, 5
      %v397 = vor.u32 %v393, %v396
      %v398 = vrot.slane %v397, 4
      %v400 = vshll.u32 %v345, 16
      %v402 = vrot.slane %v400, 5
      %v403 = vsel %vm361, %v398, %v402
      %v405 = vshrl.u32 %v330, 16
      %v407 = vrot.slane %v405, 4
      %v408 = vshll.u32 %v330, 16
      %v410 = vrot.slane %v408, 5
      %v411 = vor.u32 %v407, %v410
      %v412 = vrot.slane %v411, 4
      %v414 = vshll.u32 %v346, 16
      %v416 = vrot.slane %v414, 5
      %v417 = vsel %vm361, %v412, %v416
      %v419 = vshrl.u32 %v331, 16
      %v421 = vrot.slane %v419, 4
      %v422 = vshll.u32 %v331, 16
      %v424 = vrot.slane %v422, 5
      %v425 = vor.u32 %v421, %v424
      %v426 = vrot.slane %v425, 4
      %v428 = vshll.u32 %v347, 16
      %v430 = vrot.slane %v428, 5
      %v431 = vsel %vm361, %v426, %v430
      %v433 = vshrl.u32 %v332, 16
      %v435 = vrot.slane %v433, 4
      %v436 = vshll.u32 %v332, 16
      %v438 = vrot.slane %v436, 5
      %v439 = vor.u32 %v435, %v438
      %v440 = vrot.slane %v439, 4
      %v442 = vshll.u32 %v348, 16
      %v444 = vrot.slane %v442, 5
      %v445 = vsel %vm361, %v440, %v444
      %v447 = vshrl.u32 %v333, 16
      %v449 = vrot.slane %v447, 4
      %v450 = vshll.u32 %v333, 16
      %v452 = vrot.slane %v450, 5
      %v453 = vor.u32 %v449, %v452
      %v454 = vrot.slane %v453, 4
      %v456 = vshll.u32 %v349, 16
      %v458 = vrot.slane %v456, 5
      %v459 = vsel %vm361, %v454, %v458
      %v461 = vshrl.u32 %v334, 16
      %v463 = vrot.slane %v461, 4
      %v464 = vshll.u32 %v334, 16
      %v466 = vrot.slane %v464, 5
      %v467 = vor.u32 %v463, %v466
      %v468 = vrot.slane %v467, 4
      %v470 = vshll.u32 %v350, 16
      %v472 = vrot.slane %v470, 5
      %v473 = vsel %vm361, %v468, %v472
      %v475 = vshrl.u32 %v335, 16
      %v477 = vrot.slane %v475, 4
      %v478 = vshll.u32 %v335, 16
      %v480 = vrot.slane %v478, 5
      %v481 = vor.u32 %v477, %v480
      %v482 = vrot.slane %v481, 4
      %v484 = vshll.u32 %v351, 16
      %v486 = vrot.slane %v484, 5
      %v487 = vsel %vm361, %v482, %v486
      %v489 = vshrl.u32 %v336, 16
      %v491 = vrot.slane %v489, 4
      %v492 = vshll.u32 %v336, 16
      %v494 = vrot.slane %v492, 5
      %v495 = vor.u32 %v491, %v494
      %v496 = vrot.slane %v495, 4
      %v498 = vshll.u32 %v352, 16
      %v500 = vrot.slane %v498, 5
      %v501 = vsel %vm361, %v496, %v500
      %v503 = vshrl.u32 %v337, 16
      %v505 = vrot.slane %v503, 4
      %v506 = vshll.u32 %v337, 16
      %v508 = vrot.slane %v506, 5
      %v509 = vor.u32 %v505, %v508
      %v510 = vrot.slane %v509, 4
      %v512 = vshll.u32 %v353, 16
      %v514 = vrot.slane %v512, 5
      %v515 = vsel %vm361, %v510, %v514
      %v517 = vshrl.u32 %v338, 16
      %v519 = vrot.slane %v517, 4
      %v520 = vshll.u32 %v338, 16
      %v522 = vrot.slane %v520, 5
      %v523 = vor.u32 %v519, %v522
      %v524 = vrot.slane %v523, 4
      %v526 = vshll.u32 %v354, 16
      %v528 = vrot.slane %v526, 5
      %v529 = vsel %vm361, %v524, %v528
      %v531 = vshrl.u32 %v339, 16
      %v533 = vrot.slane %v531, 4
      %v534 = vshll.u32 %v339, 16
      %v536 = vrot.slane %v534, 5
      %v537 = vor.u32 %v533, %v536
      %v538 = vrot.slane %v537, 4
      %v540 = vshll.u32 %v355, 16
      %v542 = vrot.slane %v540, 5
      %v543 = vsel %vm361, %v538, %v542
      %v545 = vshrl.u32 %v340, 16
      %v547 = vrot.slane %v545, 4
      %v548 = vshll.u32 %v340, 16
      %v550 = vrot.slane %v548, 5
      %v551 = vor.u32 %v547, %v550
      %v552 = vrot.slane %v551, 4
      %v554 = vshll.u32 %v356, 16
      %v556 = vrot.slane %v554, 5
      %v557 = vsel %vm361, %v552, %v556
      %v559 = vshrl.u32 %v341, 16
      %v561 = vrot.slane %v559, 4
      %v562 = vshll.u32 %v341, 16
      %v564 = vrot.slane %v562, 5
      %v565 = vor.u32 %v561, %v564
      %v566 = vrot.slane %v565, 4
      %v568 = vshll.u32 %v357, 16
      %v570 = vrot.slane %v568, 5
      %v571 = vsel %vm361, %v566, %v570
      %v573 = vshrl.u32 %v342, 16
      %v575 = vrot.slane %v573, 4
      %v576 = vshll.u32 %v342, 16
      %v578 = vrot.slane %v576, 5
      %v579 = vor.u32 %v575, %v578
      %v580 = vrot.slane %v579, 4
      %v582 = vshll.u32 %v358, 16
      %v584 = vrot.slane %v582, 5
      %v585 = vsel %vm361, %v580, %v584
      %v586 = vld [vmem:[%s2] sm:$0xf]
      %v587 = vld [vmem:[%s2 + $0x4] sm:$0xf]
      %v588 = vld [vmem:[%s2 + $0x8] sm:$0xf]
      %v589 = vld [vmem:[%s2 + $0xc] sm:$0xf]
      %v590 = vld [vmem:[%s2 + $0x10] sm:$0xf]
      %v591 = vld [vmem:[%s2 + $0x14] sm:$0xf]
      %v592 = vld [vmem:[%s2 + $0x18] sm:$0xf]
      %v593 = vld [vmem:[%s2 + $0x1c] sm:$0xf]
      %v594 = vld [vmem:[%s2 + $0x20] sm:$0xf]
      %v595 = vld [vmem:[%s2 + $0x24] sm:$0xf]
      %v596 = vld [vmem:[%s2 + $0x28] sm:$0xf]
      %v597 = vld [vmem:[%s2 + $0x2c] sm:$0xf]
      %v598 = vld [vmem:[%s2 + $0x30] sm:$0xf]
      %v599 = vld [vmem:[%s2 + $0x34] sm:$0xf]
      %v600 = vld [vmem:[%s2 + $0x38] sm:$0xf]
      %v601 = vld [vmem:[%s2 + $0x3c] sm:$0xf]
      %v602 = vld [vmem:[%s2 + $0x40] sm:$0xf]
      %v603 = vld [vmem:[%s2 + $0x44] sm:$0xf]
      %v604 = vld [vmem:[%s2 + $0x48] sm:$0xf]
      %v605 = vld [vmem:[%s2 + $0x4c] sm:$0xf]
      %v606 = vld [vmem:[%s2 + $0x50] sm:$0xf]
      %v607 = vld [vmem:[%s2 + $0x54] sm:$0xf]
      %v608 = vld [vmem:[%s2 + $0x58] sm:$0xf]
      %v609 = vld [vmem:[%s2 + $0x5c] sm:$0xf]
      %v610 = vld [vmem:[%s2 + $0x60] sm:$0xf]
      %v611 = vld [vmem:[%s2 + $0x64] sm:$0xf]
      %v612 = vld [vmem:[%s2 + $0x68] sm:$0xf]
      %v613 = vld [vmem:[%s2 + $0x6c] sm:$0xf]
      %v614 = vld [vmem:[%s2 + $0x70] sm:$0xf]
      %v615 = vld [vmem:[%s2 + $0x74] sm:$0xf]
      %v616 = vld [vmem:[%s2 + $0x78] sm:$0xf]
      %v617 = vld [vmem:[%s2 + $0x7c] sm:$0xf]
      %v618 = vld [vmem:[%s3] sm:$0xf]
      %v619 = vld [vmem:[%s3 + $0x4] sm:$0xf]
      %v620 = vld [vmem:[%s3 + $0x8] sm:$0xf]
      %v621 = vld [vmem:[%s3 + $0xc] sm:$0xf]
      %v622 = vld [vmem:[%s3 + $0x10] sm:$0xf]
      %v623 = vld [vmem:[%s3 + $0x14] sm:$0xf]
      %v624 = vld [vmem:[%s3 + $0x18] sm:$0xf]
      %v625 = vld [vmem:[%s3 + $0x1c] sm:$0xf]
      %v626 = vld [vmem:[%s3 + $0x20] sm:$0xf]
      %v627 = vld [vmem:[%s3 + $0x24] sm:$0xf]
      %v628 = vld [vmem:[%s3 + $0x28] sm:$0xf]
      %v629 = vld [vmem:[%s3 + $0x2c] sm:$0xf]
      %v630 = vld [vmem:[%s3 + $0x30] sm:$0xf]
      %v631 = vld [vmem:[%s3 + $0x34] sm:$0xf]
      %v632 = vld [vmem:[%s3 + $0x38] sm:$0xf]
      %v633 = vld [vmem:[%s3 + $0x3c] sm:$0xf]
      %v634 = vld [vmem:[%s3 + $0x40] sm:$0xf]
      %v635 = vld [vmem:[%s3 + $0x44] sm:$0xf]
      %v636 = vld [vmem:[%s3 + $0x48] sm:$0xf]
      %v637 = vld [vmem:[%s3 + $0x4c] sm:$0xf]
      %v638 = vld [vmem:[%s3 + $0x50] sm:$0xf]
      %v639 = vld [vmem:[%s3 + $0x54] sm:$0xf]
      %v640 = vld [vmem:[%s3 + $0x58] sm:$0xf]
      %v641 = vld [vmem:[%s3 + $0x5c] sm:$0xf]
      %v642 = vld [vmem:[%s3 + $0x60] sm:$0xf]
      %v643 = vld [vmem:[%s3 + $0x64] sm:$0xf]
      %v644 = vld [vmem:[%s3 + $0x68] sm:$0xf]
      %v645 = vld [vmem:[%s3 + $0x6c] sm:$0xf]
      %v646 = vld [vmem:[%s3 + $0x70] sm:$0xf]
      %v647 = vld [vmem:[%s3 + $0x74] sm:$0xf]
      %v648 = vld [vmem:[%s3 + $0x78] sm:$0xf]
      %v649 = vld [vmem:[%s3 + $0x7c] sm:$0xf]
      %v650 = vunpack.c.l.b16 %v375
      %v651 = vunpack.c.h.b16 %v375
      %v652 = vunpack.c.l.b16 %v389
      %v653 = vunpack.c.h.b16 %v389
      %v654 = vunpack.c.l.b16 %v403
      %v655 = vunpack.c.h.b16 %v403
      %v656 = vunpack.c.l.b16 %v417
      %v657 = vunpack.c.h.b16 %v417
      %v658 = vunpack.c.l.b16 %v431
      %v659 = vunpack.c.h.b16 %v431
      %v660 = vunpack.c.l.b16 %v445
      %v661 = vunpack.c.h.b16 %v445
      %v662 = vunpack.c.l.b16 %v459
      %v663 = vunpack.c.h.b16 %v459
      %v664 = vunpack.c.l.b16 %v473
      %v665 = vunpack.c.h.b16 %v473
      %v666 = vunpack.c.l.b16 %v487
      %v667 = vunpack.c.h.b16 %v487
      %v668 = vunpack.c.l.b16 %v501
      %v669 = vunpack.c.h.b16 %v501
      %v670 = vunpack.c.l.b16 %v515
      %v671 = vunpack.c.h.b16 %v515
      %v672 = vunpack.c.l.b16 %v529
      %v673 = vunpack.c.h.b16 %v529
      %v674 = vunpack.c.l.b16 %v543
      %v675 = vunpack.c.h.b16 %v543
      %v676 = vunpack.c.l.b16 %v557
      %v677 = vunpack.c.h.b16 %v557
      %v678 = vunpack.c.l.b16 %v571
      %v679 = vunpack.c.h.b16 %v571
      %v680 = vunpack.c.l.b16 %v585
      %v681 = vunpack.c.h.b16 %v585
      %v682 = vpack.c.b16 %v652, %v650
      %v683 = vpack.c.b16 %v653, %v651
      %v684 = vpack.c.b16 %v656, %v654
      %v685 = vpack.c.b16 %v657, %v655
      %v686 = vpack.c.b16 %v660, %v658
      %v687 = vpack.c.b16 %v661, %v659
      %v688 = vpack.c.b16 %v664, %v662
      %v689 = vpack.c.b16 %v665, %v663
      %v690 = vpack.c.b16 %v668, %v666
      %v691 = vpack.c.b16 %v669, %v667
      %v692 = vpack.c.b16 %v672, %v670
      %v693 = vpack.c.b16 %v673, %v671
      %v694 = vpack.c.b16 %v676, %v674
      %v695 = vpack.c.b16 %v677, %v675
      %v696 = vpack.c.b16 %v680, %v678
      %v697 = vpack.c.b16 %v681, %v679
      %v746 = vunpack.c.l.b16 %v618
      %v747 = vunpack.c.l.b16 %v619
      %v748 = vunpack.c.l.b16 %v620
      %v749 = vunpack.c.l.b16 %v621
      %v750 = vunpack.c.l.b16 %v622
      %v751 = vunpack.c.l.b16 %v623
      %v752 = vunpack.c.l.b16 %v624
      %v753 = vunpack.c.l.b16 %v625
      %v754 = vunpack.c.l.b16 %v626
      %v755 = vunpack.c.l.b16 %v627
      %v756 = vunpack.c.l.b16 %v628
      %v757 = vunpack.c.l.b16 %v629
      %v758 = vunpack.c.l.b16 %v630
      %v759 = vunpack.c.l.b16 %v631
      %v760 = vunpack.c.l.b16 %v632
      %v761 = vunpack.c.l.b16 %v633
      %v762 = vunpack.c.l.b16 %v634
      %v763 = vunpack.c.l.b16 %v635
      %v764 = vunpack.c.l.b16 %v636
      %v765 = vunpack.c.l.b16 %v637
      %v766 = vunpack.c.l.b16 %v638
      %v767 = vunpack.c.l.b16 %v639
      %v768 = vunpack.c.l.b16 %v640
      %v769 = vunpack.c.l.b16 %v641
      %v770 = vunpack.c.l.b16 %v642
      %v771 = vunpack.c.l.b16 %v643
      %v772 = vunpack.c.l.b16 %v644
      %v773 = vunpack.c.l.b16 %v645
      %v774 = vunpack.c.l.b16 %v646
      %v775 = vunpack.c.l.b16 %v647
      %v776 = vunpack.c.l.b16 %v648
      %v777 = vunpack.c.l.b16 %v649
      %v778 = vpack.c.b16 %v747, %v746
      %v779 = vpack.c.b16 %v749, %v748
      %v780 = vpack.c.b16 %v751, %v750
      %v781 = vpack.c.b16 %v753, %v752
      %v782 = vpack.c.b16 %v755, %v754
      %v783 = vpack.c.b16 %v757, %v756
      %v784 = vpack.c.b16 %v759, %v758
      %v785 = vpack.c.b16 %v761, %v760
      %v786 = vpack.c.b16 %v763, %v762
      %v787 = vpack.c.b16 %v765, %v764
      %v788 = vpack.c.b16 %v767, %v766
      %v789 = vpack.c.b16 %v769, %v768
      %v790 = vpack.c.b16 %v771, %v770
      %v791 = vpack.c.b16 %v773, %v772
      %v792 = vpack.c.b16 %v775, %v774
      %v793 = vpack.c.b16 %v777, %v776
      %810 = vmatprep.subr.bf16.mxu0 0
      %811 = vmatpush1.bf16.msra.mxu0 %v778
      %812 = vmatprep.subr.bf16.mxu0 0
      %813 = vmatpush1.bf16.msra.mxu0 %v779
      %814 = vmatprep.subr.bf16.mxu0 0
      %815 = vmatpush1.bf16.msra.mxu0 %v780
      %816 = vmatprep.subr.bf16.mxu0 0
      %817 = vmatpush1.bf16.msra.mxu0 %v781
      %818 = vmatprep.subr.bf16.mxu0 0
      %819 = vmatpush1.bf16.msra.mxu0 %v782
      %820 = vmatprep.subr.bf16.mxu0 0
      %821 = vmatpush1.bf16.msra.mxu0 %v783
      %822 = vmatprep.subr.bf16.mxu0 0
      %823 = vmatpush1.bf16.msra.mxu0 %v784
      %824 = vmatprep.subr.bf16.mxu0 0
      %825 = vmatpush1.bf16.msra.mxu0 %v785
      %826 = vmatprep.subr.bf16.mxu0 0
      %827 = vmatpush1.bf16.msra.mxu0 %v786
      %828 = vmatprep.subr.bf16.mxu0 0
      %829 = vmatpush1.bf16.msra.mxu0 %v787
      %830 = vmatprep.subr.bf16.mxu0 0
      %831 = vmatpush1.bf16.msra.mxu0 %v788
      %832 = vmatprep.subr.bf16.mxu0 0
      %833 = vmatpush1.bf16.msra.mxu0 %v789
      %834 = vmatprep.subr.bf16.mxu0 0
      %835 = vmatpush1.bf16.msra.mxu0 %v790
      %836 = vmatprep.subr.bf16.mxu0 0
      %837 = vmatpush1.bf16.msra.mxu0 %v791
      %838 = vmatprep.subr.bf16.mxu0 0
      %839 = vmatpush1.bf16.msra.mxu0 %v792
      %840 = vmatprep.subr.bf16.mxu0 0
      %841 = vmatpush1.bf16.msra.mxu0 %v793
      %842 = vmatprep.mubr.bf16.mxu0 %v683
      %843 = vmatmul.mubr.bf16.gmra.mrb[0].mxu0 %v682
      %v844 = vpop.f32.mrb[0].mxu0
      %v845 = vadd.f32 0.0, %v844
      %v846 = vpop.f32.mrb[0].mxu0
      %v847 = vpop.f32.mrb[0].mxu0
      %v848 = vadd.f32 0.0, %v847
      %v849 = vpop.f32.mrb[0].mxu0
      %850 = vmatprep.mubr.bf16.mxu0 %v685
      %851 = vmatmul.mubr.bf16.gmra.mrb[0].mxu0 %v684
      %v852 = vpop.f32.mrb[0].mxu0
      %v853 = vadd.f32 0.0, %v852
      %v854 = vpop.f32.mrb[0].mxu0
      %v855 = vpop.f32.mrb[0].mxu0
      %v856 = vadd.f32 0.0, %v855
      %v857 = vpop.f32.mrb[0].mxu0
      %858 = vmatprep.mubr.bf16.mxu0 %v687
      %859 = vmatmul.mubr.bf16.gmra.mrb[0].mxu0 %v686
      %v860 = vpop.f32.mrb[0].mxu0
      %v861 = vadd.f32 0.0, %v860
      %v862 = vpop.f32.mrb[0].mxu0
      %v863 = vpop.f32.mrb[0].mxu0
      %v864 = vadd.f32 0.0, %v863
      %v865 = vpop.f32.mrb[0].mxu0
      %866 = vmatprep.mubr.bf16.mxu0 %v689
      %867 = vmatmul.mubr.bf16.gmra.mrb[0].mxu0 %v688
      %v868 = vpop.f32.mrb[0].mxu0
      %v869 = vadd.f32 0.0, %v868
      %v870 = vpop.f32.mrb[0].mxu0
      %v871 = vpop.f32.mrb[0].mxu0
      %v872 = vadd.f32 0.0, %v871
      %v873 = vpop.f32.mrb[0].mxu0
      %874 = vmatprep.mubr.bf16.mxu0 %v691
      %875 = vmatmul.mubr.bf16.gmra.mrb[0].mxu0 %v690
      %v876 = vpop.f32.mrb[0].mxu0
      %v877 = vadd.f32 0.0, %v876
      %v878 = vpop.f32.mrb[0].mxu0
      %v879 = vpop.f32.mrb[0].mxu0
      %v880 = vadd.f32 0.0, %v879
      %v881 = vpop.f32.mrb[0].mxu0
      %882 = vmatprep.mubr.bf16.mxu0 %v693
      %883 = vmatmul.mubr.bf16.gmra.mrb[0].mxu0 %v692
      %v884 = vpop.f32.mrb[0].mxu0
      %v885 = vadd.f32 0.0, %v884
      %v886 = vpop.f32.mrb[0].mxu0
      %v887 = vpop.f32.mrb[0].mxu0
      %v888 = vadd.f32 0.0, %v887
      %v889 = vpop.f32.mrb[0].mxu0
      %890 = vmatprep.mubr.bf16.mxu0 %v695
      %891 = vmatmul.mubr.bf16.gmra.mrb[0].mxu0 %v694
      %v892 = vpop.f32.mrb[0].mxu0
      %v893 = vadd.f32 0.0, %v892
      %v894 = vpop.f32.mrb[0].mxu0
      %v895 = vpop.f32.mrb[0].mxu0
      %v896 = vadd.f32 0.0, %v895
      %v897 = vpop.f32.mrb[0].mxu0
      %898 = vmatprep.mubr.bf16.mxu0 %v697
      %899 = vmatmul.mubr.bf16.gmra.mrb[0].mxu0 %v696
      %v900 = vpop.f32.mrb[0].mxu0
      %v901 = vadd.f32 0.0, %v900
      %v902 = vpop.f32.mrb[0].mxu0
      %v903 = vpop.f32.mrb[0].mxu0
      %v904 = vadd.f32 0.0, %v903
      %v905 = vpop.f32.mrb[0].mxu0
      %906 = vdwg.mxu0
      %v923 = vunpack.c.l.b16 %v327
      %v924 = vunpack.c.h.b16 %v327
      %v925 = vunpack.c.l.b16 %v328
      %v926 = vunpack.c.h.b16 %v328
      %v927 = vunpack.c.l.b16 %v329
      %v928 = vunpack.c.h.b16 %v329
      %v929 = vunpack.c.l.b16 %v330
      %v930 = vunpack.c.h.b16 %v330
      %v931 = vunpack.c.l.b16 %v331
      %v932 = vunpack.c.h.b16 %v331
      %v933 = vunpack.c.l.b16 %v332
      %v934 = vunpack.c.h.b16 %v332
      %v935 = vunpack.c.l.b16 %v333
      %v936 = vunpack.c.h.b16 %v333
      %v937 = vunpack.c.l.b16 %v334
      %v938 = vunpack.c.h.b16 %v334
      %v939 = vunpack.c.l.b16 %v335
      %v940 = vunpack.c.h.b16 %v335
      %v941 = vunpack.c.l.b16 %v336
      %v942 = vunpack.c.h.b16 %v336
      %v943 = vunpack.c.l.b16 %v337
      %v944 = vunpack.c.h.b16 %v337
      %v945 = vunpack.c.l.b16 %v338
      %v946 = vunpack.c.h.b16 %v338
      %v947 = vunpack.c.l.b16 %v339
      %v948 = vunpack.c.h.b16 %v339
      %v949 = vunpack.c.l.b16 %v340
      %v950 = vunpack.c.h.b16 %v340
      %v951 = vunpack.c.l.b16 %v341
      %v952 = vunpack.c.h.b16 %v341
      %v953 = vunpack.c.l.b16 %v342
      %v954 = vunpack.c.h.b16 %v342
      %v955 = vpack.c.b16 %v925, %v923
      %v956 = vpack.c.b16 %v926, %v924
      %v957 = vpack.c.b16 %v929, %v927
      %v958 = vpack.c.b16 %v930, %v928
      %v959 = vpack.c.b16 %v933, %v931
      %v960 = vpack.c.b16 %v934, %v932
      %v961 = vpack.c.b16 %v937, %v935
      %v962 = vpack.c.b16 %v938, %v936
      %v963 = vpack.c.b16 %v941, %v939
      %v964 = vpack.c.b16 %v942, %v940
      %v965 = vpack.c.b16 %v945, %v943
      %v966 = vpack.c.b16 %v946, %v944
      %v967 = vpack.c.b16 %v949, %v947
      %v968 = vpack.c.b16 %v950, %v948
      %v969 = vpack.c.b16 %v953, %v951
      %v970 = vpack.c.b16 %v954, %v952
      %v1019 = vunpack.c.l.b16 %v586
      %v1020 = vunpack.c.l.b16 %v587
      %v1021 = vunpack.c.l.b16 %v588
      %v1022 = vunpack.c.l.b16 %v589
      %v1023 = vunpack.c.l.b16 %v590
      %v1024 = vunpack.c.l.b16 %v591
      %v1025 = vunpack.c.l.b16 %v592
      %v1026 = vunpack.c.l.b16 %v593
      %v1027 = vunpack.c.l.b16 %v594
      %v1028 = vunpack.c.l.b16 %v595
      %v1029 = vunpack.c.l.b16 %v596
      %v1030 = vunpack.c.l.b16 %v597
      %v1031 = vunpack.c.l.b16 %v598
      %v1032 = vunpack.c.l.b16 %v599
      %v1033 = vunpack.c.l.b16 %v600
      %v1034 = vunpack.c.l.b16 %v601
      %v1035 = vunpack.c.l.b16 %v602
      %v1036 = vunpack.c.l.b16 %v603
      %v1037 = vunpack.c.l.b16 %v604
      %v1038 = vunpack.c.l.b16 %v605
      %v1039 = vunpack.c.l.b16 %v606
      %v1040 = vunpack.c.l.b16 %v607
      %v1041 = vunpack.c.l.b16 %v608
      %v1042 = vunpack.c.l.b16 %v609
      %v1043 = vunpack.c.l.b16 %v610
      %v1044 = vunpack.c.l.b16 %v611
      %v1045 = vunpack.c.l.b16 %v612
      %v1046 = vunpack.c.l.b16 %v613
      %v1047 = vunpack.c.l.b16 %v614
      %v1048 = vunpack.c.l.b16 %v615
      %v1049 = vunpack.c.l.b16 %v616
      %v1050 = vunpack.c.l.b16 %v617
      %v1051 = vpack.c.b16 %v1020, %v1019
      %v1052 = vpack.c.b16 %v1022, %v1021
      %v1053 = vpack.c.b16 %v1024, %v1023
      %v1054 = vpack.c.b16 %v1026, %v1025
      %v1055 = vpack.c.b16 %v1028, %v1027
      %v1056 = vpack.c.b16 %v1030, %v1029
      %v1057 = vpack.c.b16 %v1032, %v1031
      %v1058 = vpack.c.b16 %v1034, %v1033
      %v1059 = vpack.c.b16 %v1036, %v1035
      %v1060 = vpack.c.b16 %v1038, %v1037
      %v1061 = vpack.c.b16 %v1040, %v1039
      %v1062 = vpack.c.b16 %v1042, %v1041
      %v1063 = vpack.c.b16 %v1044, %v1043
      %v1064 = vpack.c.b16 %v1046, %v1045
      %v1065 = vpack.c.b16 %v1048, %v1047
      %v1066 = vpack.c.b16 %v1050, %v1049
      %1083 = vmatprep.subr.bf16.mxu0 0
      %1084 = vmatpush1.bf16.msra.mxu0 %v1051
      %1085 = vmatprep.subr.bf16.mxu0 0
      %1086 = vmatpush1.bf16.msra.mxu0 %v1052
      %1087 = vmatprep.subr.bf16.mxu0 0
      %1088 = vmatpush1.bf16.msra.mxu0 %v1053
      %1089 = vmatprep.subr.bf16.mxu0 0
      %1090 = vmatpush1.bf16.msra.mxu0 %v1054
      %1091 = vmatprep.subr.bf16.mxu0 0
      %1092 = vmatpush1.bf16.msra.mxu0 %v1055
      %1093 = vmatprep.subr.bf16.mxu0 0
      %1094 = vmatpush1.bf16.msra.mxu0 %v1056
      %1095 = vmatprep.subr.bf16.mxu0 0
      %1096 = vmatpush1.bf16.msra.mxu0 %v1057
      %1097 = vmatprep.subr.bf16.mxu0 0
      %1098 = vmatpush1.bf16.msra.mxu0 %v1058
      %1099 = vmatprep.subr.bf16.mxu0 0
      %1100 = vmatpush1.bf16.msra.mxu0 %v1059
      %1101 = vmatprep.subr.bf16.mxu0 0
      %1102 = vmatpush1.bf16.msra.mxu0 %v1060
      %1103 = vmatprep.subr.bf16.mxu0 0
      %1104 = vmatpush1.bf16.msra.mxu0 %v1061
      %1105 = vmatprep.subr.bf16.mxu0 0
      %1106 = vmatpush1.bf16.msra.mxu0 %v1062
      %1107 = vmatprep.subr.bf16.mxu0 0
      %1108 = vmatpush1.bf16.msra.mxu0 %v1063
      %1109 = vmatprep.subr.bf16.mxu0 0
      %1110 = vmatpush1.bf16.msra.mxu0 %v1064
      %1111 = vmatprep.subr.bf16.mxu0 0
      %1112 = vmatpush1.bf16.msra.mxu0 %v1065
      %1113 = vmatprep.subr.bf16.mxu0 0
      %1114 = vmatpush1.bf16.msra.mxu0 %v1066
      %1115 = vmatprep.mubr.bf16.mxu0 %v956
      %1116 = vmatmul.mubr.bf16.gmra.mrb[0].mxu0 %v955
      %v1117 = vpop.f32.mrb[0].mxu0
      %v1118 = vadd.f32 %v845, %v1117
      %v1119 = vpop.f32.mrb[0].mxu0
      %v1120 = vpop.f32.mrb[0].mxu0
      %v1121 = vadd.f32 %v848, %v1120
      %v1122 = vpop.f32.mrb[0].mxu0
      %1123 = vmatprep.mubr.bf16.mxu0 %v958
      %1124 = vmatmul.mubr.bf16.gmra.mrb[0].mxu0 %v957
      %v1125 = vpop.f32.mrb[0].mxu0
      %v1126 = vadd.f32 %v853, %v1125
      %v1127 = vpop.f32.mrb[0].mxu0
      %v1128 = vpop.f32.mrb[0].mxu0
      %v1129 = vadd.f32 %v856, %v1128
      %v1130 = vpop.f32.mrb[0].mxu0
      %1131 = vmatprep.mubr.bf16.mxu0 %v960
      %1132 = vmatmul.mubr.bf16.gmra.mrb[0].mxu0 %v959
      %v1133 = vpop.f32.mrb[0].mxu0
      %v1134 = vadd.f32 %v861, %v1133
      %v1135 = vpop.f32.mrb[0].mxu0
      %v1136 = vpop.f32.mrb[0].mxu0
      %v1137 = vadd.f32 %v864, %v1136
      %v1138 = vpop.f32.mrb[0].mxu0
      %1139 = vmatprep.mubr.bf16.mxu0 %v962
      %1140 = vmatmul.mubr.bf16.gmra.mrb[0].mxu0 %v961
      %v1141 = vpop.f32.mrb[0].mxu0
      %v1142 = vadd.f32 %v869, %v1141
      %v1143 = vpop.f32.mrb[0].mxu0
      %v1144 = vpop.f32.mrb[0].mxu0
      %v1145 = vadd.f32 %v872, %v1144
      %v1146 = vpop.f32.mrb[0].mxu0
      %1147 = vmatprep.mubr.bf16.mxu0 %v964
      %1148 = vmatmul.mubr.bf16.gmra.mrb[0].mxu0 %v963
      %v1149 = vpop.f32.mrb[0].mxu0
      %v1150 = vadd.f32 %v877, %v1149
      %v1151 = vpop.f32.mrb[0].mxu0
      %v1152 = vpop.f32.mrb[0].mxu0
      %v1153 = vadd.f32 %v880, %v1152
      %v1154 = vpop.f32.mrb[0].mxu0
      %1155 = vmatprep.mubr.bf16.mxu0 %v966
      %1156 = vmatmul.mubr.bf16.gmra.mrb[0].mxu0 %v965
      %v1157 = vpop.f32.mrb[0].mxu0
      %v1158 = vadd.f32 %v885, %v1157
      %v1159 = vpop.f32.mrb[0].mxu0
      %v1160 = vpop.f32.mrb[0].mxu0
      %v1161 = vadd.f32 %v888, %v1160
      %v1162 = vpop.f32.mrb[0].mxu0
      %1163 = vmatprep.mubr.bf16.mxu0 %v968
      %1164 = vmatmul.mubr.bf16.gmra.mrb[0].mxu0 %v967
      %v1165 = vpop.f32.mrb[0].mxu0
      %v1166 = vadd.f32 %v893, %v1165
      %v1167 = vpop.f32.mrb[0].mxu0
      %v1168 = vpop.f32.mrb[0].mxu0
      %v1169 = vadd.f32 %v896, %v1168
      %v1170 = vpop.f32.mrb[0].mxu0
      %1171 = vmatprep.mubr.bf16.mxu0 %v970
      %1172 = vmatmul.mubr.bf16.gmra.mrb[0].mxu0 %v969
      %v1173 = vpop.f32.mrb[0].mxu0
      %v1174 = vadd.f32 %v901, %v1173
      %v1175 = vpop.f32.mrb[0].mxu0
      %v1176 = vpop.f32.mrb[0].mxu0
      %v1177 = vadd.f32 %v904, %v1176
      %v1178 = vpop.f32.mrb[0].mxu0
      %1179 = vdwg.mxu0
      %s1180 = scalar_lea.vmem %s315, 16
      %v1181 = vld [vmem:[%s1180] sm:$0xff]
      %v1182 = vld [vmem:[%s1180 + $0x10] sm:$0xff]
      %v1183 = vld [vmem:[%s1180 + $0x20] sm:$0xff]
      %v1184 = vld [vmem:[%s1180 + $0x30] sm:$0xff]
      %v1185 = vld [vmem:[%s1180 + $0x40] sm:$0xff]
      %v1186 = vld [vmem:[%s1180 + $0x50] sm:$0xff]
      %v1187 = vld [vmem:[%s1180 + $0x60] sm:$0xff]
      %v1188 = vld [vmem:[%s1180 + $0x70] sm:$0xff]
      %v1189 = vld [vmem:[%s1180 + $0x80] sm:$0xff]
      %v1190 = vld [vmem:[%s1180 + $0x90] sm:$0xff]
      %v1191 = vld [vmem:[%s1180 + $0xa0] sm:$0xff]
      %v1192 = vld [vmem:[%s1180 + $0xb0] sm:$0xff]
      %v1193 = vld [vmem:[%s1180 + $0xc0] sm:$0xff]
      %v1194 = vld [vmem:[%s1180 + $0xd0] sm:$0xff]
      %v1195 = vld [vmem:[%s1180 + $0xe0] sm:$0xff]
      %v1196 = vld [vmem:[%s1180 + $0xf0] sm:$0xff]
      %v1197 = vld [vmem:[%s1180 + $0x8] sm:$0x11]
      %v1198 = vld [vmem:[%s1180 + $0x18] sm:$0x11]
      %v1199 = vld [vmem:[%s1180 + $0x28] sm:$0x11]
      %v1200 = vld [vmem:[%s1180 + $0x38] sm:$0x11]
      %v1201 = vld [vmem:[%s1180 + $0x48] sm:$0x11]
      %v1202 = vld [vmem:[%s1180 + $0x58] sm:$0x11]
      %v1203 = vld [vmem:[%s1180 + $0x68] sm:$0x11]
      %v1204 = vld [vmem:[%s1180 + $0x78] sm:$0x11]
      %v1205 = vld [vmem:[%s1180 + $0x88] sm:$0x11]
      %v1206 = vld [vmem:[%s1180 + $0x98] sm:$0x11]
      %v1207 = vld [vmem:[%s1180 + $0xa8] sm:$0x11]
      %v1208 = vld [vmem:[%s1180 + $0xb8] sm:$0x11]
      %v1209 = vld [vmem:[%s1180 + $0xc8] sm:$0x11]
      %v1210 = vld [vmem:[%s1180 + $0xd8] sm:$0x11]
      %v1211 = vld [vmem:[%s1180 + $0xe8] sm:$0x11]
      %v1212 = vld [vmem:[%s1180 + $0xf8] sm:$0x11]
      %v1214 = vshrl.u32 %v1181, 16
      %v1216 = vrot.slane %v1214, 4
      %v1217 = vshll.u32 %v1181, 16
      %v1219 = vrot.slane %v1217, 5
      %v1220 = vor.u32 %v1216, %v1219
      %v1221 = vrot.slane %v1220, 4
      %v1223 = vshll.u32 %v1197, 16
      %v1225 = vrot.slane %v1223, 5
      %v1226 = vsel %vm361, %v1221, %v1225
      %v1228 = vshrl.u32 %v1182, 16
      %v1230 = vrot.slane %v1228, 4
      %v1231 = vshll.u32 %v1182, 16
      %v1233 = vrot.slane %v1231, 5
      %v1234 = vor.u32 %v1230, %v1233
      %v1235 = vrot.slane %v1234, 4
      %v1237 = vshll.u32 %v1198, 16
      %v1239 = vrot.slane %v1237, 5
      %v1240 = vsel %vm361, %v1235, %v1239
      %v1242 = vshrl.u32 %v1183, 16
      %v1244 = vrot.slane %v1242, 4
      %v1245 = vshll.u32 %v1183, 16
      %v1247 = vrot.slane %v1245, 5
      %v1248 = vor.u32 %v1244, %v1247
      %v1249 = vrot.slane %v1248, 4
      %v1251 = vshll.u32 %v1199, 16
      %v1253 = vrot.slane %v1251, 5
      %v1254 = vsel %vm361, %v1249, %v1253
      %v1256 = vshrl.u32 %v1184, 16
      %v1258 = vrot.slane %v1256, 4
      %v1259 = vshll.u32 %v1184, 16
      %v1261 = vrot.slane %v1259, 5
      %v1262 = vor.u32 %v1258, %v1261
      %v1263 = vrot.slane %v1262, 4
      %v1265 = vshll.u32 %v1200, 16
      %v1267 = vrot.slane %v1265, 5
      %v1268 = vsel %vm361, %v1263, %v1267
      %v1270 = vshrl.u32 %v1185, 16
      %v1272 = vrot.slane %v1270, 4
      %v1273 = vshll.u32 %v1185, 16
      %v1275 = vrot.slane %v1273, 5
      %v1276 = vor.u32 %v1272, %v1275
      %v1277 = vrot.slane %v1276, 4
      %v1279 = vshll.u32 %v1201, 16
      %v1281 = vrot.slane %v1279, 5
      %v1282 = vsel %vm361, %v1277, %v1281
      %v1284 = vshrl.u32 %v1186, 16
      %v1286 = vrot.slane %v1284, 4
      %v1287 = vshll.u32 %v1186, 16
      %v1289 = vrot.slane %v1287, 5
      %v1290 = vor.u32 %v1286, %v1289
      %v1291 = vrot.slane %v1290, 4
      %v1293 = vshll.u32 %v1202, 16
      %v1295 = vrot.slane %v1293, 5
      %v1296 = vsel %vm361, %v1291, %v1295
      %v1298 = vshrl.u32 %v1187, 16
      %v1300 = vrot.slane %v1298, 4
      %v1301 = vshll.u32 %v1187, 16
      %v1303 = vrot.slane %v1301, 5
      %v1304 = vor.u32 %v1300, %v1303
      %v1305 = vrot.slane %v1304, 4
      %v1307 = vshll.u32 %v1203, 16
      %v1309 = vrot.slane %v1307, 5
      %v1310 = vsel %vm361, %v1305, %v1309
      %v1312 = vshrl.u32 %v1188, 16
      %v1314 = vrot.slane %v1312, 4
      %v1315 = vshll.u32 %v1188, 16
      %v1317 = vrot.slane %v1315, 5
      %v1318 = vor.u32 %v1314, %v1317
      %v1319 = vrot.slane %v1318, 4
      %v1321 = vshll.u32 %v1204, 16
      %v1323 = vrot.slane %v1321, 5
      %v1324 = vsel %vm361, %v1319, %v1323
      %v1326 = vshrl.u32 %v1189, 16
      %v1328 = vrot.slane %v1326, 4
      %v1329 = vshll.u32 %v1189, 16
      %v1331 = vrot.slane %v1329, 5
      %v1332 = vor.u32 %v1328, %v1331
      %v1333 = vrot.slane %v1332, 4
      %v1335 = vshll.u32 %v1205, 16
      %v1337 = vrot.slane %v1335, 5
      %v1338 = vsel %vm361, %v1333, %v1337
      %v1340 = vshrl.u32 %v1190, 16
      %v1342 = vrot.slane %v1340, 4
      %v1343 = vshll.u32 %v1190, 16
      %v1345 = vrot.slane %v1343, 5
      %v1346 = vor.u32 %v1342, %v1345
      %v1347 = vrot.slane %v1346, 4
      %v1349 = vshll.u32 %v1206, 16
      %v1351 = vrot.slane %v1349, 5
      %v1352 = vsel %vm361, %v1347, %v1351
      %v1354 = vshrl.u32 %v1191, 16
      %v1356 = vrot.slane %v1354, 4
      %v1357 = vshll.u32 %v1191, 16
      %v1359 = vrot.slane %v1357, 5
      %v1360 = vor.u32 %v1356, %v1359
      %v1361 = vrot.slane %v1360, 4
      %v1363 = vshll.u32 %v1207, 16
      %v1365 = vrot.slane %v1363, 5
      %v1366 = vsel %vm361, %v1361, %v1365
      %v1368 = vshrl.u32 %v1192, 16
      %v1370 = vrot.slane %v1368, 4
      %v1371 = vshll.u32 %v1192, 16
      %v1373 = vrot.slane %v1371, 5
      %v1374 = vor.u32 %v1370, %v1373
      %v1375 = vrot.slane %v1374, 4
      %v1377 = vshll.u32 %v1208, 16
      %v1379 = vrot.slane %v1377, 5
      %v1380 = vsel %vm361, %v1375, %v1379
      %v1382 = vshrl.u32 %v1193, 16
      %v1384 = vrot.slane %v1382, 4
      %v1385 = vshll.u32 %v1193, 16
      %v1387 = vrot.slane %v1385, 5
      %v1388 = vor.u32 %v1384, %v1387
      %v1389 = vrot.slane %v1388, 4
      %v1391 = vshll.u32 %v1209, 16
      %v1393 = vrot.slane %v1391, 5
      %v1394 = vsel %vm361, %v1389, %v1393
      %v1396 = vshrl.u32 %v1194, 16
      %v1398 = vrot.slane %v1396, 4
      %v1399 = vshll.u32 %v1194, 16
      %v1401 = vrot.slane %v1399, 5
      %v1402 = vor.u32 %v1398, %v1401
      %v1403 = vrot.slane %v1402, 4
      %v1405 = vshll.u32 %v1210, 16
      %v1407 = vrot.slane %v1405, 5
      %v1408 = vsel %vm361, %v1403, %v1407
      %v1410 = vshrl.u32 %v1195, 16
      %v1412 = vrot.slane %v1410, 4
      %v1413 = vshll.u32 %v1195, 16
      %v1415 = vrot.slane %v1413, 5
      %v1416 = vor.u32 %v1412, %v1415
      %v1417 = vrot.slane %v1416, 4
      %v1419 = vshll.u32 %v1211, 16
      %v1421 = vrot.slane %v1419, 5
      %v1422 = vsel %vm361, %v1417, %v1421
      %v1424 = vshrl.u32 %v1196, 16
      %v1426 = vrot.slane %v1424, 4
      %v1427 = vshll.u32 %v1196, 16
      %v1429 = vrot.slane %v1427, 5
      %v1430 = vor.u32 %v1426, %v1429
      %v1431 = vrot.slane %v1430, 4
      %v1433 = vshll.u32 %v1212, 16
      %v1435 = vrot.slane %v1433, 5
      %v1436 = vsel %vm361, %v1431, %v1435
      %s1437 = scalar_lea.vmem %s2, 128
      %v1438 = vld [vmem:[%s1437] sm:$0xf]
      %v1439 = vld [vmem:[%s1437 + $0x4] sm:$0xf]
      %v1440 = vld [vmem:[%s1437 + $0x8] sm:$0xf]
      %v1441 = vld [vmem:[%s1437 + $0xc] sm:$0xf]
      %v1442 = vld [vmem:[%s1437 + $0x10] sm:$0xf]
      %v1443 = vld [vmem:[%s1437 + $0x14] sm:$0xf]
      %v1444 = vld [vmem:[%s1437 + $0x18] sm:$0xf]
      %v1445 = vld [vmem:[%s1437 + $0x1c] sm:$0xf]
      %v1446 = vld [vmem:[%s1437 + $0x20] sm:$0xf]
      %v1447 = vld [vmem:[%s1437 + $0x24] sm:$0xf]
      %v1448 = vld [vmem:[%s1437 + $0x28] sm:$0xf]
      %v1449 = vld [vmem:[%s1437 + $0x2c] sm:$0xf]
      %v1450 = vld [vmem:[%s1437 + $0x30] sm:$0xf]
      %v1451 = vld [vmem:[%s1437 + $0x34] sm:$0xf]
      %v1452 = vld [vmem:[%s1437 + $0x38] sm:$0xf]
      %v1453 = vld [vmem:[%s1437 + $0x3c] sm:$0xf]
      %v1454 = vld [vmem:[%s1437 + $0x40] sm:$0xf]
      %v1455 = vld [vmem:[%s1437 + $0x44] sm:$0xf]
      %v1456 = vld [vmem:[%s1437 + $0x48] sm:$0xf]
      %v1457 = vld [vmem:[%s1437 + $0x4c] sm:$0xf]
      %v1458 = vld [vmem:[%s1437 + $0x50] sm:$0xf]
      %v1459 = vld [vmem:[%s1437 + $0x54] sm:$0xf]
      %v1460 = vld [vmem:[%s1437 + $0x58] sm:$0xf]
      %v1461 = vld [vmem:[%s1437 + $0x5c] sm:$0xf]
      %v1462 = vld [vmem:[%s1437 + $0x60] sm:$0xf]
      %v1463 = vld [vmem:[%s1437 + $0x64] sm:$0xf]
      %v1464 = vld [vmem:[%s1437 + $0x68] sm:$0xf]
      %v1465 = vld [vmem:[%s1437 + $0x6c] sm:$0xf]
      %v1466 = vld [vmem:[%s1437 + $0x70] sm:$0xf]
      %v1467 = vld [vmem:[%s1437 + $0x74] sm:$0xf]
      %v1468 = vld [vmem:[%s1437 + $0x78] sm:$0xf]
      %v1469 = vld [vmem:[%s1437 + $0x7c] sm:$0xf]
      %v1486 = vunpack.c.l.b16 %v1181
      %v1487 = vunpack.c.h.b16 %v1181
      %v1488 = vunpack.c.l.b16 %v1182
      %v1489 = vunpack.c.h.b16 %v1182
      %v1490 = vunpack.c.l.b16 %v1183
      %v1491 = vunpack.c.h.b16 %v1183
      %v1492 = vunpack.c.l.b16 %v1184
      %v1493 = vunpack.c.h.b16 %v1184
      %v1494 = vunpack.c.l.b16 %v1185
      %v1495 = vunpack.c.h.b16 %v1185
      %v1496 = vunpack.c.l.b16 %v1186
      %v1497 = vunpack.c.h.b16 %v1186
      %v1498 = vunpack.c.l.b16 %v1187
      %v1499 = vunpack.c.h.b16 %v1187
      %v1500 = vunpack.c.l.b16 %v1188
      %v1501 = vunpack.c.h.b16 %v1188
      %v1502 = vunpack.c.l.b16 %v1189
      %v1503 = vunpack.c.h.b16 %v1189
      %v1504 = vunpack.c.l.b16 %v1190
      %v1505 = vunpack.c.h.b16 %v1190
      %v1506 = vunpack.c.l.b16 %v1191
      %v1507 = vunpack.c.h.b16 %v1191
      %v1508 = vunpack.c.l.b16 %v1192
      %v1509 = vunpack.c.h.b16 %v1192
      %v1510 = vunpack.c.l.b16 %v1193
      %v1511 = vunpack.c.h.b16 %v1193
      %v1512 = vunpack.c.l.b16 %v1194
      %v1513 = vunpack.c.h.b16 %v1194
      %v1514 = vunpack.c.l.b16 %v1195
      %v1515 = vunpack.c.h.b16 %v1195
      %v1516 = vunpack.c.l.b16 %v1196
      %v1517 = vunpack.c.h.b16 %v1196
      %v1518 = vpack.c.b16 %v1488, %v1486
      %v1519 = vpack.c.b16 %v1489, %v1487
      %v1520 = vpack.c.b16 %v1492, %v1490
      %v1521 = vpack.c.b16 %v1493, %v1491
      %v1522 = vpack.c.b16 %v1496, %v1494
      %v1523 = vpack.c.b16 %v1497, %v1495
      %v1524 = vpack.c.b16 %v1500, %v1498
      %v1525 = vpack.c.b16 %v1501, %v1499
      %v1526 = vpack.c.b16 %v1504, %v1502
      %v1527 = vpack.c.b16 %v1505, %v1503
      %v1528 = vpack.c.b16 %v1508, %v1506
      %v1529 = vpack.c.b16 %v1509, %v1507
      %v1530 = vpack.c.b16 %v1512, %v1510
      %v1531 = vpack.c.b16 %v1513, %v1511
      %v1532 = vpack.c.b16 %v1516, %v1514
      %v1533 = vpack.c.b16 %v1517, %v1515
      %v1582 = vunpack.c.l.b16 %v1438
      %v1583 = vunpack.c.l.b16 %v1439
      %v1584 = vunpack.c.l.b16 %v1440
      %v1585 = vunpack.c.l.b16 %v1441
      %v1586 = vunpack.c.l.b16 %v1442
      %v1587 = vunpack.c.l.b16 %v1443
      %v1588 = vunpack.c.l.b16 %v1444
      %v1589 = vunpack.c.l.b16 %v1445
      %v1590 = vunpack.c.l.b16 %v1446
      %v1591 = vunpack.c.l.b16 %v1447
      %v1592 = vunpack.c.l.b16 %v1448
      %v1593 = vunpack.c.l.b16 %v1449
      %v1594 = vunpack.c.l.b16 %v1450
      %v1595 = vunpack.c.l.b16 %v1451
      %v1596 = vunpack.c.l.b16 %v1452
      %v1597 = vunpack.c.l.b16 %v1453
      %v1598 = vunpack.c.l.b16 %v1454
      %v1599 = vunpack.c.l.b16 %v1455
      %v1600 = vunpack.c.l.b16 %v1456
      %v1601 = vunpack.c.l.b16 %v1457
      %v1602 = vunpack.c.l.b16 %v1458
      %v1603 = vunpack.c.l.b16 %v1459
      %v1604 = vunpack.c.l.b16 %v1460
      %v1605 = vunpack.c.l.b16 %v1461
      %v1606 = vunpack.c.l.b16 %v1462
      %v1607 = vunpack.c.l.b16 %v1463
      %v1608 = vunpack.c.l.b16 %v1464
      %v1609 = vunpack.c.l.b16 %v1465
      %v1610 = vunpack.c.l.b16 %v1466
      %v1611 = vunpack.c.l.b16 %v1467
      %v1612 = vunpack.c.l.b16 %v1468
      %v1613 = vunpack.c.l.b16 %v1469
      %v1614 = vpack.c.b16 %v1583, %v1582
      %v1615 = vpack.c.b16 %v1585, %v1584
      %v1616 = vpack.c.b16 %v1587, %v1586
      %v1617 = vpack.c.b16 %v1589, %v1588
      %v1618 = vpack.c.b16 %v1591, %v1590
      %v1619 = vpack.c.b16 %v1593, %v1592
      %v1620 = vpack.c.b16 %v1595, %v1594
      %v1621 = vpack.c.b16 %v1597, %v1596
      %v1622 = vpack.c.b16 %v1599, %v1598
      %v1623 = vpack.c.b16 %v1601, %v1600
      %v1624 = vpack.c.b16 %v1603, %v1602
      %v1625 = vpack.c.b16 %v1605, %v1604
      %v1626 = vpack.c.b16 %v1607, %v1606
      %v1627 = vpack.c.b16 %v1609, %v1608
      %v1628 = vpack.c.b16 %v1611, %v1610
      %v1629 = vpack.c.b16 %v1613, %v1612
      %1646 = vmatprep.subr.bf16.mxu0 0
      %1647 = vmatpush1.bf16.msra.mxu0 %v1614
      %1648 = vmatprep.subr.bf16.mxu0 0
      %1649 = vmatpush1.bf16.msra.mxu0 %v1615
      %1650 = vmatprep.subr.bf16.mxu0 0
      %1651 = vmatpush1.bf16.msra.mxu0 %v1616
      %1652 = vmatprep.subr.bf16.mxu0 0
      %1653 = vmatpush1.bf16.msra.mxu0 %v1617
      %1654 = vmatprep.subr.bf16.mxu0 0
      %1655 = vmatpush1.bf16.msra.mxu0 %v1618
      %1656 = vmatprep.subr.bf16.mxu0 0
      %1657 = vmatpush1.bf16.msra.mxu0 %v1619
      %1658 = vmatprep.subr.bf16.mxu0 0
      %1659 = vmatpush1.bf16.msra.mxu0 %v1620
      %1660 = vmatprep.subr.bf16.mxu0 0
      %1661 = vmatpush1.bf16.msra.mxu0 %v1621
      %1662 = vmatprep.subr.bf16.mxu0 0
      %1663 = vmatpush1.bf16.msra.mxu0 %v1622
      %1664 = vmatprep.subr.bf16.mxu0 0
      %1665 = vmatpush1.bf16.msra.mxu0 %v1623
      %1666 = vmatprep.subr.bf16.mxu0 0
      %1667 = vmatpush1.bf16.msra.mxu0 %v1624
      %1668 = vmatprep.subr.bf16.mxu0 0
      %1669 = vmatpush1.bf16.msra.mxu0 %v1625
      %1670 = vmatprep.subr.bf16.mxu0 0
      %1671 = vmatpush1.bf16.msra.mxu0 %v1626
      %1672 = vmatprep.subr.bf16.mxu0 0
      %1673 = vmatpush1.bf16.msra.mxu0 %v1627
      %1674 = vmatprep.subr.bf16.mxu0 0
      %1675 = vmatpush1.bf16.msra.mxu0 %v1628
      %1676 = vmatprep.subr.bf16.mxu0 0
      %1677 = vmatpush1.bf16.msra.mxu0 %v1629
      %1678 = vmatprep.mubr.bf16.mxu0 %v1519
      %1679 = vmatmul.mubr.bf16.gmra.mrb[0].mxu0 %v1518
      %v1680 = vpop.f32.mrb[0].mxu0
      %v1681 = vadd.f32 0.0, %v1680
      %v1682 = vpop.f32.mrb[0].mxu0
      %v1683 = vpop.f32.mrb[0].mxu0
      %v1684 = vadd.f32 0.0, %v1683
      %v1685 = vpop.f32.mrb[0].mxu0
      %1686 = vmatprep.mubr.bf16.mxu0 %v1521
      %1687 = vmatmul.mubr.bf16.gmra.mrb[0].mxu0 %v1520
      %v1688 = vpop.f32.mrb[0].mxu0
      %v1689 = vadd.f32 0.0, %v1688
      %v1690 = vpop.f32.mrb[0].mxu0
      %v1691 = vpop.f32.mrb[0].mxu0
      %v1692 = vadd.f32 0.0, %v1691
      %v1693 = vpop.f32.mrb[0].mxu0
      %1694 = vmatprep.mubr.bf16.mxu0 %v1523
      %1695 = vmatmul.mubr.bf16.gmra.mrb[0].mxu0 %v1522
      %v1696 = vpop.f32.mrb[0].mxu0
      %v1697 = vadd.f32 0.0, %v1696
      %v1698 = vpop.f32.mrb[0].mxu0
      %v1699 = vpop.f32.mrb[0].mxu0
      %v1700 = vadd.f32 0.0, %v1699
      %v1701 = vpop.f32.mrb[0].mxu0
      %1702 = vmatprep.mubr.bf16.mxu0 %v1525
      %1703 = vmatmul.mubr.bf16.gmra.mrb[0].mxu0 %v1524
      %v1704 = vpop.f32.mrb[0].mxu0
      %v1705 = vadd.f32 0.0, %v1704
      %v1706 = vpop.f32.mrb[0].mxu0
      %v1707 = vpop.f32.mrb[0].mxu0
      %v1708 = vadd.f32 0.0, %v1707
      %v1709 = vpop.f32.mrb[0].mxu0
      %1710 = vmatprep.mubr.bf16.mxu0 %v1527
      %1711 = vmatmul.mubr.bf16.gmra.mrb[0].mxu0 %v1526
      %v1712 = vpop.f32.mrb[0].mxu0
      %v1713 = vadd.f32 0.0, %v1712
      %v1714 = vpop.f32.mrb[0].mxu0
      %v1715 = vpop.f32.mrb[0].mxu0
      %v1716 = vadd.f32 0.0, %v1715
      %v1717 = vpop.f32.mrb[0].mxu0
      %1718 = vmatprep.mubr.bf16.mxu0 %v1529
      %1719 = vmatmul.mubr.bf16.gmra.mrb[0].mxu0 %v1528
      %v1720 = vpop.f32.mrb[0].mxu0
      %v1721 = vadd.f32 0.0, %v1720
      %v1722 = vpop.f32.mrb[0].mxu0
      %v1723 = vpop.f32.mrb[0].mxu0
      %v1724 = vadd.f32 0.0, %v1723
      %v1725 = vpop.f32.mrb[0].mxu0
      %1726 = vmatprep.mubr.bf16.mxu0 %v1531
      %1727 = vmatmul.mubr.bf16.gmra.mrb[0].mxu0 %v1530
      %v1728 = vpop.f32.mrb[0].mxu0
      %v1729 = vadd.f32 0.0, %v1728
      %v1730 = vpop.f32.mrb[0].mxu0
      %v1731 = vpop.f32.mrb[0].mxu0
      %v1732 = vadd.f32 0.0, %v1731
      %v1733 = vpop.f32.mrb[0].mxu0
      %1734 = vmatprep.mubr.bf16.mxu0 %v1533
      %1735 = vmatmul.mubr.bf16.gmra.mrb[0].mxu0 %v1532
      %v1736 = vpop.f32.mrb[0].mxu0
      %v1737 = vadd.f32 0.0, %v1736
      %v1738 = vpop.f32.mrb[0].mxu0
      %v1739 = vpop.f32.mrb[0].mxu0
      %v1740 = vadd.f32 0.0, %v1739
      %v1741 = vpop.f32.mrb[0].mxu0
      %1742 = vdwg.mxu0
      %v1743 = vadd.f32 %v1118, %v1681
      %v1744 = vadd.f32 %v1121, %v1684
      %v1745 = vadd.f32 %v1126, %v1689
      %v1746 = vadd.f32 %v1129, %v1692
      %v1747 = vadd.f32 %v1134, %v1697
      %v1748 = vadd.f32 %v1137, %v1700
      %v1749 = vadd.f32 %v1142, %v1705
      %v1750 = vadd.f32 %v1145, %v1708
      %v1751 = vadd.f32 %v1150, %v1713
      %v1752 = vadd.f32 %v1153, %v1716
      %v1753 = vadd.f32 %v1158, %v1721
      %v1754 = vadd.f32 %v1161, %v1724
      %v1755 = vadd.f32 %v1166, %v1729
      %v1756 = vadd.f32 %v1169, %v1732
      %v1757 = vadd.f32 %v1174, %v1737
      %v1758 = vadd.f32 %v1177, %v1740
      %s1759 = scalar_lea.vmem %s3, 128
      %v1760 = vld [vmem:[%s1759] sm:$0xf]
      %v1761 = vld [vmem:[%s1759 + $0x4] sm:$0xf]
      %v1762 = vld [vmem:[%s1759 + $0x8] sm:$0xf]
      %v1763 = vld [vmem:[%s1759 + $0xc] sm:$0xf]
      %v1764 = vld [vmem:[%s1759 + $0x10] sm:$0xf]
      %v1765 = vld [vmem:[%s1759 + $0x14] sm:$0xf]
      %v1766 = vld [vmem:[%s1759 + $0x18] sm:$0xf]
      %v1767 = vld [vmem:[%s1759 + $0x1c] sm:$0xf]
      %v1768 = vld [vmem:[%s1759 + $0x20] sm:$0xf]
      %v1769 = vld [vmem:[%s1759 + $0x24] sm:$0xf]
      %v1770 = vld [vmem:[%s1759 + $0x28] sm:$0xf]
      %v1771 = vld [vmem:[%s1759 + $0x2c] sm:$0xf]
      %v1772 = vld [vmem:[%s1759 + $0x30] sm:$0xf]
      %v1773 = vld [vmem:[%s1759 + $0x34] sm:$0xf]
      %v1774 = vld [vmem:[%s1759 + $0x38] sm:$0xf]
      %v1775 = vld [vmem:[%s1759 + $0x3c] sm:$0xf]
      %v1776 = vld [vmem:[%s1759 + $0x40] sm:$0xf]
      %v1777 = vld [vmem:[%s1759 + $0x44] sm:$0xf]
      %v1778 = vld [vmem:[%s1759 + $0x48] sm:$0xf]
      %v1779 = vld [vmem:[%s1759 + $0x4c] sm:$0xf]
      %v1780 = vld [vmem:[%s1759 + $0x50] sm:$0xf]
      %v1781 = vld [vmem:[%s1759 + $0x54] sm:$0xf]
      %v1782 = vld [vmem:[%s1759 + $0x58] sm:$0xf]
      %v1783 = vld [vmem:[%s1759 + $0x5c] sm:$0xf]
      %v1784 = vld [vmem:[%s1759 + $0x60] sm:$0xf]
      %v1785 = vld [vmem:[%s1759 + $0x64] sm:$0xf]
      %v1786 = vld [vmem:[%s1759 + $0x68] sm:$0xf]
      %v1787 = vld [vmem:[%s1759 + $0x6c] sm:$0xf]
      %v1788 = vld [vmem:[%s1759 + $0x70] sm:$0xf]
      %v1789 = vld [vmem:[%s1759 + $0x74] sm:$0xf]
      %v1790 = vld [vmem:[%s1759 + $0x78] sm:$0xf]
      %v1791 = vld [vmem:[%s1759 + $0x7c] sm:$0xf]
      %v1792 = vunpack.c.l.b16 %v1226
      %v1793 = vunpack.c.h.b16 %v1226
      %v1794 = vunpack.c.l.b16 %v1240
      %v1795 = vunpack.c.h.b16 %v1240
      %v1796 = vunpack.c.l.b16 %v1254
      %v1797 = vunpack.c.h.b16 %v1254
      %v1798 = vunpack.c.l.b16 %v1268
      %v1799 = vunpack.c.h.b16 %v1268
      %v1800 = vunpack.c.l.b16 %v1282
      %v1801 = vunpack.c.h.b16 %v1282
      %v1802 = vunpack.c.l.b16 %v1296
      %v1803 = vunpack.c.h.b16 %v1296
      %v1804 = vunpack.c.l.b16 %v1310
      %v1805 = vunpack.c.h.b16 %v1310
      %v1806 = vunpack.c.l.b16 %v1324
      %v1807 = vunpack.c.h.b16 %v1324
      %v1808 = vunpack.c.l.b16 %v1338
      %v1809 = vunpack.c.h.b16 %v1338
      %v1810 = vunpack.c.l.b16 %v1352
      %v1811 = vunpack.c.h.b16 %v1352
      %v1812 = vunpack.c.l.b16 %v1366
      %v1813 = vunpack.c.h.b16 %v1366
      %v1814 = vunpack.c.l.b16 %v1380
      %v1815 = vunpack.c.h.b16 %v1380
      %v1816 = vunpack.c.l.b16 %v1394
      %v1817 = vunpack.c.h.b16 %v1394
      %v1818 = vunpack.c.l.b16 %v1408
      %v1819 = vunpack.c.h.b16 %v1408
      %v1820 = vunpack.c.l.b16 %v1422
      %v1821 = vunpack.c.h.b16 %v1422
      %v1822 = vunpack.c.l.b16 %v1436
      %v1823 = vunpack.c.h.b16 %v1436
      %v1824 = vpack.c.b16 %v1794, %v1792
      %v1825 = vpack.c.b16 %v1795, %v1793
      %v1826 = vpack.c.b16 %v1798, %v1796
      %v1827 = vpack.c.b16 %v1799, %v1797
      %v1828 = vpack.c.b16 %v1802, %v1800
      %v1829 = vpack.c.b16 %v1803, %v1801
      %v1830 = vpack.c.b16 %v1806, %v1804
      %v1831 = vpack.c.b16 %v1807, %v1805
      %v1832 = vpack.c.b16 %v1810, %v1808
      %v1833 = vpack.c.b16 %v1811, %v1809
      %v1834 = vpack.c.b16 %v1814, %v1812
      %v1835 = vpack.c.b16 %v1815, %v1813
      %v1836 = vpack.c.b16 %v1818, %v1816
      %v1837 = vpack.c.b16 %v1819, %v1817
      %v1838 = vpack.c.b16 %v1822, %v1820
      %v1839 = vpack.c.b16 %v1823, %v1821
      %v1888 = vunpack.c.l.b16 %v1760
      %v1889 = vunpack.c.l.b16 %v1761
      %v1890 = vunpack.c.l.b16 %v1762
      %v1891 = vunpack.c.l.b16 %v1763
      %v1892 = vunpack.c.l.b16 %v1764
      %v1893 = vunpack.c.l.b16 %v1765
      %v1894 = vunpack.c.l.b16 %v1766
      %v1895 = vunpack.c.l.b16 %v1767
      %v1896 = vunpack.c.l.b16 %v1768
      %v1897 = vunpack.c.l.b16 %v1769
      %v1898 = vunpack.c.l.b16 %v1770
      %v1899 = vunpack.c.l.b16 %v1771
      %v1900 = vunpack.c.l.b16 %v1772
      %v1901 = vunpack.c.l.b16 %v1773
      %v1902 = vunpack.c.l.b16 %v1774
      %v1903 = vunpack.c.l.b16 %v1775
      %v1904 = vunpack.c.l.b16 %v1776
      %v1905 = vunpack.c.l.b16 %v1777
      %v1906 = vunpack.c.l.b16 %v1778
      %v1907 = vunpack.c.l.b16 %v1779
      %v1908 = vunpack.c.l.b16 %v1780
      %v1909 = vunpack.c.l.b16 %v1781
      %v1910 = vunpack.c.l.b16 %v1782
      %v1911 = vunpack.c.l.b16 %v1783
      %v1912 = vunpack.c.l.b16 %v1784
      %v1913 = vunpack.c.l.b16 %v1785
      %v1914 = vunpack.c.l.b16 %v1786
      %v1915 = vunpack.c.l.b16 %v1787
      %v1916 = vunpack.c.l.b16 %v1788
      %v1917 = vunpack.c.l.b16 %v1789
      %v1918 = vunpack.c.l.b16 %v1790
      %v1919 = vunpack.c.l.b16 %v1791
      %v1920 = vpack.c.b16 %v1889, %v1888
      %v1921 = vpack.c.b16 %v1891, %v1890
      %v1922 = vpack.c.b16 %v1893, %v1892
      %v1923 = vpack.c.b16 %v1895, %v1894
      %v1924 = vpack.c.b16 %v1897, %v1896
      %v1925 = vpack.c.b16 %v1899, %v1898
      %v1926 = vpack.c.b16 %v1901, %v1900
      %v1927 = vpack.c.b16 %v1903, %v1902
      %v1928 = vpack.c.b16 %v1905, %v1904
      %v1929 = vpack.c.b16 %v1907, %v1906
      %v1930 = vpack.c.b16 %v1909, %v1908
      %v1931 = vpack.c.b16 %v1911, %v1910
      %v1932 = vpack.c.b16 %v1913, %v1912
      %v1933 = vpack.c.b16 %v1915, %v1914
      %v1934 = vpack.c.b16 %v1917, %v1916
      %v1935 = vpack.c.b16 %v1919, %v1918
      %1952 = vmatprep.subr.bf16.mxu0 0
      %1953 = vmatpush1.bf16.msra.mxu0 %v1920
      %1954 = vmatprep.subr.bf16.mxu0 0
      %1955 = vmatpush1.bf16.msra.mxu0 %v1921
      %1956 = vmatprep.subr.bf16.mxu0 0
      %1957 = vmatpush1.bf16.msra.mxu0 %v1922
      %1958 = vmatprep.subr.bf16.mxu0 0
      %1959 = vmatpush1.bf16.msra.mxu0 %v1923
      %1960 = vmatprep.subr.bf16.mxu0 0
      %1961 = vmatpush1.bf16.msra.mxu0 %v1924
      %1962 = vmatprep.subr.bf16.mxu0 0
      %1963 = vmatpush1.bf16.msra.mxu0 %v1925
      %1964 = vmatprep.subr.bf16.mxu0 0
      %1965 = vmatpush1.bf16.msra.mxu0 %v1926
      %1966 = vmatprep.subr.bf16.mxu0 0
      %1967 = vmatpush1.bf16.msra.mxu0 %v1927
      %1968 = vmatprep.subr.bf16.mxu0 0
      %1969 = vmatpush1.bf16.msra.mxu0 %v1928
      %1970 = vmatprep.subr.bf16.mxu0 0
      %1971 = vmatpush1.bf16.msra.mxu0 %v1929
      %1972 = vmatprep.subr.bf16.mxu0 0
      %1973 = vmatpush1.bf16.msra.mxu0 %v1930
      %1974 = vmatprep.subr.bf16.mxu0 0
      %1975 = vmatpush1.bf16.msra.mxu0 %v1931
      %1976 = vmatprep.subr.bf16.mxu0 0
      %1977 = vmatpush1.bf16.msra.mxu0 %v1932
      %1978 = vmatprep.subr.bf16.mxu0 0
      %1979 = vmatpush1.bf16.msra.mxu0 %v1933
      %1980 = vmatprep.subr.bf16.mxu0 0
      %1981 = vmatpush1.bf16.msra.mxu0 %v1934
      %1982 = vmatprep.subr.bf16.mxu0 0
      %1983 = vmatpush1.bf16.msra.mxu0 %v1935
      %1984 = vmatprep.mubr.bf16.mxu0 %v1825
      %1985 = vmatmul.mubr.bf16.gmra.mrb[0].mxu0 %v1824
      %v1986 = vpop.f32.mrb[0].mxu0
      %v1987 = vadd.f32 0.0, %v1986
      %v1988 = vpop.f32.mrb[0].mxu0
      %v1989 = vpop.f32.mrb[0].mxu0
      %v1990 = vadd.f32 0.0, %v1989
      %v1991 = vpop.f32.mrb[0].mxu0
      %1992 = vmatprep.mubr.bf16.mxu0 %v1827
      %1993 = vmatmul.mubr.bf16.gmra.mrb[0].mxu0 %v1826
      %v1994 = vpop.f32.mrb[0].mxu0
      %v1995 = vadd.f32 0.0, %v1994
      %v1996 = vpop.f32.mrb[0].mxu0
      %v1997 = vpop.f32.mrb[0].mxu0
      %v1998 = vadd.f32 0.0, %v1997
      %v1999 = vpop.f32.mrb[0].mxu0
      %2000 = vmatprep.mubr.bf16.mxu0 %v1829
      %2001 = vmatmul.mubr.bf16.gmra.mrb[0].mxu0 %v1828
      %v2002 = vpop.f32.mrb[0].mxu0
      %v2003 = vadd.f32 0.0, %v2002
      %v2004 = vpop.f32.mrb[0].mxu0
      %v2005 = vpop.f32.mrb[0].mxu0
      %v2006 = vadd.f32 0.0, %v2005
      %v2007 = vpop.f32.mrb[0].mxu0
      %2008 = vmatprep.mubr.bf16.mxu0 %v1831
      %2009 = vmatmul.mubr.bf16.gmra.mrb[0].mxu0 %v1830
      %v2010 = vpop.f32.mrb[0].mxu0
      %v2011 = vadd.f32 0.0, %v2010
      %v2012 = vpop.f32.mrb[0].mxu0
      %v2013 = vpop.f32.mrb[0].mxu0
      %v2014 = vadd.f32 0.0, %v2013
      %v2015 = vpop.f32.mrb[0].mxu0
      %2016 = vmatprep.mubr.bf16.mxu0 %v1833
      %2017 = vmatmul.mubr.bf16.gmra.mrb[0].mxu0 %v1832
      %v2018 = vpop.f32.mrb[0].mxu0
      %v2019 = vadd.f32 0.0, %v2018
      %v2020 = vpop.f32.mrb[0].mxu0
      %v2021 = vpop.f32.mrb[0].mxu0
      %v2022 = vadd.f32 0.0, %v2021
      %v2023 = vpop.f32.mrb[0].mxu0
      %2024 = vmatprep.mubr.bf16.mxu0 %v1835
      %2025 = vmatmul.mubr.bf16.gmra.mrb[0].mxu0 %v1834
      %v2026 = vpop.f32.mrb[0].mxu0
      %v2027 = vadd.f32 0.0, %v2026
      %v2028 = vpop.f32.mrb[0].mxu0
      %v2029 = vpop.f32.mrb[0].mxu0
      %v2030 = vadd.f32 0.0, %v2029
      %v2031 = vpop.f32.mrb[0].mxu0
      %2032 = vmatprep.mubr.bf16.mxu0 %v1837
      %2033 = vmatmul.mubr.bf16.gmra.mrb[0].mxu0 %v1836
      %v2034 = vpop.f32.mrb[0].mxu0
      %v2035 = vadd.f32 0.0, %v2034
      %v2036 = vpop.f32.mrb[0].mxu0
      %v2037 = vpop.f32.mrb[0].mxu0
      %v2038 = vadd.f32 0.0, %v2037
      %v2039 = vpop.f32.mrb[0].mxu0
      %2040 = vmatprep.mubr.bf16.mxu0 %v1839
      %2041 = vmatmul.mubr.bf16.gmra.mrb[0].mxu0 %v1838
      %v2042 = vpop.f32.mrb[0].mxu0
      %v2043 = vadd.f32 0.0, %v2042
      %v2044 = vpop.f32.mrb[0].mxu0
      %v2045 = vpop.f32.mrb[0].mxu0
      %v2046 = vadd.f32 0.0, %v2045
      %v2047 = vpop.f32.mrb[0].mxu0
      %2048 = vdwg.mxu0
      %v2049 = vadd.f32 %v1743, %v1987
      %v2050 = vadd.f32 %v1744, %v1990
      %v2051 = vadd.f32 %v1745, %v1995
      %v2052 = vadd.f32 %v1746, %v1998
      %v2053 = vadd.f32 %v1747, %v2003
      %v2054 = vadd.f32 %v1748, %v2006
      %v2055 = vadd.f32 %v1749, %v2011
      %v2056 = vadd.f32 %v1750, %v2014
      %v2057 = vadd.f32 %v1751, %v2019
      %v2058 = vadd.f32 %v1752, %v2022
      %v2059 = vadd.f32 %v1753, %v2027
      %v2060 = vadd.f32 %v1754, %v2030
      %v2061 = vadd.f32 %v1755, %v2035
      %v2062 = vadd.f32 %v1756, %v2038
      %v2063 = vadd.f32 %v1757, %v2043
      %v2064 = vadd.f32 %v1758, %v2046
      %s2065 = scalar_lea.vmem %s315, 32
      %v2066 = vld [vmem:[%s2065] sm:$0xff]
      %v2067 = vld [vmem:[%s2065 + $0x10] sm:$0xff]
      %v2068 = vld [vmem:[%s2065 + $0x20] sm:$0xff]
      %v2069 = vld [vmem:[%s2065 + $0x30] sm:$0xff]
      %v2070 = vld [vmem:[%s2065 + $0x40] sm:$0xff]
      %v2071 = vld [vmem:[%s2065 + $0x50] sm:$0xff]
      %v2072 = vld [vmem:[%s2065 + $0x60] sm:$0xff]
      %v2073 = vld [vmem:[%s2065 + $0x70] sm:$0xff]
      %v2074 = vld [vmem:[%s2065 + $0x80] sm:$0xff]
      %v2075 = vld [vmem:[%s2065 + $0x90] sm:$0xff]
      %v2076 = vld [vmem:[%s2065 + $0xa0] sm:$0xff]
      %v2077 = vld [vmem:[%s2065 + $0xb0] sm:$0xff]
      %v2078 = vld [vmem:[%s2065 + $0xc0] sm:$0xff]
      %v2079 = vld [vmem:[%s2065 + $0xd0] sm:$0xff]
      %v2080 = vld [vmem:[%s2065 + $0xe0] sm:$0xff]
      %v2081 = vld [vmem:[%s2065 + $0xf0] sm:$0xff]
      %v2082 = vld [vmem:[%s2065 + $0x8] sm:$0x11]
      %v2083 = vld [vmem:[%s2065 + $0x18] sm:$0x11]
      %v2084 = vld [vmem:[%s2065 + $0x28] sm:$0x11]
      %v2085 = vld [vmem:[%s2065 + $0x38] sm:$0x11]
      %v2086 = vld [vmem:[%s2065 + $0x48] sm:$0x11]
      %v2087 = vld [vmem:[%s2065 + $0x58] sm:$0x11]
      %v2088 = vld [vmem:[%s2065 + $0x68] sm:$0x11]
      %v2089 = vld [vmem:[%s2065 + $0x78] sm:$0x11]
      %v2090 = vld [vmem:[%s2065 + $0x88] sm:$0x11]
      %v2091 = vld [vmem:[%s2065 + $0x98] sm:$0x11]
      %v2092 = vld [vmem:[%s2065 + $0xa8] sm:$0x11]
      %v2093 = vld [vmem:[%s2065 + $0xb8] sm:$0x11]
      %v2094 = vld [vmem:[%s2065 + $0xc8] sm:$0x11]
      %v2095 = vld [vmem:[%s2065 + $0xd8] sm:$0x11]
      %v2096 = vld [vmem:[%s2065 + $0xe8] sm:$0x11]
      %v2097 = vld [vmem:[%s2065 + $0xf8] sm:$0x11]
      %v2099 = vshrl.u32 %v2066, 16
      %v2101 = vrot.slane %v2099, 4
      %v2102 = vshll.u32 %v2066, 16
      %v2104 = vrot.slane %v2102, 5
      %v2105 = vor.u32 %v2101, %v2104
      %v2106 = vrot.slane %v2105, 4
      %v2108 = vshll.u32 %v2082, 16
      %v2110 = vrot.slane %v2108, 5
      %v2111 = vsel %vm361, %v2106, %v2110
      %v2113 = vshrl.u32 %v2067, 16
      %v2115 = vrot.slane %v2113, 4
      %v2116 = vshll.u32 %v2067, 16
      %v2118 = vrot.slane %v2116, 5
      %v2119 = vor.u32 %v2115, %v2118
      %v2120 = vrot.slane %v2119, 4
      %v2122 = vshll.u32 %v2083, 16
      %v2124 = vrot.slane %v2122, 5
      %v2125 = vsel %vm361, %v2120, %v2124
      %v2127 = vshrl.u32 %v2068, 16
      %v2129 = vrot.slane %v2127, 4
      %v2130 = vshll.u32 %v2068, 16
      %v2132 = vrot.slane %v2130, 5
      %v2133 = vor.u32 %v2129, %v2132
      %v2134 = vrot.slane %v2133, 4
      %v2136 = vshll.u32 %v2084, 16
      %v2138 = vrot.slane %v2136, 5
      %v2139 = vsel %vm361, %v2134, %v2138
      %v2141 = vshrl.u32 %v2069, 16
      %v2143 = vrot.slane %v2141, 4
      %v2144 = vshll.u32 %v2069, 16
      %v2146 = vrot.slane %v2144, 5
      %v2147 = vor.u32 %v2143, %v2146
      %v2148 = vrot.slane %v2147, 4
      %v2150 = vshll.u32 %v2085, 16
      %v2152 = vrot.slane %v2150, 5
      %v2153 = vsel %vm361, %v2148, %v2152
      %v2155 = vshrl.u32 %v2070, 16
      %v2157 = vrot.slane %v2155, 4
      %v2158 = vshll.u32 %v2070, 16
      %v2160 = vrot.slane %v2158, 5
      %v2161 = vor.u32 %v2157, %v2160
      %v2162 = vrot.slane %v2161, 4
      %v2164 = vshll.u32 %v2086, 16
      %v2166 = vrot.slane %v2164, 5
      %v2167 = vsel %vm361, %v2162, %v2166
      %v2169 = vshrl.u32 %v2071, 16
      %v2171 = vrot.slane %v2169, 4
      %v2172 = vshll.u32 %v2071, 16
      %v2174 = vrot.slane %v2172, 5
      %v2175 = vor.u32 %v2171, %v2174
      %v2176 = vrot.slane %v2175, 4
      %v2178 = vshll.u32 %v2087, 16
      %v2180 = vrot.slane %v2178, 5
      %v2181 = vsel %vm361, %v2176, %v2180
      %v2183 = vshrl.u32 %v2072, 16
      %v2185 = vrot.slane %v2183, 4
      %v2186 = vshll.u32 %v2072, 16
      %v2188 = vrot.slane %v2186, 5
      %v2189 = vor.u32 %v2185, %v2188
      %v2190 = vrot.slane %v2189, 4
      %v2192 = vshll.u32 %v2088, 16
      %v2194 = vrot.slane %v2192, 5
      %v2195 = vsel %vm361, %v2190, %v2194
      %v2197 = vshrl.u32 %v2073, 16
      %v2199 = vrot.slane %v2197, 4
      %v2200 = vshll.u32 %v2073, 16
      %v2202 = vrot.slane %v2200, 5
      %v2203 = vor.u32 %v2199, %v2202
      %v2204 = vrot.slane %v2203, 4
      %v2206 = vshll.u32 %v2089, 16
      %v2208 = vrot.slane %v2206, 5
      %v2209 = vsel %vm361, %v2204, %v2208
      %v2211 = vshrl.u32 %v2074, 16
      %v2213 = vrot.slane %v2211, 4
      %v2214 = vshll.u32 %v2074, 16
      %v2216 = vrot.slane %v2214, 5
      %v2217 = vor.u32 %v2213, %v2216
      %v2218 = vrot.slane %v2217, 4
      %v2220 = vshll.u32 %v2090, 16
      %v2222 = vrot.slane %v2220, 5
      %v2223 = vsel %vm361, %v2218, %v2222
      %v2225 = vshrl.u32 %v2075, 16
      %v2227 = vrot.slane %v2225, 4
      %v2228 = vshll.u32 %v2075, 16
      %v2230 = vrot.slane %v2228, 5
      %v2231 = vor.u32 %v2227, %v2230
      %v2232 = vrot.slane %v2231, 4
      %v2234 = vshll.u32 %v2091, 16
      %v2236 = vrot.slane %v2234, 5
      %v2237 = vsel %vm361, %v2232, %v2236
      %v2239 = vshrl.u32 %v2076, 16
      %v2241 = vrot.slane %v2239, 4
      %v2242 = vshll.u32 %v2076, 16
      %v2244 = vrot.slane %v2242, 5
      %v2245 = vor.u32 %v2241, %v2244
      %v2246 = vrot.slane %v2245, 4
      %v2248 = vshll.u32 %v2092, 16
      %v2250 = vrot.slane %v2248, 5
      %v2251 = vsel %vm361, %v2246, %v2250
      %v2253 = vshrl.u32 %v2077, 16
      %v2255 = vrot.slane %v2253, 4
      %v2256 = vshll.u32 %v2077, 16
      %v2258 = vrot.slane %v2256, 5
      %v2259 = vor.u32 %v2255, %v2258
      %v2260 = vrot.slane %v2259, 4
      %v2262 = vshll.u32 %v2093, 16
      %v2264 = vrot.slane %v2262, 5
      %v2265 = vsel %vm361, %v2260, %v2264
      %v2267 = vshrl.u32 %v2078, 16
      %v2269 = vrot.slane %v2267, 4
      %v2270 = vshll.u32 %v2078, 16
      %v2272 = vrot.slane %v2270, 5
      %v2273 = vor.u32 %v2269, %v2272
      %v2274 = vrot.slane %v2273, 4
      %v2276 = vshll.u32 %v2094, 16
      %v2278 = vrot.slane %v2276, 5
      %v2279 = vsel %vm361, %v2274, %v2278
      %v2281 = vshrl.u32 %v2079, 16
      %v2283 = vrot.slane %v2281, 4
      %v2284 = vshll.u32 %v2079, 16
      %v2286 = vrot.slane %v2284, 5
      %v2287 = vor.u32 %v2283, %v2286
      %v2288 = vrot.slane %v2287, 4
      %v2290 = vshll.u32 %v2095, 16
      %v2292 = vrot.slane %v2290, 5
      %v2293 = vsel %vm361, %v2288, %v2292
      %v2295 = vshrl.u32 %v2080, 16
      %v2297 = vrot.slane %v2295, 4
      %v2298 = vshll.u32 %v2080, 16
      %v2300 = vrot.slane %v2298, 5
      %v2301 = vor.u32 %v2297, %v2300
      %v2302 = vrot.slane %v2301, 4
      %v2304 = vshll.u32 %v2096, 16
      %v2306 = vrot.slane %v2304, 5
      %v2307 = vsel %vm361, %v2302, %v2306
      %v2309 = vshrl.u32 %v2081, 16
      %v2311 = vrot.slane %v2309, 4
      %v2312 = vshll.u32 %v2081, 16
      %v2314 = vrot.slane %v2312, 5
      %v2315 = vor.u32 %v2311, %v2314
      %v2316 = vrot.slane %v2315, 4
      %v2318 = vshll.u32 %v2097, 16
      %v2320 = vrot.slane %v2318, 5
      %v2321 = vsel %vm361, %v2316, %v2320
      %s2322 = scalar_lea.vmem %s2, 256
      %v2323 = vld [vmem:[%s2322] sm:$0xf]
      %v2324 = vld [vmem:[%s2322 + $0x4] sm:$0xf]
      %v2325 = vld [vmem:[%s2322 + $0x8] sm:$0xf]
      %v2326 = vld [vmem:[%s2322 + $0xc] sm:$0xf]
      %v2327 = vld [vmem:[%s2322 + $0x10] sm:$0xf]
      %v2328 = vld [vmem:[%s2322 + $0x14] sm:$0xf]
      %v2329 = vld [vmem:[%s2322 + $0x18] sm:$0xf]
      %v2330 = vld [vmem:[%s2322 + $0x1c] sm:$0xf]
      %v2331 = vld [vmem:[%s2322 + $0x20] sm:$0xf]
      %v2332 = vld [vmem:[%s2322 + $0x24] sm:$0xf]
      %v2333 = vld [vmem:[%s2322 + $0x28] sm:$0xf]
      %v2334 = vld [vmem:[%s2322 + $0x2c] sm:$0xf]
      %v2335 = vld [vmem:[%s2322 + $0x30] sm:$0xf]
      %v2336 = vld [vmem:[%s2322 + $0x34] sm:$0xf]
      %v2337 = vld [vmem:[%s2322 + $0x38] sm:$0xf]
      %v2338 = vld [vmem:[%s2322 + $0x3c] sm:$0xf]
      %v2339 = vld [vmem:[%s2322 + $0x40] sm:$0xf]
      %v2340 = vld [vmem:[%s2322 + $0x44] sm:$0xf]
      %v2341 = vld [vmem:[%s2322 + $0x48] sm:$0xf]
      %v2342 = vld [vmem:[%s2322 + $0x4c] sm:$0xf]
      %v2343 = vld [vmem:[%s2322 + $0x50] sm:$0xf]
      %v2344 = vld [vmem:[%s2322 + $0x54] sm:$0xf]
      %v2345 = vld [vmem:[%s2322 + $0x58] sm:$0xf]
      %v2346 = vld [vmem:[%s2322 + $0x5c] sm:$0xf]
      %v2347 = vld [vmem:[%s2322 + $0x60] sm:$0xf]
      %v2348 = vld [vmem:[%s2322 + $0x64] sm:$0xf]
      %v2349 = vld [vmem:[%s2322 + $0x68] sm:$0xf]
      %v2350 = vld [vmem:[%s2322 + $0x6c] sm:$0xf]
      %v2351 = vld [vmem:[%s2322 + $0x70] sm:$0xf]
      %v2352 = vld [vmem:[%s2322 + $0x74] sm:$0xf]
      %v2353 = vld [vmem:[%s2322 + $0x78] sm:$0xf]
      %v2354 = vld [vmem:[%s2322 + $0x7c] sm:$0xf]
      %v2371 = vunpack.c.l.b16 %v2066
      %v2372 = vunpack.c.h.b16 %v2066
      %v2373 = vunpack.c.l.b16 %v2067
      %v2374 = vunpack.c.h.b16 %v2067
      %v2375 = vunpack.c.l.b16 %v2068
      %v2376 = vunpack.c.h.b16 %v2068
      %v2377 = vunpack.c.l.b16 %v2069
      %v2378 = vunpack.c.h.b16 %v2069
      %v2379 = vunpack.c.l.b16 %v2070
      %v2380 = vunpack.c.h.b16 %v2070
      %v2381 = vunpack.c.l.b16 %v2071
      %v2382 = vunpack.c.h.b16 %v2071
      %v2383 = vunpack.c.l.b16 %v2072
      %v2384 = vunpack.c.h.b16 %v2072
      %v2385 = vunpack.c.l.b16 %v2073
      %v2386 = vunpack.c.h.b16 %v2073
      %v2387 = vunpack.c.l.b16 %v2074
      %v2388 = vunpack.c.h.b16 %v2074
      %v2389 = vunpack.c.l.b16 %v2075
      %v2390 = vunpack.c.h.b16 %v2075
      %v2391 = vunpack.c.l.b16 %v2076
      %v2392 = vunpack.c.h.b16 %v2076
      %v2393 = vunpack.c.l.b16 %v2077
      %v2394 = vunpack.c.h.b16 %v2077
      %v2395 = vunpack.c.l.b16 %v2078
      %v2396 = vunpack.c.h.b16 %v2078
      %v2397 = vunpack.c.l.b16 %v2079
      %v2398 = vunpack.c.h.b16 %v2079
      %v2399 = vunpack.c.l.b16 %v2080
      %v2400 = vunpack.c.h.b16 %v2080
      %v2401 = vunpack.c.l.b16 %v2081
      %v2402 = vunpack.c.h.b16 %v2081
      %v2403 = vpack.c.b16 %v2373, %v2371
      %v2404 = vpack.c.b16 %v2374, %v2372
      %v2405 = vpack.c.b16 %v2377, %v2375
      %v2406 = vpack.c.b16 %v2378, %v2376
      %v2407 = vpack.c.b16 %v2381, %v2379
      %v2408 = vpack.c.b16 %v2382, %v2380
      %v2409 = vpack.c.b16 %v2385, %v2383
      %v2410 = vpack.c.b16 %v2386, %v2384
      %v2411 = vpack.c.b16 %v2389, %v2387
      %v2412 = vpack.c.b16 %v2390, %v2388
      %v2413 = vpack.c.b16 %v2393, %v2391
      %v2414 = vpack.c.b16 %v2394, %v2392
      %v2415 = vpack.c.b16 %v2397, %v2395
      %v2416 = vpack.c.b16 %v2398, %v2396
      %v2417 = vpack.c.b16 %v2401, %v2399
      %v2418 = vpack.c.b16 %v2402, %v2400
      %v2467 = vunpack.c.l.b16 %v2323
      %v2468 = vunpack.c.l.b16 %v2324
      %v2469 = vunpack.c.l.b16 %v2325
      %v2470 = vunpack.c.l.b16 %v2326
      %v2471 = vunpack.c.l.b16 %v2327
      %v2472 = vunpack.c.l.b16 %v2328
      %v2473 = vunpack.c.l.b16 %v2329
      %v2474 = vunpack.c.l.b16 %v2330
      %v2475 = vunpack.c.l.b16 %v2331
      %v2476 = vunpack.c.l.b16 %v2332
      %v2477 = vunpack.c.l.b16 %v2333
      %v2478 = vunpack.c.l.b16 %v2334
      %v2479 = vunpack.c.l.b16 %v2335
      %v2480 = vunpack.c.l.b16 %v2336
      %v2481 = vunpack.c.l.b16 %v2337
      %v2482 = vunpack.c.l.b16 %v2338
      %v2483 = vunpack.c.l.b16 %v2339
      %v2484 = vunpack.c.l.b16 %v2340
      %v2485 = vunpack.c.l.b16 %v2341
      %v2486 = vunpack.c.l.b16 %v2342
      %v2487 = vunpack.c.l.b16 %v2343
      %v2488 = vunpack.c.l.b16 %v2344
      %v2489 = vunpack.c.l.b16 %v2345
      %v2490 = vunpack.c.l.b16 %v2346
      %v2491 = vunpack.c.l.b16 %v2347
      %v2492 = vunpack.c.l.b16 %v2348
      %v2493 = vunpack.c.l.b16 %v2349
      %v2494 = vunpack.c.l.b16 %v2350
      %v2495 = vunpack.c.l.b16 %v2351
      %v2496 = vunpack.c.l.b16 %v2352
      %v2497 = vunpack.c.l.b16 %v2353
      %v2498 = vunpack.c.l.b16 %v2354
      %v2499 = vpack.c.b16 %v2468, %v2467
      %v2500 = vpack.c.b16 %v2470, %v2469
      %v2501 = vpack.c.b16 %v2472, %v2471
      %v2502 = vpack.c.b16 %v2474, %v2473
      %v2503 = vpack.c.b16 %v2476, %v2475
      %v2504 = vpack.c.b16 %v2478, %v2477
      %v2505 = vpack.c.b16 %v2480, %v2479
      %v2506 = vpack.c.b16 %v2482, %v2481
      %v2507 = vpack.c.b16 %v2484, %v2483
      %v2508 = vpack.c.b16 %v2486, %v2485
      %v2509 = vpack.c.b16 %v2488, %v2487
      %v2510 = vpack.c.b16 %v2490, %v2489
      %v2511 = vpack.c.b16 %v2492, %v2491
      %v2512 = vpack.c.b16 %v2494, %v2493
      %v2513 = vpack.c.b16 %v2496, %v2495
      %v2514 = vpack.c.b16 %v2498, %v2497
      %2531 = vmatprep.subr.bf16.mxu0 0
      %2532 = vmatpush1.bf16.msra.mxu0 %v2499
      %2533 = vmatprep.subr.bf16.mxu0 0
      %2534 = vmatpush1.bf16.msra.mxu0 %v2500
      %2535 = vmatprep.subr.bf16.mxu0 0
      %2536 = vmatpush1.bf16.msra.mxu0 %v2501
      %2537 = vmatprep.subr.bf16.mxu0 0
      %2538 = vmatpush1.bf16.msra.mxu0 %v2502
      %2539 = vmatprep.subr.bf16.mxu0 0
      %2540 = vmatpush1.bf16.msra.mxu0 %v2503
      %2541 = vmatprep.subr.bf16.mxu0 0
      %2542 = vmatpush1.bf16.msra.mxu0 %v2504
      %2543 = vmatprep.subr.bf16.mxu0 0
      %2544 = vmatpush1.bf16.msra.mxu0 %v2505
      %2545 = vmatprep.subr.bf16.mxu0 0
      %2546 = vmatpush1.bf16.msra.mxu0 %v2506
      %2547 = vmatprep.subr.bf16.mxu0 0
      %2548 = vmatpush1.bf16.msra.mxu0 %v2507
      %2549 = vmatprep.subr.bf16.mxu0 0
      %2550 = vmatpush1.bf16.msra.mxu0 %v2508
      %2551 = vmatprep.subr.bf16.mxu0 0
      %2552 = vmatpush1.bf16.msra.mxu0 %v2509
      %2553 = vmatprep.subr.bf16.mxu0 0
      %2554 = vmatpush1.bf16.msra.mxu0 %v2510
      %2555 = vmatprep.subr.bf16.mxu0 0
      %2556 = vmatpush1.bf16.msra.mxu0 %v2511
      %2557 = vmatprep.subr.bf16.mxu0 0
      %2558 = vmatpush1.bf16.msra.mxu0 %v2512
      %2559 = vmatprep.subr.bf16.mxu0 0
      %2560 = vmatpush1.bf16.msra.mxu0 %v2513
      %2561 = vmatprep.subr.bf16.mxu0 0
      %2562 = vmatpush1.bf16.msra.mxu0 %v2514
      %2563 = vmatprep.mubr.bf16.mxu0 %v2404
      %2564 = vmatmul.mubr.bf16.gmra.mrb[0].mxu0 %v2403
      %v2565 = vpop.f32.mrb[0].mxu0
      %v2566 = vadd.f32 0.0, %v2565
      %v2567 = vpop.f32.mrb[0].mxu0
      %v2568 = vpop.f32.mrb[0].mxu0
      %v2569 = vadd.f32 0.0, %v2568
      %v2570 = vpop.f32.mrb[0].mxu0
      %2571 = vmatprep.mubr.bf16.mxu0 %v2406
      %2572 = vmatmul.mubr.bf16.gmra.mrb[0].mxu0 %v2405
      %v2573 = vpop.f32.mrb[0].mxu0
      %v2574 = vadd.f32 0.0, %v2573
      %v2575 = vpop.f32.mrb[0].mxu0
      %v2576 = vpop.f32.mrb[0].mxu0
      %v2577 = vadd.f32 0.0, %v2576
      %v2578 = vpop.f32.mrb[0].mxu0
      %2579 = vmatprep.mubr.bf16.mxu0 %v2408
      %2580 = vmatmul.mubr.bf16.gmra.mrb[0].mxu0 %v2407
      %v2581 = vpop.f32.mrb[0].mxu0
      %v2582 = vadd.f32 0.0, %v2581
      %v2583 = vpop.f32.mrb[0].mxu0
      %v2584 = vpop.f32.mrb[0].mxu0
      %v2585 = vadd.f32 0.0, %v2584
      %v2586 = vpop.f32.mrb[0].mxu0
      %2587 = vmatprep.mubr.bf16.mxu0 %v2410
      %2588 = vmatmul.mubr.bf16.gmra.mrb[0].mxu0 %v2409
      %v2589 = vpop.f32.mrb[0].mxu0
      %v2590 = vadd.f32 0.0, %v2589
      %v2591 = vpop.f32.mrb[0].mxu0
      %v2592 = vpop.f32.mrb[0].mxu0
      %v2593 = vadd.f32 0.0, %v2592
      %v2594 = vpop.f32.mrb[0].mxu0
      %2595 = vmatprep.mubr.bf16.mxu0 %v2412
      %2596 = vmatmul.mubr.bf16.gmra.mrb[0].mxu0 %v2411
      %v2597 = vpop.f32.mrb[0].mxu0
      %v2598 = vadd.f32 0.0, %v2597
      %v2599 = vpop.f32.mrb[0].mxu0
      %v2600 = vpop.f32.mrb[0].mxu0
      %v2601 = vadd.f32 0.0, %v2600
      %v2602 = vpop.f32.mrb[0].mxu0
      %2603 = vmatprep.mubr.bf16.mxu0 %v2414
      %2604 = vmatmul.mubr.bf16.gmra.mrb[0].mxu0 %v2413
      %v2605 = vpop.f32.mrb[0].mxu0
      %v2606 = vadd.f32 0.0, %v2605
      %v2607 = vpop.f32.mrb[0].mxu0
      %v2608 = vpop.f32.mrb[0].mxu0
      %v2609 = vadd.f32 0.0, %v2608
      %v2610 = vpop.f32.mrb[0].mxu0
      %2611 = vmatprep.mubr.bf16.mxu0 %v2416
      %2612 = vmatmul.mubr.bf16.gmra.mrb[0].mxu0 %v2415
      %v2613 = vpop.f32.mrb[0].mxu0
      %v2614 = vadd.f32 0.0, %v2613
      %v2615 = vpop.f32.mrb[0].mxu0
      %v2616 = vpop.f32.mrb[0].mxu0
      %v2617 = vadd.f32 0.0, %v2616
      %v2618 = vpop.f32.mrb[0].mxu0
      %2619 = vmatprep.mubr.bf16.mxu0 %v2418
      %2620 = vmatmul.mubr.bf16.gmra.mrb[0].mxu0 %v2417
      %v2621 = vpop.f32.mrb[0].mxu0
      %v2622 = vadd.f32 0.0, %v2621
      %v2623 = vpop.f32.mrb[0].mxu0
      %v2624 = vpop.f32.mrb[0].mxu0
      %v2625 = vadd.f32 0.0, %v2624
      %v2626 = vpop.f32.mrb[0].mxu0
      %2627 = vdwg.mxu0
      %v2628 = vadd.f32 %v2049, %v2566
      %v2629 = vadd.f32 %v2050, %v2569
      %v2630 = vadd.f32 %v2051, %v2574
      %v2631 = vadd.f32 %v2052, %v2577
      %v2632 = vadd.f32 %v2053, %v2582
      %v2633 = vadd.f32 %v2054, %v2585
      %v2634 = vadd.f32 %v2055, %v2590
      %v2635 = vadd.f32 %v2056, %v2593
      %v2636 = vadd.f32 %v2057, %v2598
      %v2637 = vadd.f32 %v2058, %v2601
      %v2638 = vadd.f32 %v2059, %v2606
      %v2639 = vadd.f32 %v2060, %v2609
      %v2640 = vadd.f32 %v2061, %v2614
      %v2641 = vadd.f32 %v2062, %v2617
      %v2642 = vadd.f32 %v2063, %v2622
      %v2643 = vadd.f32 %v2064, %v2625
      %s2644 = scalar_lea.vmem %s3, 256
      %v2645 = vld [vmem:[%s2644] sm:$0xf]
      %v2646 = vld [vmem:[%s2644 + $0x4] sm:$0xf]
      %v2647 = vld [vmem:[%s2644 + $0x8] sm:$0xf]
      %v2648 = vld [vmem:[%s2644 + $0xc] sm:$0xf]
      %v2649 = vld [vmem:[%s2644 + $0x10] sm:$0xf]
      %v2650 = vld [vmem:[%s2644 + $0x14] sm:$0xf]
      %v2651 = vld [vmem:[%s2644 + $0x18] sm:$0xf]
      %v2652 = vld [vmem:[%s2644 + $0x1c] sm:$0xf]
      %v2653 = vld [vmem:[%s2644 + $0x20] sm:$0xf]
      %v2654 = vld [vmem:[%s2644 + $0x24] sm:$0xf]
      %v2655 = vld [vmem:[%s2644 + $0x28] sm:$0xf]
      %v2656 = vld [vmem:[%s2644 + $0x2c] sm:$0xf]
      %v2657 = vld [vmem:[%s2644 + $0x30] sm:$0xf]
      %v2658 = vld [vmem:[%s2644 + $0x34] sm:$0xf]
      %v2659 = vld [vmem:[%s2644 + $0x38] sm:$0xf]
      %v2660 = vld [vmem:[%s2644 + $0x3c] sm:$0xf]
      %v2661 = vld [vmem:[%s2644 + $0x40] sm:$0xf]
      %v2662 = vld [vmem:[%s2644 + $0x44] sm:$0xf]
      %v2663 = vld [vmem:[%s2644 + $0x48] sm:$0xf]
      %v2664 = vld [vmem:[%s2644 + $0x4c] sm:$0xf]
      %v2665 = vld [vmem:[%s2644 + $0x50] sm:$0xf]
      %v2666 = vld [vmem:[%s2644 + $0x54] sm:$0xf]
      %v2667 = vld [vmem:[%s2644 + $0x58] sm:$0xf]
      %v2668 = vld [vmem:[%s2644 + $0x5c] sm:$0xf]
      %v2669 = vld [vmem:[%s2644 + $0x60] sm:$0xf]
      %v2670 = vld [vmem:[%s2644 + $0x64] sm:$0xf]
      %v2671 = vld [vmem:[%s2644 + $0x68] sm:$0xf]
      %v2672 = vld [vmem:[%s2644 + $0x6c] sm:$0xf]
      %v2673 = vld [vmem:[%s2644 + $0x70] sm:$0xf]
      %v2674 = vld [vmem:[%s2644 + $0x74] sm:$0xf]
      %v2675 = vld [vmem:[%s2644 + $0x78] sm:$0xf]
      %v2676 = vld [vmem:[%s2644 + $0x7c] sm:$0xf]
      %v2677 = vunpack.c.l.b16 %v2111
      %v2678 = vunpack.c.h.b16 %v2111
      %v2679 = vunpack.c.l.b16 %v2125
      %v2680 = vunpack.c.h.b16 %v2125
      %v2681 = vunpack.c.l.b16 %v2139
      %v2682 = vunpack.c.h.b16 %v2139
      %v2683 = vunpack.c.l.b16 %v2153
      %v2684 = vunpack.c.h.b16 %v2153
      %v2685 = vunpack.c.l.b16 %v2167
      %v2686 = vunpack.c.h.b16 %v2167
      %v2687 = vunpack.c.l.b16 %v2181
      %v2688 = vunpack.c.h.b16 %v2181
      %v2689 = vunpack.c.l.b16 %v2195
      %v2690 = vunpack.c.h.b16 %v2195
      %v2691 = vunpack.c.l.b16 %v2209
      %v2692 = vunpack.c.h.b16 %v2209
      %v2693 = vunpack.c.l.b16 %v2223
      %v2694 = vunpack.c.h.b16 %v2223
      %v2695 = vunpack.c.l.b16 %v2237
      %v2696 = vunpack.c.h.b16 %v2237
      %v2697 = vunpack.c.l.b16 %v2251
      %v2698 = vunpack.c.h.b16 %v2251
      %v2699 = vunpack.c.l.b16 %v2265
      %v2700 = vunpack.c.h.b16 %v2265
      %v2701 = vunpack.c.l.b16 %v2279
      %v2702 = vunpack.c.h.b16 %v2279
      %v2703 = vunpack.c.l.b16 %v2293
      %v2704 = vunpack.c.h.b16 %v2293
      %v2705 = vunpack.c.l.b16 %v2307
      %v2706 = vunpack.c.h.b16 %v2307
      %v2707 = vunpack.c.l.b16 %v2321
      %v2708 = vunpack.c.h.b16 %v2321
      %v2709 = vpack.c.b16 %v2679, %v2677
      %v2710 = vpack.c.b16 %v2680, %v2678
      %v2711 = vpack.c.b16 %v2683, %v2681
      %v2712 = vpack.c.b16 %v2684, %v2682
      %v2713 = vpack.c.b16 %v2687, %v2685
      %v2714 = vpack.c.b16 %v2688, %v2686
      %v2715 = vpack.c.b16 %v2691, %v2689
      %v2716 = vpack.c.b16 %v2692, %v2690
      %v2717 = vpack.c.b16 %v2695, %v2693
      %v2718 = vpack.c.b16 %v2696, %v2694
      %v2719 = vpack.c.b16 %v2699, %v2697
      %v2720 = vpack.c.b16 %v2700, %v2698
      %v2721 = vpack.c.b16 %v2703, %v2701
      %v2722 = vpack.c.b16 %v2704, %v2702
      %v2723 = vpack.c.b16 %v2707, %v2705
      %v2724 = vpack.c.b16 %v2708, %v2706
      %v2773 = vunpack.c.l.b16 %v2645
      %v2774 = vunpack.c.l.b16 %v2646
      %v2775 = vunpack.c.l.b16 %v2647
      %v2776 = vunpack.c.l.b16 %v2648
      %v2777 = vunpack.c.l.b16 %v2649
      %v2778 = vunpack.c.l.b16 %v2650
      %v2779 = vunpack.c.l.b16 %v2651
      %v2780 = vunpack.c.l.b16 %v2652
      %v2781 = vunpack.c.l.b16 %v2653
      %v2782 = vunpack.c.l.b16 %v2654
      %v2783 = vunpack.c.l.b16 %v2655
      %v2784 = vunpack.c.l.b16 %v2656
      %v2785 = vunpack.c.l.b16 %v2657
      %v2786 = vunpack.c.l.b16 %v2658
      %v2787 = vunpack.c.l.b16 %v2659
      %v2788 = vunpack.c.l.b16 %v2660
      %v2789 = vunpack.c.l.b16 %v2661
      %v2790 = vunpack.c.l.b16 %v2662
      %v2791 = vunpack.c.l.b16 %v2663
      %v2792 = vunpack.c.l.b16 %v2664
      %v2793 = vunpack.c.l.b16 %v2665
      %v2794 = vunpack.c.l.b16 %v2666
      %v2795 = vunpack.c.l.b16 %v2667
      %v2796 = vunpack.c.l.b16 %v2668
      %v2797 = vunpack.c.l.b16 %v2669
      %v2798 = vunpack.c.l.b16 %v2670
      %v2799 = vunpack.c.l.b16 %v2671
      %v2800 = vunpack.c.l.b16 %v2672
      %v2801 = vunpack.c.l.b16 %v2673
      %v2802 = vunpack.c.l.b16 %v2674
      %v2803 = vunpack.c.l.b16 %v2675
      %v2804 = vunpack.c.l.b16 %v2676
      %v2805 = vpack.c.b16 %v2774, %v2773
      %v2806 = vpack.c.b16 %v2776, %v2775
      %v2807 = vpack.c.b16 %v2778, %v2777
      %v2808 = vpack.c.b16 %v2780, %v2779
      %v2809 = vpack.c.b16 %v2782, %v2781
      %v2810 = vpack.c.b16 %v2784, %v2783
      %v2811 = vpack.c.b16 %v2786, %v2785
      %v2812 = vpack.c.b16 %v2788, %v2787
      %v2813 = vpack.c.b16 %v2790, %v2789
      %v2814 = vpack.c.b16 %v2792, %v2791
      %v2815 = vpack.c.b16 %v2794, %v2793
      %v2816 = vpack.c.b16 %v2796, %v2795
      %v2817 = vpack.c.b16 %v2798, %v2797
      %v2818 = vpack.c.b16 %v2800, %v2799
      %v2819 = vpack.c.b16 %v2802, %v2801
      %v2820 = vpack.c.b16 %v2804, %v2803
      %2837 = vmatprep.subr.bf16.mxu0 0
      %2838 = vmatpush1.bf16.msra.mxu0 %v2805
      %2839 = vmatprep.subr.bf16.mxu0 0
      %2840 = vmatpush1.bf16.msra.mxu0 %v2806
      %2841 = vmatprep.subr.bf16.mxu0 0
      %2842 = vmatpush1.bf16.msra.mxu0 %v2807
      %2843 = vmatprep.subr.bf16.mxu0 0
      %2844 = vmatpush1.bf16.msra.mxu0 %v2808
      %2845 = vmatprep.subr.bf16.mxu0 0
      %2846 = vmatpush1.bf16.msra.mxu0 %v2809
      %2847 = vmatprep.subr.bf16.mxu0 0
      %2848 = vmatpush1.bf16.msra.mxu0 %v2810
      %2849 = vmatprep.subr.bf16.mxu0 0
      %2850 = vmatpush1.bf16.msra.mxu0 %v2811
      %2851 = vmatprep.subr.bf16.mxu0 0
      %2852 = vmatpush1.bf16.msra.mxu0 %v2812
      %2853 = vmatprep.subr.bf16.mxu0 0
      %2854 = vmatpush1.bf16.msra.mxu0 %v2813
      %2855 = vmatprep.subr.bf16.mxu0 0
      %2856 = vmatpush1.bf16.msra.mxu0 %v2814
      %2857 = vmatprep.subr.bf16.mxu0 0
      %2858 = vmatpush1.bf16.msra.mxu0 %v2815
      %2859 = vmatprep.subr.bf16.mxu0 0
      %2860 = vmatpush1.bf16.msra.mxu0 %v2816
      %2861 = vmatprep.subr.bf16.mxu0 0
      %2862 = vmatpush1.bf16.msra.mxu0 %v2817
      %2863 = vmatprep.subr.bf16.mxu0 0
      %2864 = vmatpush1.bf16.msra.mxu0 %v2818
      %2865 = vmatprep.subr.bf16.mxu0 0
      %2866 = vmatpush1.bf16.msra.mxu0 %v2819
      %2867 = vmatprep.subr.bf16.mxu0 0
      %2868 = vmatpush1.bf16.msra.mxu0 %v2820
      %2869 = vmatprep.mubr.bf16.mxu0 %v2710
      %2870 = vmatmul.mubr.bf16.gmra.mrb[0].mxu0 %v2709
      %v2871 = vpop.f32.mrb[0].mxu0
      %v2872 = vadd.f32 0.0, %v2871
      %v2873 = vpop.f32.mrb[0].mxu0
      %v2874 = vpop.f32.mrb[0].mxu0
      %v2875 = vadd.f32 0.0, %v2874
      %v2876 = vpop.f32.mrb[0].mxu0
      %2877 = vmatprep.mubr.bf16.mxu0 %v2712
      %2878 = vmatmul.mubr.bf16.gmra.mrb[0].mxu0 %v2711
      %v2879 = vpop.f32.mrb[0].mxu0
      %v2880 = vadd.f32 0.0, %v2879
      %v2881 = vpop.f32.mrb[0].mxu0
      %v2882 = vpop.f32.mrb[0].mxu0
      %v2883 = vadd.f32 0.0, %v2882
      %v2884 = vpop.f32.mrb[0].mxu0
      %2885 = vmatprep.mubr.bf16.mxu0 %v2714
      %2886 = vmatmul.mubr.bf16.gmra.mrb[0].mxu0 %v2713
      %v2887 = vpop.f32.mrb[0].mxu0
      %v2888 = vadd.f32 0.0, %v2887
      %v2889 = vpop.f32.mrb[0].mxu0
      %v2890 = vpop.f32.mrb[0].mxu0
      %v2891 = vadd.f32 0.0, %v2890
      %v2892 = vpop.f32.mrb[0].mxu0
      %2893 = vmatprep.mubr.bf16.mxu0 %v2716
      %2894 = vmatmul.mubr.bf16.gmra.mrb[0].mxu0 %v2715
      %v2895 = vpop.f32.mrb[0].mxu0
      %v2896 = vadd.f32 0.0, %v2895
      %v2897 = vpop.f32.mrb[0].mxu0
      %v2898 = vpop.f32.mrb[0].mxu0
      %v2899 = vadd.f32 0.0, %v2898
      %v2900 = vpop.f32.mrb[0].mxu0
      %2901 = vmatprep.mubr.bf16.mxu0 %v2718
      %2902 = vmatmul.mubr.bf16.gmra.mrb[0].mxu0 %v2717
      %v2903 = vpop.f32.mrb[0].mxu0
      %v2904 = vadd.f32 0.0, %v2903
      %v2905 = vpop.f32.mrb[0].mxu0
      %v2906 = vpop.f32.mrb[0].mxu0
      %v2907 = vadd.f32 0.0, %v2906
      %v2908 = vpop.f32.mrb[0].mxu0
      %2909 = vmatprep.mubr.bf16.mxu0 %v2720
      %2910 = vmatmul.mubr.bf16.gmra.mrb[0].mxu0 %v2719
      %v2911 = vpop.f32.mrb[0].mxu0
      %v2912 = vadd.f32 0.0, %v2911
      %v2913 = vpop.f32.mrb[0].mxu0
      %v2914 = vpop.f32.mrb[0].mxu0
      %v2915 = vadd.f32 0.0, %v2914
      %v2916 = vpop.f32.mrb[0].mxu0
      %2917 = vmatprep.mubr.bf16.mxu0 %v2722
      %2918 = vmatmul.mubr.bf16.gmra.mrb[0].mxu0 %v2721
      %v2919 = vpop.f32.mrb[0].mxu0
      %v2920 = vadd.f32 0.0, %v2919
      %v2921 = vpop.f32.mrb[0].mxu0
      %v2922 = vpop.f32.mrb[0].mxu0
      %v2923 = vadd.f32 0.0, %v2922
      %v2924 = vpop.f32.mrb[0].mxu0
      %2925 = vmatprep.mubr.bf16.mxu0 %v2724
      %2926 = vmatmul.mubr.bf16.gmra.mrb[0].mxu0 %v2723
      %v2927 = vpop.f32.mrb[0].mxu0
      %v2928 = vadd.f32 0.0, %v2927
      %v2929 = vpop.f32.mrb[0].mxu0
      %v2930 = vpop.f32.mrb[0].mxu0
      %v2931 = vadd.f32 0.0, %v2930
      %v2932 = vpop.f32.mrb[0].mxu0
      %2933 = vdwg.mxu0
      %v2934 = vadd.f32 %v2628, %v2872
      %v2935 = vadd.f32 %v2629, %v2875
      %v2936 = vadd.f32 %v2630, %v2880
      %v2937 = vadd.f32 %v2631, %v2883
      %v2938 = vadd.f32 %v2632, %v2888
      %v2939 = vadd.f32 %v2633, %v2891
      %v2940 = vadd.f32 %v2634, %v2896
      %v2941 = vadd.f32 %v2635, %v2899
      %v2942 = vadd.f32 %v2636, %v2904
      %v2943 = vadd.f32 %v2637, %v2907
      %v2944 = vadd.f32 %v2638, %v2912
      %v2945 = vadd.f32 %v2639, %v2915
      %v2946 = vadd.f32 %v2640, %v2920
      %v2947 = vadd.f32 %v2641, %v2923
      %v2948 = vadd.f32 %v2642, %v2928
      %v2949 = vadd.f32 %v2643, %v2931
      %v2950 = vld [vmem:[%s320] sm:$0xf]
      %v2951 = vld [vmem:[%s320 + $0x4] sm:$0xf]
      %v2952 = vld [vmem:[%s320 + $0x8] sm:$0xf]
      %v2953 = vld [vmem:[%s320 + $0xc] sm:$0xf]
      %v2954 = vld [vmem:[%s320 + $0x10] sm:$0xf]
      %v2955 = vld [vmem:[%s320 + $0x14] sm:$0xf]
      %v2956 = vld [vmem:[%s320 + $0x18] sm:$0xf]
      %v2957 = vld [vmem:[%s320 + $0x1c] sm:$0xf]
      %v2958 = vld [vmem:[%s320 + $0x20] sm:$0xf]
      %v2959 = vld [vmem:[%s320 + $0x24] sm:$0xf]
      %v2960 = vld [vmem:[%s320 + $0x28] sm:$0xf]
      %v2961 = vld [vmem:[%s320 + $0x2c] sm:$0xf]
      %v2962 = vld [vmem:[%s320 + $0x30] sm:$0xf]
      %v2963 = vld [vmem:[%s320 + $0x34] sm:$0xf]
      %v2964 = vld [vmem:[%s320 + $0x38] sm:$0xf]
      %v2965 = vld [vmem:[%s320 + $0x3c] sm:$0xf]
      %v2966 = vld [vmem:[%s4] sm:$0xf]
      %v2967 = vld [vmem:[%s4 + $0x4] sm:$0xf]
      %v2968 = vld [vmem:[%s4 + $0x8] sm:$0xf]
      %v2969 = vld [vmem:[%s4 + $0xc] sm:$0xf]
      %v2970 = vld [vmem:[%s4 + $0x10] sm:$0xf]
      %v2971 = vld [vmem:[%s4 + $0x14] sm:$0xf]
      %v2972 = vld [vmem:[%s4 + $0x18] sm:$0xf]
      %v2973 = vld [vmem:[%s4 + $0x1c] sm:$0xf]
      %v2990 = vunpack.c.l.b16 %v2950
      %v2991 = vunpack.c.l.b16 %v2951
      %v2992 = vunpack.c.l.b16 %v2952
      %v2993 = vunpack.c.l.b16 %v2953
      %v2994 = vunpack.c.l.b16 %v2954
      %v2995 = vunpack.c.l.b16 %v2955
      %v2996 = vunpack.c.l.b16 %v2956
      %v2997 = vunpack.c.l.b16 %v2957
      %v2998 = vunpack.c.l.b16 %v2958
      %v2999 = vunpack.c.l.b16 %v2959
      %v3000 = vunpack.c.l.b16 %v2960
      %v3001 = vunpack.c.l.b16 %v2961
      %v3002 = vunpack.c.l.b16 %v2962
      %v3003 = vunpack.c.l.b16 %v2963
      %v3004 = vunpack.c.l.b16 %v2964
      %v3005 = vunpack.c.l.b16 %v2965
      %v3006 = vpack.c.b16 %v2991, %v2990
      %v3007 = vpack.c.b16 %v2993, %v2992
      %v3008 = vpack.c.b16 %v2995, %v2994
      %v3009 = vpack.c.b16 %v2997, %v2996
      %v3010 = vpack.c.b16 %v2999, %v2998
      %v3011 = vpack.c.b16 %v3001, %v3000
      %v3012 = vpack.c.b16 %v3003, %v3002
      %v3013 = vpack.c.b16 %v3005, %v3004
      %v3022 = vunpack.c.l.b16 %v2966
      %v3023 = vunpack.c.l.b16 %v2967
      %v3024 = vunpack.c.l.b16 %v2968
      %v3025 = vunpack.c.l.b16 %v2969
      %v3026 = vunpack.c.l.b16 %v2970
      %v3027 = vunpack.c.l.b16 %v2971
      %v3028 = vunpack.c.l.b16 %v2972
      %v3029 = vunpack.c.l.b16 %v2973
      %v3030 = vpack.c.b16 %v3023, %v3022
      %v3031 = vpack.c.b16 %v3025, %v3024
      %v3032 = vpack.c.b16 %v3027, %v3026
      %v3033 = vpack.c.b16 %v3029, %v3028
      %vm3038 = vcmask 523264
      %v3040 = vsel %vm3038, %v3006, 0
      %v3043 = vsel %vm3038, %v3007, 0
      %v3046 = vsel %vm3038, %v3008, 0
      %v3049 = vsel %vm3038, %v3009, 0
      %v3052 = vsel %vm3038, %v3010, 0
      %v3055 = vsel %vm3038, %v3011, 0
      %v3058 = vsel %vm3038, %v3012, 0
      %v3061 = vsel %vm3038, %v3013, 0
      %3063 = vmatprep.subr.bf16.mxu0 0
      %3064 = vmatpush1.bf16.msra.mxu0 %v3030
      %3065 = vmatprep.subr.bf16.mxu0 0
      %3066 = vmatpush1.bf16.msra.mxu0 %v3031
      %3067 = vmatprep.subr.bf16.mxu0 0
      %3068 = vmatpush1.bf16.msra.mxu0 %v3032
      %3069 = vmatprep.subr.bf16.mxu0 0
      %3070 = vmatpush1.bf16.msra.mxu0 %v3033
      %3071 = vmatprep.subr.bf16.mxu0 0
      %3072 = vmatpush1.bf16.msra.mxu0 0
      %3073 = vmatprep.subr.bf16.mxu0 0
      %3074 = vmatpush1.bf16.msra.mxu0 0
      %3075 = vmatprep.subr.bf16.mxu0 0
      %3076 = vmatpush1.bf16.msra.mxu0 0
      %3077 = vmatprep.subr.bf16.mxu0 0
      %3078 = vmatpush1.bf16.msra.mxu0 0
      %3079 = vmatprep.subr.bf16.mxu0 0
      %3080 = vmatpush1.bf16.msra.mxu0 0
      %3081 = vmatprep.subr.bf16.mxu0 0
      %3082 = vmatpush1.bf16.msra.mxu0 0
      %3083 = vmatprep.subr.bf16.mxu0 0
      %3084 = vmatpush1.bf16.msra.mxu0 0
      %3085 = vmatprep.subr.bf16.mxu0 0
      %3086 = vmatpush1.bf16.msra.mxu0 0
      %3087 = vmatprep.subr.bf16.mxu0 0
      %3088 = vmatpush1.bf16.msra.mxu0 0
      %3089 = vmatprep.subr.bf16.mxu0 0
      %3090 = vmatpush1.bf16.msra.mxu0 0
      %3091 = vmatprep.subr.bf16.mxu0 0
      %3092 = vmatpush1.bf16.msra.mxu0 0
      %3093 = vmatprep.subr.bf16.mxu0 0
      %3094 = vmatpush1.bf16.msra.mxu0 0
      %3095 = vmatprep.mubr.bf16.mxu0 0
      %3096 = vmatmul.mubr.bf16.gmra.mrb[0].mxu0 %v3040
      %v3097 = vpop.f32.mrb[0].mxu0
      %v3098 = vadd.f32 0.0, %v3097
      %v3099 = vpop.f32.mrb[0].mxu0
      %v3100 = vpop.f32.mrb[0].mxu0
      %v3101 = vadd.f32 0.0, %v3100
      %v3102 = vpop.f32.mrb[0].mxu0
      %3103 = vmatprep.mubr.bf16.mxu0 0
      %3104 = vmatmul.mubr.bf16.gmra.mrb[0].mxu0 %v3043
      %v3105 = vpop.f32.mrb[0].mxu0
      %v3106 = vadd.f32 0.0, %v3105
      %v3107 = vpop.f32.mrb[0].mxu0
      %v3108 = vpop.f32.mrb[0].mxu0
      %v3109 = vadd.f32 0.0, %v3108
      %v3110 = vpop.f32.mrb[0].mxu0
      %3111 = vmatprep.mubr.bf16.mxu0 0
      %3112 = vmatmul.mubr.bf16.gmra.mrb[0].mxu0 %v3046
      %v3113 = vpop.f32.mrb[0].mxu0
      %v3114 = vadd.f32 0.0, %v3113
      %v3115 = vpop.f32.mrb[0].mxu0
      %v3116 = vpop.f32.mrb[0].mxu0
      %v3117 = vadd.f32 0.0, %v3116
      %v3118 = vpop.f32.mrb[0].mxu0
      %3119 = vmatprep.mubr.bf16.mxu0 0
      %3120 = vmatmul.mubr.bf16.gmra.mrb[0].mxu0 %v3049
      %v3121 = vpop.f32.mrb[0].mxu0
      %v3122 = vadd.f32 0.0, %v3121
      %v3123 = vpop.f32.mrb[0].mxu0
      %v3124 = vpop.f32.mrb[0].mxu0
      %v3125 = vadd.f32 0.0, %v3124
      %v3126 = vpop.f32.mrb[0].mxu0
      %3127 = vmatprep.mubr.bf16.mxu0 0
      %3128 = vmatmul.mubr.bf16.gmra.mrb[0].mxu0 %v3052
      %v3129 = vpop.f32.mrb[0].mxu0
      %v3130 = vadd.f32 0.0, %v3129
      %v3131 = vpop.f32.mrb[0].mxu0
      %v3132 = vpop.f32.mrb[0].mxu0
      %v3133 = vadd.f32 0.0, %v3132
      %v3134 = vpop.f32.mrb[0].mxu0
      %3135 = vmatprep.mubr.bf16.mxu0 0
      %3136 = vmatmul.mubr.bf16.gmra.mrb[0].mxu0 %v3055
      %v3137 = vpop.f32.mrb[0].mxu0
      %v3138 = vadd.f32 0.0, %v3137
      %v3139 = vpop.f32.mrb[0].mxu0
      %v3140 = vpop.f32.mrb[0].mxu0
      %v3141 = vadd.f32 0.0, %v3140
      %v3142 = vpop.f32.mrb[0].mxu0
      %3143 = vmatprep.mubr.bf16.mxu0 0
      %3144 = vmatmul.mubr.bf16.gmra.mrb[0].mxu0 %v3058
      %v3145 = vpop.f32.mrb[0].mxu0
      %v3146 = vadd.f32 0.0, %v3145
      %v3147 = vpop.f32.mrb[0].mxu0
      %v3148 = vpop.f32.mrb[0].mxu0
      %v3149 = vadd.f32 0.0, %v3148
      %v3150 = vpop.f32.mrb[0].mxu0
      %3151 = vmatprep.mubr.bf16.mxu0 0
      %3152 = vmatmul.mubr.bf16.gmra.mrb[0].mxu0 %v3061
      %v3153 = vpop.f32.mrb[0].mxu0
      %v3154 = vadd.f32 0.0, %v3153
      %v3155 = vpop.f32.mrb[0].mxu0
      %v3156 = vpop.f32.mrb[0].mxu0
      %v3157 = vadd.f32 0.0, %v3156
      %v3158 = vpop.f32.mrb[0].mxu0
      %3159 = vdwg.mxu0
      %v3160 = vadd.f32 %v2934, %v3098
      %v3161 = vadd.f32 %v2935, %v3101
      %v3162 = vadd.f32 %v2936, %v3106
      %v3163 = vadd.f32 %v2937, %v3109
      %v3164 = vadd.f32 %v2938, %v3114
      %v3165 = vadd.f32 %v2939, %v3117
      %v3166 = vadd.f32 %v2940, %v3122
      %v3167 = vadd.f32 %v2941, %v3125
      %v3168 = vadd.f32 %v2942, %v3130
      %v3169 = vadd.f32 %v2943, %v3133
      %v3170 = vadd.f32 %v2944, %v3138
      %v3171 = vadd.f32 %v2945, %v3141
      %v3172 = vadd.f32 %v2946, %v3146
      %v3173 = vadd.f32 %v2947, %v3149
      %v3174 = vadd.f32 %v2948, %v3154
      %v3175 = vadd.f32 %v2949, %v3157
      %v3176 = vld [vmem:[%s5] sm:$0x1]
      %v3178 = vlaneseq
      %v3179 = vshrl.u32 %v3178, 7
      %v3180 = vsub.s32 0, %v3179
      %v3181 = vrot.slane %v3176, %v3180
      %v3183 = vadd.f32 %v3160, %v3181
      %v3184 = vadd.f32 %v3161, %v3181
      %v3185 = vadd.f32 %v3162, %v3181
      %v3186 = vadd.f32 %v3163, %v3181
      %v3187 = vadd.f32 %v3164, %v3181
      %v3188 = vadd.f32 %v3165, %v3181
      %v3189 = vadd.f32 %v3166, %v3181
      %v3190 = vadd.f32 %v3167, %v3181
      %v3191 = vadd.f32 %v3168, %v3181
      %v3192 = vadd.f32 %v3169, %v3181
      %v3193 = vadd.f32 %v3170, %v3181
      %v3194 = vadd.f32 %v3171, %v3181
      %v3195 = vadd.f32 %v3172, %v3181
      %v3196 = vadd.f32 %v3173, %v3181
      %v3197 = vadd.f32 %v3174, %v3181
      %v3198 = vadd.f32 %v3175, %v3181
      %vm3199 = vcmp.gt.f32.partialorder %v3183, 0.0
      %vm3200 = vcmp.gt.f32.partialorder %v3184, 0.0
      %vm3201 = vcmp.gt.f32.partialorder %v3185, 0.0
      %vm3202 = vcmp.gt.f32.partialorder %v3186, 0.0
      %vm3203 = vcmp.gt.f32.partialorder %v3187, 0.0
      %vm3204 = vcmp.gt.f32.partialorder %v3188, 0.0
      %vm3205 = vcmp.gt.f32.partialorder %v3189, 0.0
      %vm3206 = vcmp.gt.f32.partialorder %v3190, 0.0
      %vm3207 = vcmp.gt.f32.partialorder %v3191, 0.0
      %vm3208 = vcmp.gt.f32.partialorder %v3192, 0.0
      %vm3209 = vcmp.gt.f32.partialorder %v3193, 0.0
      %vm3210 = vcmp.gt.f32.partialorder %v3194, 0.0
      %vm3211 = vcmp.gt.f32.partialorder %v3195, 0.0
      %vm3212 = vcmp.gt.f32.partialorder %v3196, 0.0
      %vm3213 = vcmp.gt.f32.partialorder %v3197, 0.0
      %vm3214 = vcmp.gt.f32.partialorder %v3198, 0.0
      %v3215 = vmul.f32 %v3183, 0.2
      %v3216 = vmul.f32 %v3184, 0.2
      %v3217 = vmul.f32 %v3185, 0.2
      %v3218 = vmul.f32 %v3186, 0.2
      %v3219 = vmul.f32 %v3187, 0.2
      %v3220 = vmul.f32 %v3188, 0.2
      %v3221 = vmul.f32 %v3189, 0.2
      %v3222 = vmul.f32 %v3190, 0.2
      %v3223 = vmul.f32 %v3191, 0.2
      %v3224 = vmul.f32 %v3192, 0.2
      %v3225 = vmul.f32 %v3193, 0.2
      %v3226 = vmul.f32 %v3194, 0.2
      %v3227 = vmul.f32 %v3195, 0.2
      %v3228 = vmul.f32 %v3196, 0.2
      %v3229 = vmul.f32 %v3197, 0.2
      %v3230 = vmul.f32 %v3198, 0.2
      %v3231 = vsel %vm3199, %v3183, %v3215
      %v3232 = vsel %vm3200, %v3184, %v3216
      %v3233 = vsel %vm3201, %v3185, %v3217
      %v3234 = vsel %vm3202, %v3186, %v3218
      %v3235 = vsel %vm3203, %v3187, %v3219
      %v3236 = vsel %vm3204, %v3188, %v3220
      %v3237 = vsel %vm3205, %v3189, %v3221
      %v3238 = vsel %vm3206, %v3190, %v3222
      %v3239 = vsel %vm3207, %v3191, %v3223
      %v3240 = vsel %vm3208, %v3192, %v3224
      %v3241 = vsel %vm3209, %v3193, %v3225
      %v3242 = vsel %vm3210, %v3194, %v3226
      %v3243 = vsel %vm3211, %v3195, %v3227
      %v3244 = vsel %vm3212, %v3196, %v3228
      %v3245 = vsel %vm3213, %v3197, %v3229
      %v3246 = vsel %vm3214, %v3198, %v3230
      %v3247 = vpack.c.bf16 %v3232, %v3231
      %v3248 = vpack.c.bf16 %v3234, %v3233
      %v3249 = vpack.c.bf16 %v3236, %v3235
      %v3250 = vpack.c.bf16 %v3238, %v3237
      %v3251 = vpack.c.bf16 %v3240, %v3239
      %v3252 = vpack.c.bf16 %v3242, %v3241
      %v3253 = vpack.c.bf16 %v3244, %v3243
      %v3254 = vpack.c.bf16 %v3246, %v3245
      %v3255 = vld [vmem:[%s6] sm:$0xf]
      %v3256 = vld [vmem:[%s6 + $0x4] sm:$0xf]
      %v3257 = vld [vmem:[%s6 + $0x8] sm:$0xf]
      %v3258 = vld [vmem:[%s6 + $0xc] sm:$0xf]
      %v3259 = vld [vmem:[%s6 + $0x10] sm:$0xf]
      %v3260 = vld [vmem:[%s6 + $0x14] sm:$0xf]
      %v3261 = vld [vmem:[%s6 + $0x18] sm:$0xf]
      %v3262 = vld [vmem:[%s6 + $0x1c] sm:$0xf]
      %v3263 = vld [vmem:[%s6 + $0x20] sm:$0xf]
      %v3264 = vld [vmem:[%s6 + $0x24] sm:$0xf]
      %v3265 = vld [vmem:[%s6 + $0x28] sm:$0xf]
      %v3266 = vld [vmem:[%s6 + $0x2c] sm:$0xf]
      %v3267 = vld [vmem:[%s6 + $0x30] sm:$0xf]
      %v3268 = vld [vmem:[%s6 + $0x34] sm:$0xf]
      %v3269 = vld [vmem:[%s6 + $0x38] sm:$0xf]
      %v3270 = vld [vmem:[%s6 + $0x3c] sm:$0xf]
      %v3271 = vld [vmem:[%s7] sm:$0x1]
      %v3273 = vlaneseq
      %v3274 = vshrl.u32 %v3273, 7
      %v3275 = vsub.s32 0, %v3274
      %v3276 = vrot.slane %v3271, %v3275
      %v3294 = vunpack.c.l.b16 %v3255
      %v3295 = vunpack.c.l.b16 %v3256
      %v3296 = vunpack.c.l.b16 %v3257
      %v3297 = vunpack.c.l.b16 %v3258
      %v3298 = vunpack.c.l.b16 %v3259
      %v3299 = vunpack.c.l.b16 %v3260
      %v3300 = vunpack.c.l.b16 %v3261
      %v3301 = vunpack.c.l.b16 %v3262
      %v3302 = vunpack.c.l.b16 %v3263
      %v3303 = vunpack.c.l.b16 %v3264
      %v3304 = vunpack.c.l.b16 %v3265
      %v3305 = vunpack.c.l.b16 %v3266
      %v3306 = vunpack.c.l.b16 %v3267
      %v3307 = vunpack.c.l.b16 %v3268
      %v3308 = vunpack.c.l.b16 %v3269
      %v3309 = vunpack.c.l.b16 %v3270
      %v3310 = vpack.c.b16 %v3295, %v3294
      %v3311 = vpack.c.b16 %v3297, %v3296
      %v3312 = vpack.c.b16 %v3299, %v3298
      %v3313 = vpack.c.b16 %v3301, %v3300
      %v3314 = vpack.c.b16 %v3303, %v3302
      %v3315 = vpack.c.b16 %v3305, %v3304
      %v3316 = vpack.c.b16 %v3307, %v3306
      %v3317 = vpack.c.b16 %v3309, %v3308
      %3326 = vmatprep.subr.bf16.mxu0 0
      %3327 = vmatpush1.bf16.msra.mxu0 %v3310
      %3328 = vmatprep.subr.bf16.mxu0 0
      %3329 = vmatpush1.bf16.msra.mxu0 %v3311
      %3330 = vmatprep.subr.bf16.mxu0 0
      %3331 = vmatpush1.bf16.msra.mxu0 %v3312
      %3332 = vmatprep.subr.bf16.mxu0 0
      %3333 = vmatpush1.bf16.msra.mxu0 %v3313
      %3334 = vmatprep.subr.bf16.mxu0 0
      %3335 = vmatpush1.bf16.msra.mxu0 %v3314
      %3336 = vmatprep.subr.bf16.mxu0 0
      %3337 = vmatpush1.bf16.msra.mxu0 %v3315
      %3338 = vmatprep.subr.bf16.mxu0 0
      %3339 = vmatpush1.bf16.msra.mxu0 %v3316
      %3340 = vmatprep.subr.bf16.mxu0 0
      %3341 = vmatpush1.bf16.msra.mxu0 %v3317
      %3342 = vmatprep.subr.bf16.mxu0 0
      %3343 = vmatpush1.bf16.msra.mxu0 0
      %3344 = vmatprep.subr.bf16.mxu0 0
      %3345 = vmatpush1.bf16.msra.mxu0 0
      %3346 = vmatprep.subr.bf16.mxu0 0
      %3347 = vmatpush1.bf16.msra.mxu0 0
      %3348 = vmatprep.subr.bf16.mxu0 0
      %3349 = vmatpush1.bf16.msra.mxu0 0
      %3350 = vmatprep.subr.bf16.mxu0 0
      %3351 = vmatpush1.bf16.msra.mxu0 0
      %3352 = vmatprep.subr.bf16.mxu0 0
      %3353 = vmatpush1.bf16.msra.mxu0 0
      %3354 = vmatprep.subr.bf16.mxu0 0
      %3355 = vmatpush1.bf16.msra.mxu0 0
      %3356 = vmatprep.subr.bf16.mxu0 0
      %3357 = vmatpush1.bf16.msra.mxu0 0
      %3358 = vmatprep.mubr.bf16.mxu0 0
      %3359 = vmatmul.mubr.bf16.gmra.mrb[0].mxu0 %v3247
      %v3360 = vpop.f32.mrb[0].mxu0
      %v3361 = vadd.f32 %v3276, %v3360
      %v3362 = vpop.f32.mrb[0].mxu0
      %v3363 = vpop.f32.mrb[0].mxu0
      %v3364 = vadd.f32 %v3276, %v3363
      %v3365 = vpop.f32.mrb[0].mxu0
      %3366 = vmatprep.mubr.bf16.mxu0 0
      %3367 = vmatmul.mubr.bf16.gmra.mrb[0].mxu0 %v3248
      %v3368 = vpop.f32.mrb[0].mxu0
      %v3369 = vadd.f32 %v3276, %v3368
      %v3370 = vpop.f32.mrb[0].mxu0
      %v3371 = vpop.f32.mrb[0].mxu0
      %v3372 = vadd.f32 %v3276, %v3371
      %v3373 = vpop.f32.mrb[0].mxu0
      %3374 = vmatprep.mubr.bf16.mxu0 0
      %3375 = vmatmul.mubr.bf16.gmra.mrb[0].mxu0 %v3249
      %v3376 = vpop.f32.mrb[0].mxu0
      %v3377 = vadd.f32 %v3276, %v3376
      %v3378 = vpop.f32.mrb[0].mxu0
      %v3379 = vpop.f32.mrb[0].mxu0
      %v3380 = vadd.f32 %v3276, %v3379
      %v3381 = vpop.f32.mrb[0].mxu0
      %3382 = vmatprep.mubr.bf16.mxu0 0
      %3383 = vmatmul.mubr.bf16.gmra.mrb[0].mxu0 %v3250
      %v3384 = vpop.f32.mrb[0].mxu0
      %v3385 = vadd.f32 %v3276, %v3384
      %v3386 = vpop.f32.mrb[0].mxu0
      %v3387 = vpop.f32.mrb[0].mxu0
      %v3388 = vadd.f32 %v3276, %v3387
      %v3389 = vpop.f32.mrb[0].mxu0
      %3390 = vmatprep.mubr.bf16.mxu0 0
      %3391 = vmatmul.mubr.bf16.gmra.mrb[0].mxu0 %v3251
      %v3392 = vpop.f32.mrb[0].mxu0
      %v3393 = vadd.f32 %v3276, %v3392
      %v3394 = vpop.f32.mrb[0].mxu0
      %v3395 = vpop.f32.mrb[0].mxu0
      %v3396 = vadd.f32 %v3276, %v3395
      %v3397 = vpop.f32.mrb[0].mxu0
      %3398 = vmatprep.mubr.bf16.mxu0 0
      %3399 = vmatmul.mubr.bf16.gmra.mrb[0].mxu0 %v3252
      %v3400 = vpop.f32.mrb[0].mxu0
      %v3401 = vadd.f32 %v3276, %v3400
      %v3402 = vpop.f32.mrb[0].mxu0
      %v3403 = vpop.f32.mrb[0].mxu0
      %v3404 = vadd.f32 %v3276, %v3403
      %v3405 = vpop.f32.mrb[0].mxu0
      %3406 = vmatprep.mubr.bf16.mxu0 0
      %3407 = vmatmul.mubr.bf16.gmra.mrb[0].mxu0 %v3253
      %v3408 = vpop.f32.mrb[0].mxu0
      %v3409 = vadd.f32 %v3276, %v3408
      %v3410 = vpop.f32.mrb[0].mxu0
      %v3411 = vpop.f32.mrb[0].mxu0
      %v3412 = vadd.f32 %v3276, %v3411
      %v3413 = vpop.f32.mrb[0].mxu0
      %3414 = vmatprep.mubr.bf16.mxu0 0
      %3415 = vmatmul.mubr.bf16.gmra.mrb[0].mxu0 %v3254
      %v3416 = vpop.f32.mrb[0].mxu0
      %v3417 = vadd.f32 %v3276, %v3416
      %v3418 = vpop.f32.mrb[0].mxu0
      %v3419 = vpop.f32.mrb[0].mxu0
      %v3420 = vadd.f32 %v3276, %v3419
      %v3421 = vpop.f32.mrb[0].mxu0
      %3422 = vdwg.mxu0
      %3423 = vst [vmem:[%s325] sm:$0xff] %v3361
      %3424 = vst [vmem:[%s325 + $0x8] sm:$0xff] %v3364
      %3425 = vst [vmem:[%s325 + $0x10] sm:$0xff] %v3369
      %3426 = vst [vmem:[%s325 + $0x18] sm:$0xff] %v3372
      %3427 = vst [vmem:[%s325 + $0x20] sm:$0xff] %v3377
      %3428 = vst [vmem:[%s325 + $0x28] sm:$0xff] %v3380
      %3429 = vst [vmem:[%s325 + $0x30] sm:$0xff] %v3385
      %3430 = vst [vmem:[%s325 + $0x38] sm:$0xff] %v3388
      %3431 = vst [vmem:[%s325 + $0x40] sm:$0xff] %v3393
      %3432 = vst [vmem:[%s325 + $0x48] sm:$0xff] %v3396
      %3433 = vst [vmem:[%s325 + $0x50] sm:$0xff] %v3401
      %3434 = vst [vmem:[%s325 + $0x58] sm:$0xff] %v3404
      %3435 = vst [vmem:[%s325 + $0x60] sm:$0xff] %v3409
      %3436 = vst [vmem:[%s325 + $0x68] sm:$0xff] %v3412
      %3437 = vst [vmem:[%s325 + $0x70] sm:$0xff] %v3417
      %3438 = vst [vmem:[%s325 + $0x78] sm:$0xff] %v3420
      %p3439 = scmp.lt.s32.totalorder %s19, 1
      %s3440 = scalar_select %p3439, %s19, 1
      %s3441 = smul.addr %s3440, 16
      %s3442 = smul.addr %s3441, 8
      %s3443 = scalar_lea.vmem %s8, %s3442
      // Predicated region
      $region53: #{gate_module_forward.1} parent=51 // pred_check
        %p3444 = pneg %p215
      $region54: #{gate_module_forward.1} parent=51 // pred_check_branch
        %3446 = sbr.rel (%p3444) target = $region56
      $region55: #{gate_module_forward.1} parent=51 // pred_region
        _
      $region56: #{gate_module_forward.1} parent=51 // pred_fallthru
        _
    $region52: #{gate_module_forward.1} parent=5 // pred_fallthru
      _
    %p3447 = scmp.le.s32.totalorder 2, %s14
    // Predicated region
    $region57: #{gate_module_forward.1} parent=5 // pred_check
      %p3448 = pneg %p3447
    $region58: #{gate_module_forward.1} parent=5 // pred_check_branch
      %3450 = sbr.rel (%p3448) target = $region60
    $region59: #{gate_module_forward.1} parent=5 // pred_region
      %s3451 = ssub.s32 %s14, 2
      // Predicated region
      $region61: #{gate_module_forward.1} parent=59 // pred_check
        %p3452 = pneg %p221
      $region62: #{gate_module_forward.1} parent=59 // pred_check_branch
        %3454 = sbr.rel (%p3452) target = $region64
      $region63: #{gate_module_forward.1} parent=59 // pred_region
        %p3455 = scmp.lt.s32.totalorder %s20, 1
        %s3456 = scalar_select %p3455, %s20, 1
        %s3457 = smul.addr %s3456, 16
        %s3458 = smul.addr %s3457, 8
        %s3459 = scalar_lea.vmem %s8, %s3458
      $region64: #{gate_module_forward.1} parent=59 // pred_fallthru
        _
    $region60: #{gate_module_forward.1} parent=5 // pred_fallthru
      _
  $region6: #{gate_module_forward.1} parent=0 // loop_footer
    %s18 = sadd.s32 1, %s14
  $region7: #{gate_module_forward.1} parent=0 // loop_footer_branch
    %13 = sbr.rel target = $region3
  $region8: #{gate_module_forward.1} parent=0 // loop_exit
    _

</llo_original>
